<compile_context>
chip_gen: v6e
topology: v6e:2x2x1
jax: 0.10.0
libtpu: 0.0.40
codegen_flags: <defaults>
</compile_context>

<pallas_src>
import math

import jax
import jax.numpy as jnp
import numpy as np
from jax.experimental import pallas as pl
from jax.experimental.pallas import tpu as pltpu


def _round_up(x, m):
    return ((x + m - 1) // m) * m


# ---------------------------------------------------------------------------
# Pallas kernel: fused embedding-gather + bidirectional GRU (single invocation).
# ---------------------------------------------------------------------------
def _bigru_kernel(tok_ref, emb_ref, h0_ref, wih_ref, gib_ref, whh_ref, bhn_ref,
                  out_ref, hfin_ref, gi_ref):
    # tok_ref : (S*Bp, 1)   int32  token ids in .view(seq, batch) order, pads = 0
    # emb_ref : (Vp, Ep)    f32    zero-padded embedding table
    # h0_ref  : (Bp, 2*Hp)  f32    [h0_fwd | h0_bwd] lane slabs
    # wih_ref : (Ep, 6*Hp)  f32    [W_ih_fwd^T | W_ih_bwd^T], gate-major Hp slabs
    # gib_ref : (1, 6*Hp)   f32    b_ih + [b_hr, b_hz, 0] per direction (folded)
    # whh_ref : (Hp, 6*Hp)  f32    [W_hh_fwd^T | W_hh_bwd^T]
    # bhn_ref : (1, 2*Hp)   f32    n-gate b_hh per direction
    # out_ref : (S, Bp, 2*Hp) f32  concatenated outputs, natural time order
    # hfin_ref: (Bp, Hp)    f32    forward-direction final hidden
    # gi_ref  : (S*Bp, 6*Hp) f32   VMEM scratch for the hoisted input projection
    SB = tok_ref.shape[0]
    Vp = emb_ref.shape[0]
    S, Bp, _ = out_ref.shape
    Hp = hfin_ref.shape[-1]
    G = 3 * Hp

    # (1) In-kernel embedding gather: one-hot rows x embedding table on the MXU.
    onehot = (tok_ref[...] ==
              jax.lax.broadcasted_iota(jnp.int32, (SB, Vp), 1)).astype(jnp.float32)
    x2d = jnp.dot(onehot, emb_ref[...], preferred_element_type=jnp.float32)

    # (2) Hoisted input projection for BOTH directions in ONE GEMM, biases folded.
    gi_ref[...] = (jnp.dot(x2d, wih_ref[...], preferred_element_type=jnp.float32)
                   + gib_ref[...])

    bhn_f = bhn_ref[:, 0:Hp]          # (1, Hp)
    bhn_b = bhn_ref[:, Hp:2 * Hp]
    h_f = h0_ref[:, 0:Hp]             # (Bp, Hp)
    h_b = h0_ref[:, Hp:2 * Hp]

    def gru_gates(gi, gh, h, bhn):
        r = jax.nn.sigmoid(gi[:, 0:Hp] + gh[:, 0:Hp])
        z = jax.nn.sigmoid(gi[:, Hp:2 * Hp] + gh[:, Hp:2 * Hp])
        n = jnp.tanh(gi[:, 2 * Hp:3 * Hp] + r * (gh[:, 2 * Hp:3 * Hp] + bhn))
        return (1.0 - z) * n + z * h

    # (3) Interleaved forward / backward recurrence; all indices are static.
    for t in range(S):
        tb = S - 1 - t
        gi_f = gi_ref[pl.ds(t * Bp, Bp), 0:G]        # static, sublane-aligned views
        gi_b = gi_ref[pl.ds(tb * Bp, Bp), G:2 * G]
        # Two independent chains back-to-back -> pipeline bubbles hide each other.
        gh_f = jnp.dot(h_f, whh_ref[:, 0:G], preferred_element_type=jnp.float32)
        gh_b = jnp.dot(h_b, whh_ref[:, G:2 * G], preferred_element_type=jnp.float32)
        h_f = gru_gates(gi_f, gh_f, h_f, bhn_f)
        h_b = gru_gates(gi_b, gh_b, h_b, bhn_b)
        out_ref[t, :, 0:Hp] = h_f                    # fwd slab, lane-aligned store
        out_ref[tb, :, Hp:2 * Hp] = h_b              # bwd slab, natural time order
    hfin_ref[...] = h_f                              # forward final hidden only


def _bigru_pallas(tok, emb, h0, wih, gib, whh, bhn, *, S, Bp):
    SB = tok.shape[0]
    Vp, Ep = emb.shape
    Hp2 = h0.shape[1]
    Hp = Hp2 // 2
    G2 = wih.shape[1]

    out, hfin = pl.pallas_call(
        _bigru_kernel,
        out_shape=(
            jax.ShapeDtypeStruct((S, Bp, Hp2), jnp.float32),
            jax.ShapeDtypeStruct((Bp, Hp), jnp.float32),
        ),
        grid_spec=pltpu.PrefetchScalarGridSpec(
            num_scalar_prefetch=0,
            grid=(1,),
            in_specs=[
                pl.BlockSpec((SB, 1), lambda i: (0, 0)),     # token ids
                pl.BlockSpec((Vp, Ep), lambda i: (0, 0)),    # embedding table
                pl.BlockSpec((Bp, Hp2), lambda i: (0, 0)),   # h0 [fwd|bwd]
                pl.BlockSpec((Ep, G2), lambda i: (0, 0)),    # W_ih^T both dirs
                pl.BlockSpec((1, G2), lambda i: (0, 0)),     # folded gi bias
                pl.BlockSpec((Hp, G2), lambda i: (0, 0)),    # W_hh^T both dirs
                pl.BlockSpec((1, Hp2), lambda i: (0, 0)),    # n-gate b_hh
            ],
            out_specs=[
                pl.BlockSpec((S, Bp, Hp2), lambda i: (0, 0, 0)),
                pl.BlockSpec((Bp, Hp), lambda i: (0, 0)),
            ],
            scratch_shapes=[pltpu.VMEM((SB, G2), jnp.float32)],
        ),
        compiler_params=pltpu.CompilerParams(
            dimension_semantics=("arbitrary",),
        ),
    )(tok, emb, h0, wih, gib, whh, bhn)
    return out, hfin


# ---------------------------------------------------------------------------
# EncoderRNN wrapper (embedding + bidirectional GRU + hidden-state slicing)
# ---------------------------------------------------------------------------
class EncoderRNNPallas:
    def __init__(self, vocab_size, embedding_size, hidden_size,
                 n_layers=1, dropout_p=0.2, bidirectional=True, key=None):
        assert n_layers == 1, "reference module is exercised with n_layers=1"
        assert bidirectional, "fused kernel implements the bidirectional encoder"
        # TODO(synk): unidirectional (D=1) variant if ever needed.
        self.vocab_size = vocab_size
        self.embedding_size = embedding_size
        self.hidden_size = hidden_size
        self.n_layers = n_layers
        self.num_directions = 2
        self.bidirectional = True
        # dropout_p only applies between stacked layers; with n_layers=1 it is a no-op.

        key = jax.random.PRNGKey(0) if key is None else key
        D = self.num_directions
        ks = jax.random.split(key, 1 + 4 * D)
        self.embedding = jax.random.normal(
            ks[0], (vocab_size, embedding_size), dtype=jnp.float32)

        bound = 1.0 / math.sqrt(hidden_size)
        self.dir_params = []
        for d in range(D):
            kw = ks[1 + 4 * d: 1 + 4 * (d + 1)]
            w_ih = jax.random.uniform(kw[0], (3 * hidden_size, embedding_size),
                                      jnp.float32, -bound, bound)
            w_hh = jax.random.uniform(kw[1], (3 * hidden_size, hidden_size),
                                      jnp.float32, -bound, bound)
            b_ih = jax.random.uniform(kw[2], (3 * hidden_size,),
                                      jnp.float32, -bound, bound)
            b_hh = jax.random.uniform(kw[3], (3 * hidden_size,),
                                      jnp.float32, -bound, bound)
            self.dir_params.append((w_ih, w_hh, b_ih, b_hh))

        # Padded, direction-/gate-slab laid-out params for the fused kernel.
        V, E, H = vocab_size, embedding_size, hidden_size
        self.Vp = _round_up(V, 128)
        self.Ep = _round_up(E, 128)
        self.Hp = _round_up(H, 128)
        Vp, Ep, Hp = self.Vp, self.Ep, self.Hp

        emb_pad = jnp.zeros((Vp, Ep), jnp.float32).at[:V, :E].set(self.embedding)
        wih = jnp.zeros((Ep, D * 3 * Hp), jnp.float32)
        whh = jnp.zeros((Hp, D * 3 * Hp), jnp.float32)
        gib = jnp.zeros((1, D * 3 * Hp), jnp.float32)
        bhn = jnp.zeros((1, D * Hp), jnp.float32)
        for d, (w_ih, w_hh, b_ih, b_hh) in enumerate(self.dir_params):
            for g in range(3):                      # gates [r, z, n]
                col = d * 3 * Hp + g * Hp
                wih = wih.at[:E, col:col + H].set(w_ih[g * H:(g + 1) * H, :].T)
                whh = whh.at[:H, col:col + H].set(w_hh[g * H:(g + 1) * H, :].T)
                bias = b_ih[g * H:(g + 1) * H]
                if g < 2:                           # fold b_hr / b_hz into gi bias
                    bias = bias + b_hh[g * H:(g + 1) * H]
                gib = gib.at[0, col:col + H].set(bias)
            bhn = bhn.at[0, d * Hp:d * Hp + H].set(b_hh[2 * H:3 * H])
        self.emb_pad, self.wih_p, self.whh_p = emb_pad, wih, whh
        self.gib_p, self.bhn_p = gib, bhn

    def init_hidden(self, batch_size, key):
        # xavier_normal on a (L*D, B, H) tensor: std = sqrt(2 / (fan_in + fan_out))
        shape = (self.n_layers * self.num_directions, batch_size, self.hidden_size)
        fan_in = shape[1] * shape[2]
        fan_out = shape[0] * shape[2]
        std = math.sqrt(2.0 / (fan_in + fan_out))
        return std * jax.random.normal(key, shape, dtype=jnp.float32)

    def forward(self, word_inputs, hidden):
        # word_inputs: (batch, seq) int32 ; hidden: (L*D, batch, H) f32
        B, S = word_inputs.shape
        H, Hp = self.hidden_size, self.Hp
        Bp = _round_up(max(B, 1), 8)

        # embedding(word_inputs).view(S, B, -1) is a raw reinterpretation (NOT a
        # transpose); in token-index space it is word_inputs.reshape(S, B).
        tok = (jnp.zeros((S, Bp), jnp.int32)
               .at[:, :B].set(word_inputs.reshape(S, B))
               .reshape(S * Bp, 1))

        h0 = (jnp.zeros((Bp, 2 * Hp), jnp.float32)
              .at[:B, :H].set(hidden[0])
              .at[:B, Hp:Hp + H].set(hidden[1]))

        out_pad, hfin_pad = _bigru_pallas(tok, self.emb_pad, h0, self.wih_p,
                                          self.gib_p, self.whh_p, self.bhn_p,
                                          S=S, Bp=Bp)

        if H == Hp:                               # kernel output already concatenated
            output = out_pad[:, :B, :]
        else:
            output = jnp.concatenate(
                [out_pad[:, :B, :H], out_pad[:, :B, Hp:Hp + H]], axis=-1)

        # hidden.view(n_layers, num_dirs, B, H)[:, 0, :, :] -> forward final hidden
        hidden_out = hfin_pad[:B, :H].reshape(self.n_layers, B, H)
        return output, hidden_out


# ---------------------------------------------------------------------------
# Pure-JAX reference (lax.scan) for correctness check
# ---------------------------------------------------------------------------
def _gru_ref(x_sbe, h0, w_ih, w_hh, b_ih, b_hh):
    H = h0.shape[-1]

    def step(h, x):
        gi = x @ w_ih.T + b_ih
        gh = h @ w_hh.T + b_hh
        r = jax.nn.sigmoid(gi[:, :H] + gh[:, :H])
        z = jax.nn.sigmoid(gi[:, H:2 * H] + gh[:, H:2 * H])
        n = jnp.tanh(gi[:, 2 * H:] + r * gh[:, 2 * H:])
        h_new = (1 - z) * n + z * h
        return h_new, h_new

    h_n, out = jax.lax.scan(step, h0, x_sbe)
    return out, h_n


if __name__ == "__main__":
    vocab_size, embedding_size, hidden_size = 50, 32, 32
    batch_size, seq_len = 2, 8

    key = jax.random.PRNGKey(0)
    k_model, k_inp, k_hid = jax.random.split(key, 3)

    enc = EncoderRNNPallas(vocab_size, embedding_size, hidden_size,
                           n_layers=1, dropout_p=0.2, bidirectional=True,
                           key=k_model)

    word_inputs = jax.random.randint(k_inp, (batch_size, seq_len), 0, vocab_size,
                                     dtype=jnp.int32)
    hidden0 = enc.init_hidden(batch_size, k_hid)

    output, hidden = enc.forward(word_inputs, hidden0)
    output = jax.block_until_ready(output)
    hidden = jax.block_until_ready(hidden)

    # --- correctness check vs pure-JAX reference ---
    emb = jnp.take(enc.embedding, word_inputs, axis=0).reshape(
        seq_len, batch_size, embedding_size)
    out_fw_r, h_fw_r = _gru_ref(emb, hidden0[0], *enc.dir_params[0])
    out_bw_r, h_bw_r = _gru_ref(emb[::-1], hidden0[1], *enc.dir_params[1])
    out_ref = jnp.concatenate([out_fw_r, out_bw_r[::-1]], axis=-1)
    hid_ref = h_fw_r[None]

    assert output.shape == (seq_len, batch_size, 2 * hidden_size)
    assert hidden.shape == (1, batch_size, hidden_size)
    np.testing.assert_allclose(np.asarray(output), np.asarray(out_ref),
                               rtol=1e-5, atol=1e-5)
    np.testing.assert_allclose(np.asarray(hidden), np.asarray(hid_ref),
                               rtol=1e-5, atol=1e-5)

    print("KERNEL_OK")
</pallas_src>

<mosaic_0001>
module attributes {stable_mosaic.version = 11 : i64} {
  func.func @_bigru_kernel(%arg0: i32, %arg1: memref<64x1xi32, #tpu.memory_space<vmem>>, %arg2: memref<128x128xf32, #tpu.memory_space<vmem>>, %arg3: memref<8x256xf32, #tpu.memory_space<vmem>>, %arg4: memref<128x768xf32, #tpu.memory_space<vmem>>, %arg5: memref<1x768xf32, #tpu.memory_space<vmem>>, %arg6: memref<128x768xf32, #tpu.memory_space<vmem>>, %arg7: memref<1x256xf32, #tpu.memory_space<vmem>>, %arg8: memref<8x8x256xf32, #tpu.memory_space<vmem>>, %arg9: memref<8x128xf32, #tpu.memory_space<vmem>>, %arg10: memref<64x768xf32, #tpu.memory_space<vmem>>) attributes {dimension_semantics = [#tpu.dimension_semantics<arbitrary>], iteration_bounds = array<i64: 1>, scalar_prefetch = 0 : i64, scratch_operands = 1 : i64, tpu.core_type = #tpu.core_type<tc>, window_params = [{pipeline_mode = #tpu.pipeline_mode<synchronous>, transform_indices = @transform_0, window_bounds = array<i64: 64, 1>}, {pipeline_mode = #tpu.pipeline_mode<synchronous>, transform_indices = @transform_1, window_bounds = array<i64: 128, 128>}, {pipeline_mode = #tpu.pipeline_mode<synchronous>, transform_indices = @transform_2, window_bounds = array<i64: 8, 256>}, {pipeline_mode = #tpu.pipeline_mode<synchronous>, transform_indices = @transform_3, window_bounds = array<i64: 128, 768>}, {pipeline_mode = #tpu.pipeline_mode<synchronous>, transform_indices = @transform_4, window_bounds = array<i64: 1, 768>}, {pipeline_mode = #tpu.pipeline_mode<synchronous>, transform_indices = @transform_5, window_bounds = array<i64: 128, 768>}, {pipeline_mode = #tpu.pipeline_mode<synchronous>, transform_indices = @transform_6, window_bounds = array<i64: 1, 256>}, {pipeline_mode = #tpu.pipeline_mode<synchronous>, transform_indices = @transform_7, window_bounds = array<i64: 8, 8, 256>}, {pipeline_mode = #tpu.pipeline_mode<synchronous>, transform_indices = @transform_8, window_bounds = array<i64: 8, 128>}]} {
    %c0 = arith.constant 0 : index
    %c0_0 = arith.constant 0 : index
    %0 = vector.load %arg1[%c0, %c0_0] : memref<64x1xi32, #tpu.memory_space<vmem>>, vector<64x1xi32>
    %1 = tpu.iota {dimensions = array<i32: 1>} : vector<64x128xi32>
    %2 = vector.broadcast %0 : vector<64x1xi32> to vector<64x128xi32>
    %3 = arith.cmpi eq, %2, %1 : vector<64x128xi32>
    %4 = arith.extui %3 : vector<64x128xi1> to vector<64x128xi32>
    %5 = arith.sitofp %4 : vector<64x128xi32> to vector<64x128xf32>
    %c0_1 = arith.constant 0 : index
    %c0_2 = arith.constant 0 : index
    %6 = vector.load %arg2[%c0_1, %c0_2] : memref<128x128xf32, #tpu.memory_space<vmem>>, vector<128x128xf32>
    %cst = arith.constant dense<0.000000e+00> : vector<64x128xf32>
    %7 = tpu.matmul %5, %6, %cst {dimension_numbers = #tpu.dot_dimension_numbers<[1], [0], [0], [1], [0, 0, 1, 1], [], []>} : vector<64x128xf32>, vector<128x128xf32>, vector<64x128xf32> -> vector<64x128xf32>
    %c0_3 = arith.constant 0 : index
    %c0_4 = arith.constant 0 : index
    %8 = vector.load %arg4[%c0_3, %c0_4] : memref<128x768xf32, #tpu.memory_space<vmem>>, vector<128x768xf32>
    %cst_5 = arith.constant dense<0.000000e+00> : vector<64x768xf32>
    %9 = tpu.matmul %7, %8, %cst_5 {dimension_numbers = #tpu.dot_dimension_numbers<[1], [0], [0], [1], [0, 0, 1, 1], [], []>} : vector<64x128xf32>, vector<128x768xf32>, vector<64x768xf32> -> vector<64x768xf32>
    %c0_6 = arith.constant 0 : index
    %c0_7 = arith.constant 0 : index
    %10 = vector.load %arg5[%c0_6, %c0_7] : memref<1x768xf32, #tpu.memory_space<vmem>>, vector<1x768xf32>
    %11 = vector.broadcast %10 : vector<1x768xf32> to vector<64x768xf32>
    %12 = arith.addf %9, %11 : vector<64x768xf32>
    %c0_8 = arith.constant 0 : index
    %c0_9 = arith.constant 0 : index
    %13 = vector.load %arg10[%c0_8, %c0_9] : memref<64x768xf32, #tpu.memory_space<vmem>>, vector<64x768xf32>
    tpu.vector_store %arg10[%c0_8, %c0_9], %12 {strides = array<i32>} : memref<64x768xf32, #tpu.memory_space<vmem>>, vector<64x768xf32>,
    %c0_10 = arith.constant 0 : index
    %c0_11 = arith.constant 0 : index
    %14 = vector.load %arg7[%c0_10, %c0_11] : memref<1x256xf32, #tpu.memory_space<vmem>>, vector<1x128xf32>
    %c0_12 = arith.constant 0 : index
    %c128 = arith.constant 128 : index
    %15 = vector.load %arg7[%c0_12, %c128] : memref<1x256xf32, #tpu.memory_space<vmem>>, vector<1x128xf32>
    %c0_13 = arith.constant 0 : index
    %c0_14 = arith.constant 0 : index
    %16 = vector.load %arg3[%c0_13, %c0_14] : memref<8x256xf32, #tpu.memory_space<vmem>>, vector<8x128xf32>
    %c0_15 = arith.constant 0 : index
    %c128_16 = arith.constant 128 : index
    %17 = vector.load %arg3[%c0_15, %c128_16] : memref<8x256xf32, #tpu.memory_space<vmem>>, vector<8x128xf32>
    %c0_17 = arith.constant 0 : index
    %c0_18 = arith.constant 0 : index
    %18 = vector.load %arg10[%c0_17, %c0_18] : memref<64x768xf32, #tpu.memory_space<vmem>>, vector<8x384xf32>
    %c56 = arith.constant 56 : index
    %c384 = arith.constant 384 : index
    %19 = vector.load %arg10[%c56, %c384] : memref<64x768xf32, #tpu.memory_space<vmem>>, vector<8x384xf32>
    %c0_19 = arith.constant 0 : index
    %c0_20 = arith.constant 0 : index
    %20 = vector.load %arg6[%c0_19, %c0_20] : memref<128x768xf32, #tpu.memory_space<vmem>>, vector<128x384xf32>
    %cst_21 = arith.constant dense<0.000000e+00> : vector<8x384xf32>
    %21 = tpu.matmul %16, %20, %cst_21 {dimension_numbers = #tpu.dot_dimension_numbers<[1], [0], [0], [1], [0, 0, 1, 1], [], []>} : vector<8x128xf32>, vector<128x384xf32>, vector<8x384xf32> -> vector<8x384xf32>
    %c0_22 = arith.constant 0 : index
    %c384_23 = arith.constant 384 : index
    %22 = vector.load %arg6[%c0_22, %c384_23] : memref<128x768xf32, #tpu.memory_space<vmem>>, vector<128x384xf32>
    %cst_24 = arith.constant dense<0.000000e+00> : vector<8x384xf32>
    %23 = tpu.matmul %17, %22, %cst_24 {dimension_numbers = #tpu.dot_dimension_numbers<[1], [0], [0], [1], [0, 0, 1, 1], [], []>} : vector<8x128xf32>, vector<128x384xf32>, vector<8x384xf32> -> vector<8x384xf32>
    %24 = vector.extract_strided_slice %18 {offsets = [0, 0], sizes = [8, 128], strides = [1, 1]} : vector<8x384xf32> to vector<8x128xf32>
    %25 = vector.extract_strided_slice %21 {offsets = [0, 0], sizes = [8, 128], strides = [1, 1]} : vector<8x384xf32> to vector<8x128xf32>
    %26 = arith.addf %24, %25 : vector<8x128xf32>
    %27 = arith.negf %26 : vector<8x128xf32>
    %28 = math.exp %27 : vector<8x128xf32>
    %cst_25 = arith.constant 1.000000e+00 : f32
    %29 = vector.broadcast %cst_25 : f32 to vector<8x128xf32>
    %30 = arith.addf %29, %28 : vector<8x128xf32>
    %31 = arith.divf %29, %30 : vector<8x128xf32>
    %32 = vector.extract_strided_slice %18 {offsets = [0, 128], sizes = [8, 128], strides = [1, 1]} : vector<8x384xf32> to vector<8x128xf32>
    %33 = vector.extract_strided_slice %21 {offsets = [0, 128], sizes = [8, 128], strides = [1, 1]} : vector<8x384xf32> to vector<8x128xf32>
    %34 = arith.addf %32, %33 : vector<8x128xf32>
    %35 = arith.negf %34 : vector<8x128xf32>
    %36 = math.exp %35 : vector<8x128xf32>
    %cst_26 = arith.constant 1.000000e+00 : f32
    %37 = vector.broadcast %cst_26 : f32 to vector<8x128xf32>
    %38 = arith.addf %37, %36 : vector<8x128xf32>
    %39 = arith.divf %37, %38 : vector<8x128xf32>
    %40 = vector.extract_strided_slice %18 {offsets = [0, 256], sizes = [8, 128], strides = [1, 1]} : vector<8x384xf32> to vector<8x128xf32>
    %41 = vector.extract_strided_slice %21 {offsets = [0, 256], sizes = [8, 128], strides = [1, 1]} : vector<8x384xf32> to vector<8x128xf32>
    %42 = vector.broadcast %14 : vector<1x128xf32> to vector<8x128xf32>
    %43 = arith.addf %41, %42 : vector<8x128xf32>
    %44 = arith.mulf %31, %43 : vector<8x128xf32>
    %45 = arith.addf %40, %44 : vector<8x128xf32>
    %46 = math.tanh %45 : vector<8x128xf32>
    %cst_27 = arith.constant 1.000000e+00 : f32
    %47 = vector.broadcast %cst_27 : f32 to vector<8x128xf32>
    %48 = arith.subf %47, %39 : vector<8x128xf32>
    %49 = arith.mulf %48, %46 : vector<8x128xf32>
    %50 = arith.mulf %39, %16 : vector<8x128xf32>
    %51 = arith.addf %49, %50 : vector<8x128xf32>
    %52 = vector.extract_strided_slice %19 {offsets = [0, 0], sizes = [8, 128], strides = [1, 1]} : vector<8x384xf32> to vector<8x128xf32>
    %53 = vector.extract_strided_slice %23 {offsets = [0, 0], sizes = [8, 128], strides = [1, 1]} : vector<8x384xf32> to vector<8x128xf32>
    %54 = arith.addf %52, %53 : vector<8x128xf32>
    %55 = arith.negf %54 : vector<8x128xf32>
    %56 = math.exp %55 : vector<8x128xf32>
    %cst_28 = arith.constant 1.000000e+00 : f32
    %57 = vector.broadcast %cst_28 : f32 to vector<8x128xf32>
    %58 = arith.addf %57, %56 : vector<8x128xf32>
    %59 = arith.divf %57, %58 : vector<8x128xf32>
    %60 = vector.extract_strided_slice %19 {offsets = [0, 128], sizes = [8, 128], strides = [1, 1]} : vector<8x384xf32> to vector<8x128xf32>
    %61 = vector.extract_strided_slice %23 {offsets = [0, 128], sizes = [8, 128], strides = [1, 1]} : vector<8x384xf32> to vector<8x128xf32>
    %62 = arith.addf %60, %61 : vector<8x128xf32>
    %63 = arith.negf %62 : vector<8x128xf32>
    %64 = math.exp %63 : vector<8x128xf32>
    %cst_29 = arith.constant 1.000000e+00 : f32
    %65 = vector.broadcast %cst_29 : f32 to vector<8x128xf32>
    %66 = arith.addf %65, %64 : vector<8x128xf32>
    %67 = arith.divf %65, %66 : vector<8x128xf32>
    %68 = vector.extract_strided_slice %19 {offsets = [0, 256], sizes = [8, 128], strides = [1, 1]} : vector<8x384xf32> to vector<8x128xf32>
    %69 = vector.extract_strided_slice %23 {offsets = [0, 256], sizes = [8, 128], strides = [1, 1]} : vector<8x384xf32> to vector<8x128xf32>
    %70 = vector.broadcast %15 : vector<1x128xf32> to vector<8x128xf32>
    %71 = arith.addf %69, %70 : vector<8x128xf32>
    %72 = arith.mulf %59, %71 : vector<8x128xf32>
    %73 = arith.addf %68, %72 : vector<8x128xf32>
    %74 = math.tanh %73 : vector<8x128xf32>
    %cst_30 = arith.constant 1.000000e+00 : f32
    %75 = vector.broadcast %cst_30 : f32 to vector<8x128xf32>
    %76 = arith.subf %75, %67 : vector<8x128xf32>
    %77 = arith.mulf %76, %74 : vector<8x128xf32>
    %78 = arith.mulf %67, %17 : vector<8x128xf32>
    %79 = arith.addf %77, %78 : vector<8x128xf32>
    %c0_31 = arith.constant 0 : index
    %c0_32 = arith.constant 0 : index
    %c0_33 = arith.constant 0 : index
    %80 = vector.load %arg8[%c0_31, %c0_32, %c0_33] : memref<8x8x256xf32, #tpu.memory_space<vmem>>, vector<1x8x128xf32>
    %81 = vector.shape_cast %80 : vector<1x8x128xf32> to vector<8x128xf32>
    %82 = vector.shape_cast %51 : vector<8x128xf32> to vector<1x8x128xf32>
    tpu.vector_store %arg8[%c0_31, %c0_32, %c0_33], %82 {strides = array<i32>} : memref<8x8x256xf32, #tpu.memory_space<vmem>>, vector<1x8x128xf32>,
    %c7 = arith.constant 7 : index
    %c0_34 = arith.constant 0 : index
    %c128_35 = arith.constant 128 : index
    %83 = vector.load %arg8[%c7, %c0_34, %c128_35] : memref<8x8x256xf32, #tpu.memory_space<vmem>>, vector<1x8x128xf32>
    %84 = vector.shape_cast %83 : vector<1x8x128xf32> to vector<8x128xf32>
    %85 = vector.shape_cast %79 : vector<8x128xf32> to vector<1x8x128xf32>
    tpu.vector_store %arg8[%c7, %c0_34, %c128_35], %85 {strides = array<i32>} : memref<8x8x256xf32, #tpu.memory_space<vmem>>, vector<1x8x128xf32>,
    %c8 = arith.constant 8 : index
    %c0_36 = arith.constant 0 : index
    %86 = vector.load %arg10[%c8, %c0_36] : memref<64x768xf32, #tpu.memory_space<vmem>>, vector<8x384xf32>
    %c48 = arith.constant 48 : index
    %c384_37 = arith.constant 384 : index
    %87 = vector.load %arg10[%c48, %c384_37] : memref<64x768xf32, #tpu.memory_space<vmem>>, vector<8x384xf32>
    %c0_38 = arith.constant 0 : index
    %c0_39 = arith.constant 0 : index
    %88 = vector.load %arg6[%c0_38, %c0_39] : memref<128x768xf32, #tpu.memory_space<vmem>>, vector<128x384xf32>
    %cst_40 = arith.constant dense<0.000000e+00> : vector<8x384xf32>
    %89 = tpu.matmul %51, %88, %cst_40 {dimension_numbers = #tpu.dot_dimension_numbers<[1], [0], [0], [1], [0, 0, 1, 1], [], []>} : vector<8x128xf32>, vector<128x384xf32>, vector<8x384xf32> -> vector<8x384xf32>
    %c0_41 = arith.constant 0 : index
    %c384_42 = arith.constant 384 : index
    %90 = vector.load %arg6[%c0_41, %c384_42] : memref<128x768xf32, #tpu.memory_space<vmem>>, vector<128x384xf32>
    %cst_43 = arith.constant dense<0.000000e+00> : vector<8x384xf32>
    %91 = tpu.matmul %79, %90, %cst_43 {dimension_numbers = #tpu.dot_dimension_numbers<[1], [0], [0], [1], [0, 0, 1, 1], [], []>} : vector<8x128xf32>, vector<128x384xf32>, vector<8x384xf32> -> vector<8x384xf32>
    %92 = vector.extract_strided_slice %86 {offsets = [0, 0], sizes = [8, 128], strides = [1, 1]} : vector<8x384xf32> to vector<8x128xf32>
    %93 = vector.extract_strided_slice %89 {offsets = [0, 0], sizes = [8, 128], strides = [1, 1]} : vector<8x384xf32> to vector<8x128xf32>
    %94 = arith.addf %92, %93 : vector<8x128xf32>
    %95 = arith.negf %94 : vector<8x128xf32>
    %96 = math.exp %95 : vector<8x128xf32>
    %cst_44 = arith.constant 1.000000e+00 : f32
    %97 = vector.broadcast %cst_44 : f32 to vector<8x128xf32>
    %98 = arith.addf %97, %96 : vector<8x128xf32>
    %99 = arith.divf %97, %98 : vector<8x128xf32>
    %100 = vector.extract_strided_slice %86 {offsets = [0, 128], sizes = [8, 128], strides = [1, 1]} : vector<8x384xf32> to vector<8x128xf32>
    %101 = vector.extract_strided_slice %89 {offsets = [0, 128], sizes = [8, 128], strides = [1, 1]} : vector<8x384xf32> to vector<8x128xf32>
    %102 = arith.addf %100, %101 : vector<8x128xf32>
    %103 = arith.negf %102 : vector<8x128xf32>
    %104 = math.exp %103 : vector<8x128xf32>
    %cst_45 = arith.constant 1.000000e+00 : f32
    %105 = vector.broadcast %cst_45 : f32 to vector<8x128xf32>
    %106 = arith.addf %105, %104 : vector<8x128xf32>
    %107 = arith.divf %105, %106 : vector<8x128xf32>
    %108 = vector.extract_strided_slice %86 {offsets = [0, 256], sizes = [8, 128], strides = [1, 1]} : vector<8x384xf32> to vector<8x128xf32>
    %109 = vector.extract_strided_slice %89 {offsets = [0, 256], sizes = [8, 128], strides = [1, 1]} : vector<8x384xf32> to vector<8x128xf32>
    %110 = vector.broadcast %14 : vector<1x128xf32> to vector<8x128xf32>
    %111 = arith.addf %109, %110 : vector<8x128xf32>
    %112 = arith.mulf %99, %111 : vector<8x128xf32>
    %113 = arith.addf %108, %112 : vector<8x128xf32>
    %114 = math.tanh %113 : vector<8x128xf32>
    %cst_46 = arith.constant 1.000000e+00 : f32
    %115 = vector.broadcast %cst_46 : f32 to vector<8x128xf32>
    %116 = arith.subf %115, %107 : vector<8x128xf32>
    %117 = arith.mulf %116, %114 : vector<8x128xf32>
    %118 = arith.mulf %107, %51 : vector<8x128xf32>
    %119 = arith.addf %117, %118 : vector<8x128xf32>
    %120 = vector.extract_strided_slice %87 {offsets = [0, 0], sizes = [8, 128], strides = [1, 1]} : vector<8x384xf32> to vector<8x128xf32>
    %121 = vector.extract_strided_slice %91 {offsets = [0, 0], sizes = [8, 128], strides = [1, 1]} : vector<8x384xf32> to vector<8x128xf32>
    %122 = arith.addf %120, %121 : vector<8x128xf32>
    %123 = arith.negf %122 : vector<8x128xf32>
    %124 = math.exp %123 : vector<8x128xf32>
    %cst_47 = arith.constant 1.000000e+00 : f32
    %125 = vector.broadcast %cst_47 : f32 to vector<8x128xf32>
    %126 = arith.addf %125, %124 : vector<8x128xf32>
    %127 = arith.divf %125, %126 : vector<8x128xf32>
    %128 = vector.extract_strided_slice %87 {offsets = [0, 128], sizes = [8, 128], strides = [1, 1]} : vector<8x384xf32> to vector<8x128xf32>
    %129 = vector.extract_strided_slice %91 {offsets = [0, 128], sizes = [8, 128], strides = [1, 1]} : vector<8x384xf32> to vector<8x128xf32>
    %130 = arith.addf %128, %129 : vector<8x128xf32>
    %131 = arith.negf %130 : vector<8x128xf32>
    %132 = math.exp %131 : vector<8x128xf32>
    %cst_48 = arith.constant 1.000000e+00 : f32
    %133 = vector.broadcast %cst_48 : f32 to vector<8x128xf32>
    %134 = arith.addf %133, %132 : vector<8x128xf32>
    %135 = arith.divf %133, %134 : vector<8x128xf32>
    %136 = vector.extract_strided_slice %87 {offsets = [0, 256], sizes = [8, 128], strides = [1, 1]} : vector<8x384xf32> to vector<8x128xf32>
    %137 = vector.extract_strided_slice %91 {offsets = [0, 256], sizes = [8, 128], strides = [1, 1]} : vector<8x384xf32> to vector<8x128xf32>
    %138 = vector.broadcast %15 : vector<1x128xf32> to vector<8x128xf32>
    %139 = arith.addf %137, %138 : vector<8x128xf32>
    %140 = arith.mulf %127, %139 : vector<8x128xf32>
    %141 = arith.addf %136, %140 : vector<8x128xf32>
    %142 = math.tanh %141 : vector<8x128xf32>
    %cst_49 = arith.constant 1.000000e+00 : f32
    %143 = vector.broadcast %cst_49 : f32 to vector<8x128xf32>
    %144 = arith.subf %143, %135 : vector<8x128xf32>
    %145 = arith.mulf %144, %142 : vector<8x128xf32>
    %146 = arith.mulf %135, %79 : vector<8x128xf32>
    %147 = arith.addf %145, %146 : vector<8x128xf32>
    %c1 = arith.constant 1 : index
    %c0_50 = arith.constant 0 : index
    %c0_51 = arith.constant 0 : index
    %148 = vector.load %arg8[%c1, %c0_50, %c0_51] : memref<8x8x256xf32, #tpu.memory_space<vmem>>, vector<1x8x128xf32>
    %149 = vector.shape_cast %148 : vector<1x8x128xf32> to vector<8x128xf32>
    %150 = vector.shape_cast %119 : vector<8x128xf32> to vector<1x8x128xf32>
    tpu.vector_store %arg8[%c1, %c0_50, %c0_51], %150 {strides = array<i32>} : memref<8x8x256xf32, #tpu.memory_space<vmem>>, vector<1x8x128xf32>,
    %c6 = arith.constant 6 : index
    %c0_52 = arith.constant 0 : index
    %c128_53 = arith.constant 128 : index
    %151 = vector.load %arg8[%c6, %c0_52, %c128_53] : memref<8x8x256xf32, #tpu.memory_space<vmem>>, vector<1x8x128xf32>
    %152 = vector.shape_cast %151 : vector<1x8x128xf32> to vector<8x128xf32>
    %153 = vector.shape_cast %147 : vector<8x128xf32> to vector<1x8x128xf32>
    tpu.vector_store %arg8[%c6, %c0_52, %c128_53], %153 {strides = array<i32>} : memref<8x8x256xf32, #tpu.memory_space<vmem>>, vector<1x8x128xf32>,
    %c16 = arith.constant 16 : index
    %c0_54 = arith.constant 0 : index
    %154 = vector.load %arg10[%c16, %c0_54] : memref<64x768xf32, #tpu.memory_space<vmem>>, vector<8x384xf32>
    %c40 = arith.constant 40 : index
    %c384_55 = arith.constant 384 : index
    %155 = vector.load %arg10[%c40, %c384_55] : memref<64x768xf32, #tpu.memory_space<vmem>>, vector<8x384xf32>
    %c0_56 = arith.constant 0 : index
    %c0_57 = arith.constant 0 : index
    %156 = vector.load %arg6[%c0_56, %c0_57] : memref<128x768xf32, #tpu.memory_space<vmem>>, vector<128x384xf32>
    %cst_58 = arith.constant dense<0.000000e+00> : vector<8x384xf32>
    %157 = tpu.matmul %119, %156, %cst_58 {dimension_numbers = #tpu.dot_dimension_numbers<[1], [0], [0], [1], [0, 0, 1, 1], [], []>} : vector<8x128xf32>, vector<128x384xf32>, vector<8x384xf32> -> vector<8x384xf32>
    %c0_59 = arith.constant 0 : index
    %c384_60 = arith.constant 384 : index
    %158 = vector.load %arg6[%c0_59, %c384_60] : memref<128x768xf32, #tpu.memory_space<vmem>>, vector<128x384xf32>
    %cst_61 = arith.constant dense<0.000000e+00> : vector<8x384xf32>
    %159 = tpu.matmul %147, %158, %cst_61 {dimension_numbers = #tpu.dot_dimension_numbers<[1], [0], [0], [1], [0, 0, 1, 1], [], []>} : vector<8x128xf32>, vector<128x384xf32>, vector<8x384xf32> -> vector<8x384xf32>
    %160 = vector.extract_strided_slice %154 {offsets = [0, 0], sizes = [8, 128], strides = [1, 1]} : vector<8x384xf32> to vector<8x128xf32>
    %161 = vector.extract_strided_slice %157 {offsets = [0, 0], sizes = [8, 128], strides = [1, 1]} : vector<8x384xf32> to vector<8x128xf32>
    %162 = arith.addf %160, %161 : vector<8x128xf32>
    %163 = arith.negf %162 : vector<8x128xf32>
    %164 = math.exp %163 : vector<8x128xf32>
    %cst_62 = arith.constant 1.000000e+00 : f32
    %165 = vector.broadcast %cst_62 : f32 to vector<8x128xf32>
    %166 = arith.addf %165, %164 : vector<8x128xf32>
    %167 = arith.divf %165, %166 : vector<8x128xf32>
    %168 = vector.extract_strided_slice %154 {offsets = [0, 128], sizes = [8, 128], strides = [1, 1]} : vector<8x384xf32> to vector<8x128xf32>
    %169 = vector.extract_strided_slice %157 {offsets = [0, 128], sizes = [8, 128], strides = [1, 1]} : vector<8x384xf32> to vector<8x128xf32>
    %170 = arith.addf %168, %169 : vector<8x128xf32>
    %171 = arith.negf %170 : vector<8x128xf32>
    %172 = math.exp %171 : vector<8x128xf32>
    %cst_63 = arith.constant 1.000000e+00 : f32
    %173 = vector.broadcast %cst_63 : f32 to vector<8x128xf32>
    %174 = arith.addf %173, %172 : vector<8x128xf32>
    %175 = arith.divf %173, %174 : vector<8x128xf32>
    %176 = vector.extract_strided_slice %154 {offsets = [0, 256], sizes = [8, 128], strides = [1, 1]} : vector<8x384xf32> to vector<8x128xf32>
    %177 = vector.extract_strided_slice %157 {offsets = [0, 256], sizes = [8, 128], strides = [1, 1]} : vector<8x384xf32> to vector<8x128xf32>
    %178 = vector.broadcast %14 : vector<1x128xf32> to vector<8x128xf32>
    %179 = arith.addf %177, %178 : vector<8x128xf32>
    %180 = arith.mulf %167, %179 : vector<8x128xf32>
    %181 = arith.addf %176, %180 : vector<8x128xf32>
    %182 = math.tanh %181 : vector<8x128xf32>
    %cst_64 = arith.constant 1.000000e+00 : f32
    %183 = vector.broadcast %cst_64 : f32 to vector<8x128xf32>
    %184 = arith.subf %183, %175 : vector<8x128xf32>
    %185 = arith.mulf %184, %182 : vector<8x128xf32>
    %186 = arith.mulf %175, %119 : vector<8x128xf32>
    %187 = arith.addf %185, %186 : vector<8x128xf32>
    %188 = vector.extract_strided_slice %155 {offsets = [0, 0], sizes = [8, 128], strides = [1, 1]} : vector<8x384xf32> to vector<8x128xf32>
    %189 = vector.extract_strided_slice %159 {offsets = [0, 0], sizes = [8, 128], strides = [1, 1]} : vector<8x384xf32> to vector<8x128xf32>
    %190 = arith.addf %188, %189 : vector<8x128xf32>
    %191 = arith.negf %190 : vector<8x128xf32>
    %192 = math.exp %191 : vector<8x128xf32>
    %cst_65 = arith.constant 1.000000e+00 : f32
    %193 = vector.broadcast %cst_65 : f32 to vector<8x128xf32>
    %194 = arith.addf %193, %192 : vector<8x128xf32>
    %195 = arith.divf %193, %194 : vector<8x128xf32>
    %196 = vector.extract_strided_slice %155 {offsets = [0, 128], sizes = [8, 128], strides = [1, 1]} : vector<8x384xf32> to vector<8x128xf32>
    %197 = vector.extract_strided_slice %159 {offsets = [0, 128], sizes = [8, 128], strides = [1, 1]} : vector<8x384xf32> to vector<8x128xf32>
    %198 = arith.addf %196, %197 : vector<8x128xf32>
    %199 = arith.negf %198 : vector<8x128xf32>
    %200 = math.exp %199 : vector<8x128xf32>
    %cst_66 = arith.constant 1.000000e+00 : f32
    %201 = vector.broadcast %cst_66 : f32 to vector<8x128xf32>
    %202 = arith.addf %201, %200 : vector<8x128xf32>
    %203 = arith.divf %201, %202 : vector<8x128xf32>
    %204 = vector.extract_strided_slice %155 {offsets = [0, 256], sizes = [8, 128], strides = [1, 1]} : vector<8x384xf32> to vector<8x128xf32>
    %205 = vector.extract_strided_slice %159 {offsets = [0, 256], sizes = [8, 128], strides = [1, 1]} : vector<8x384xf32> to vector<8x128xf32>
    %206 = vector.broadcast %15 : vector<1x128xf32> to vector<8x128xf32>
    %207 = arith.addf %205, %206 : vector<8x128xf32>
    %208 = arith.mulf %195, %207 : vector<8x128xf32>
    %209 = arith.addf %204, %208 : vector<8x128xf32>
    %210 = math.tanh %209 : vector<8x128xf32>
    %cst_67 = arith.constant 1.000000e+00 : f32
    %211 = vector.broadcast %cst_67 : f32 to vector<8x128xf32>
    %212 = arith.subf %211, %203 : vector<8x128xf32>
    %213 = arith.mulf %212, %210 : vector<8x128xf32>
    %214 = arith.mulf %203, %147 : vector<8x128xf32>
    %215 = arith.addf %213, %214 : vector<8x128xf32>
    %c2 = arith.constant 2 : index
    %c0_68 = arith.constant 0 : index
    %c0_69 = arith.constant 0 : index
    %216 = vector.load %arg8[%c2, %c0_68, %c0_69] : memref<8x8x256xf32, #tpu.memory_space<vmem>>, vector<1x8x128xf32>
    %217 = vector.shape_cast %216 : vector<1x8x128xf32> to vector<8x128xf32>
    %218 = vector.shape_cast %187 : vector<8x128xf32> to vector<1x8x128xf32>
    tpu.vector_store %arg8[%c2, %c0_68, %c0_69], %218 {strides = array<i32>} : memref<8x8x256xf32, #tpu.memory_space<vmem>>, vector<1x8x128xf32>,
    %c5 = arith.constant 5 : index
    %c0_70 = arith.constant 0 : index
    %c128_71 = arith.constant 128 : index
    %219 = vector.load %arg8[%c5, %c0_70, %c128_71] : memref<8x8x256xf32, #tpu.memory_space<vmem>>, vector<1x8x128xf32>
    %220 = vector.shape_cast %219 : vector<1x8x128xf32> to vector<8x128xf32>
    %221 = vector.shape_cast %215 : vector<8x128xf32> to vector<1x8x128xf32>
    tpu.vector_store %arg8[%c5, %c0_70, %c128_71], %221 {strides = array<i32>} : memref<8x8x256xf32, #tpu.memory_space<vmem>>, vector<1x8x128xf32>,
    %c24 = arith.constant 24 : index
    %c0_72 = arith.constant 0 : index
    %222 = vector.load %arg10[%c24, %c0_72] : memref<64x768xf32, #tpu.memory_space<vmem>>, vector<8x384xf32>
    %c32 = arith.constant 32 : index
    %c384_73 = arith.constant 384 : index
    %223 = vector.load %arg10[%c32, %c384_73] : memref<64x768xf32, #tpu.memory_space<vmem>>, vector<8x384xf32>
    %c0_74 = arith.constant 0 : index
    %c0_75 = arith.constant 0 : index
    %224 = vector.load %arg6[%c0_74, %c0_75] : memref<128x768xf32, #tpu.memory_space<vmem>>, vector<128x384xf32>
    %cst_76 = arith.constant dense<0.000000e+00> : vector<8x384xf32>
    %225 = tpu.matmul %187, %224, %cst_76 {dimension_numbers = #tpu.dot_dimension_numbers<[1], [0], [0], [1], [0, 0, 1, 1], [], []>} : vector<8x128xf32>, vector<128x384xf32>, vector<8x384xf32> -> vector<8x384xf32>
    %c0_77 = arith.constant 0 : index
    %c384_78 = arith.constant 384 : index
    %226 = vector.load %arg6[%c0_77, %c384_78] : memref<128x768xf32, #tpu.memory_space<vmem>>, vector<128x384xf32>
    %cst_79 = arith.constant dense<0.000000e+00> : vector<8x384xf32>
    %227 = tpu.matmul %215, %226, %cst_79 {dimension_numbers = #tpu.dot_dimension_numbers<[1], [0], [0], [1], [0, 0, 1, 1], [], []>} : vector<8x128xf32>, vector<128x384xf32>, vector<8x384xf32> -> vector<8x384xf32>
    %228 = vector.extract_strided_slice %222 {offsets = [0, 0], sizes = [8, 128], strides = [1, 1]} : vector<8x384xf32> to vector<8x128xf32>
    %229 = vector.extract_strided_slice %225 {offsets = [0, 0], sizes = [8, 128], strides = [1, 1]} : vector<8x384xf32> to vector<8x128xf32>
    %230 = arith.addf %228, %229 : vector<8x128xf32>
    %231 = arith.negf %230 : vector<8x128xf32>
    %232 = math.exp %231 : vector<8x128xf32>
    %cst_80 = arith.constant 1.000000e+00 : f32
    %233 = vector.broadcast %cst_80 : f32 to vector<8x128xf32>
    %234 = arith.addf %233, %232 : vector<8x128xf32>
    %235 = arith.divf %233, %234 : vector<8x128xf32>
    %236 = vector.extract_strided_slice %222 {offsets = [0, 128], sizes = [8, 128], strides = [1, 1]} : vector<8x384xf32> to vector<8x128xf32>
    %237 = vector.extract_strided_slice %225 {offsets = [0, 128], sizes = [8, 128], strides = [1, 1]} : vector<8x384xf32> to vector<8x128xf32>
    %238 = arith.addf %236, %237 : vector<8x128xf32>
    %239 = arith.negf %238 : vector<8x128xf32>
    %240 = math.exp %239 : vector<8x128xf32>
    %cst_81 = arith.constant 1.000000e+00 : f32
    %241 = vector.broadcast %cst_81 : f32 to vector<8x128xf32>
    %242 = arith.addf %241, %240 : vector<8x128xf32>
    %243 = arith.divf %241, %242 : vector<8x128xf32>
    %244 = vector.extract_strided_slice %222 {offsets = [0, 256], sizes = [8, 128], strides = [1, 1]} : vector<8x384xf32> to vector<8x128xf32>
    %245 = vector.extract_strided_slice %225 {offsets = [0, 256], sizes = [8, 128], strides = [1, 1]} : vector<8x384xf32> to vector<8x128xf32>
    %246 = vector.broadcast %14 : vector<1x128xf32> to vector<8x128xf32>
    %247 = arith.addf %245, %246 : vector<8x128xf32>
    %248 = arith.mulf %235, %247 : vector<8x128xf32>
    %249 = arith.addf %244, %248 : vector<8x128xf32>
    %250 = math.tanh %249 : vector<8x128xf32>
    %cst_82 = arith.constant 1.000000e+00 : f32
    %251 = vector.broadcast %cst_82 : f32 to vector<8x128xf32>
    %252 = arith.subf %251, %243 : vector<8x128xf32>
    %253 = arith.mulf %252, %250 : vector<8x128xf32>
    %254 = arith.mulf %243, %187 : vector<8x128xf32>
    %255 = arith.addf %253, %254 : vector<8x128xf32>
    %256 = vector.extract_strided_slice %223 {offsets = [0, 0], sizes = [8, 128], strides = [1, 1]} : vector<8x384xf32> to vector<8x128xf32>
    %257 = vector.extract_strided_slice %227 {offsets = [0, 0], sizes = [8, 128], strides = [1, 1]} : vector<8x384xf32> to vector<8x128xf32>
    %258 = arith.addf %256, %257 : vector<8x128xf32>
    %259 = arith.negf %258 : vector<8x128xf32>
    %260 = math.exp %259 : vector<8x128xf32>
    %cst_83 = arith.constant 1.000000e+00 : f32
    %261 = vector.broadcast %cst_83 : f32 to vector<8x128xf32>
    %262 = arith.addf %261, %260 : vector<8x128xf32>
    %263 = arith.divf %261, %262 : vector<8x128xf32>
    %264 = vector.extract_strided_slice %223 {offsets = [0, 128], sizes = [8, 128], strides = [1, 1]} : vector<8x384xf32> to vector<8x128xf32>
    %265 = vector.extract_strided_slice %227 {offsets = [0, 128], sizes = [8, 128], strides = [1, 1]} : vector<8x384xf32> to vector<8x128xf32>
    %266 = arith.addf %264, %265 : vector<8x128xf32>
    %267 = arith.negf %266 : vector<8x128xf32>
    %268 = math.exp %267 : vector<8x128xf32>
    %cst_84 = arith.constant 1.000000e+00 : f32
    %269 = vector.broadcast %cst_84 : f32 to vector<8x128xf32>
    %270 = arith.addf %269, %268 : vector<8x128xf32>
    %271 = arith.divf %269, %270 : vector<8x128xf32>
    %272 = vector.extract_strided_slice %223 {offsets = [0, 256], sizes = [8, 128], strides = [1, 1]} : vector<8x384xf32> to vector<8x128xf32>
    %273 = vector.extract_strided_slice %227 {offsets = [0, 256], sizes = [8, 128], strides = [1, 1]} : vector<8x384xf32> to vector<8x128xf32>
    %274 = vector.broadcast %15 : vector<1x128xf32> to vector<8x128xf32>
    %275 = arith.addf %273, %274 : vector<8x128xf32>
    %276 = arith.mulf %263, %275 : vector<8x128xf32>
    %277 = arith.addf %272, %276 : vector<8x128xf32>
    %278 = math.tanh %277 : vector<8x128xf32>
    %cst_85 = arith.constant 1.000000e+00 : f32
    %279 = vector.broadcast %cst_85 : f32 to vector<8x128xf32>
    %280 = arith.subf %279, %271 : vector<8x128xf32>
    %281 = arith.mulf %280, %278 : vector<8x128xf32>
    %282 = arith.mulf %271, %215 : vector<8x128xf32>
    %283 = arith.addf %281, %282 : vector<8x128xf32>
    %c3 = arith.constant 3 : index
    %c0_86 = arith.constant 0 : index
    %c0_87 = arith.constant 0 : index
    %284 = vector.load %arg8[%c3, %c0_86, %c0_87] : memref<8x8x256xf32, #tpu.memory_space<vmem>>, vector<1x8x128xf32>
    %285 = vector.shape_cast %284 : vector<1x8x128xf32> to vector<8x128xf32>
    %286 = vector.shape_cast %255 : vector<8x128xf32> to vector<1x8x128xf32>
    tpu.vector_store %arg8[%c3, %c0_86, %c0_87], %286 {strides = array<i32>} : memref<8x8x256xf32, #tpu.memory_space<vmem>>, vector<1x8x128xf32>,
    %c4 = arith.constant 4 : index
    %c0_88 = arith.constant 0 : index
    %c128_89 = arith.constant 128 : index
    %287 = vector.load %arg8[%c4, %c0_88, %c128_89] : memref<8x8x256xf32, #tpu.memory_space<vmem>>, vector<1x8x128xf32>
    %288 = vector.shape_cast %287 : vector<1x8x128xf32> to vector<8x128xf32>
    %289 = vector.shape_cast %283 : vector<8x128xf32> to vector<1x8x128xf32>
    tpu.vector_store %arg8[%c4, %c0_88, %c128_89], %289 {strides = array<i32>} : memref<8x8x256xf32, #tpu.memory_space<vmem>>, vector<1x8x128xf32>,
    %c32_90 = arith.constant 32 : index
    %c0_91 = arith.constant 0 : index
    %290 = vector.load %arg10[%c32_90, %c0_91] : memref<64x768xf32, #tpu.memory_space<vmem>>, vector<8x384xf32>
    %c24_92 = arith.constant 24 : index
    %c384_93 = arith.constant 384 : index
    %291 = vector.load %arg10[%c24_92, %c384_93] : memref<64x768xf32, #tpu.memory_space<vmem>>, vector<8x384xf32>
    %c0_94 = arith.constant 0 : index
    %c0_95 = arith.constant 0 : index
    %292 = vector.load %arg6[%c0_94, %c0_95] : memref<128x768xf32, #tpu.memory_space<vmem>>, vector<128x384xf32>
    %cst_96 = arith.constant dense<0.000000e+00> : vector<8x384xf32>
    %293 = tpu.matmul %255, %292, %cst_96 {dimension_numbers = #tpu.dot_dimension_numbers<[1], [0], [0], [1], [0, 0, 1, 1], [], []>} : vector<8x128xf32>, vector<128x384xf32>, vector<8x384xf32> -> vector<8x384xf32>
    %c0_97 = arith.constant 0 : index
    %c384_98 = arith.constant 384 : index
    %294 = vector.load %arg6[%c0_97, %c384_98] : memref<128x768xf32, #tpu.memory_space<vmem>>, vector<128x384xf32>
    %cst_99 = arith.constant dense<0.000000e+00> : vector<8x384xf32>
    %295 = tpu.matmul %283, %294, %cst_99 {dimension_numbers = #tpu.dot_dimension_numbers<[1], [0], [0], [1], [0, 0, 1, 1], [], []>} : vector<8x128xf32>, vector<128x384xf32>, vector<8x384xf32> -> vector<8x384xf32>
    %296 = vector.extract_strided_slice %290 {offsets = [0, 0], sizes = [8, 128], strides = [1, 1]} : vector<8x384xf32> to vector<8x128xf32>
    %297 = vector.extract_strided_slice %293 {offsets = [0, 0], sizes = [8, 128], strides = [1, 1]} : vector<8x384xf32> to vector<8x128xf32>
    %298 = arith.addf %296, %297 : vector<8x128xf32>
    %299 = arith.negf %298 : vector<8x128xf32>
    %300 = math.exp %299 : vector<8x128xf32>
    %cst_100 = arith.constant 1.000000e+00 : f32
    %301 = vector.broadcast %cst_100 : f32 to vector<8x128xf32>
    %302 = arith.addf %301, %300 : vector<8x128xf32>
    %303 = arith.divf %301, %302 : vector<8x128xf32>
    %304 = vector.extract_strided_slice %290 {offsets = [0, 128], sizes = [8, 128], strides = [1, 1]} : vector<8x384xf32> to vector<8x128xf32>
    %305 = vector.extract_strided_slice %293 {offsets = [0, 128], sizes = [8, 128], strides = [1, 1]} : vector<8x384xf32> to vector<8x128xf32>
    %306 = arith.addf %304, %305 : vector<8x128xf32>
    %307 = arith.negf %306 : vector<8x128xf32>
    %308 = math.exp %307 : vector<8x128xf32>
    %cst_101 = arith.constant 1.000000e+00 : f32
    %309 = vector.broadcast %cst_101 : f32 to vector<8x128xf32>
    %310 = arith.addf %309, %308 : vector<8x128xf32>
    %311 = arith.divf %309, %310 : vector<8x128xf32>
    %312 = vector.extract_strided_slice %290 {offsets = [0, 256], sizes = [8, 128], strides = [1, 1]} : vector<8x384xf32> to vector<8x128xf32>
    %313 = vector.extract_strided_slice %293 {offsets = [0, 256], sizes = [8, 128], strides = [1, 1]} : vector<8x384xf32> to vector<8x128xf32>
    %314 = vector.broadcast %14 : vector<1x128xf32> to vector<8x128xf32>
    %315 = arith.addf %313, %314 : vector<8x128xf32>
    %316 = arith.mulf %303, %315 : vector<8x128xf32>
    %317 = arith.addf %312, %316 : vector<8x128xf32>
    %318 = math.tanh %317 : vector<8x128xf32>
    %cst_102 = arith.constant 1.000000e+00 : f32
    %319 = vector.broadcast %cst_102 : f32 to vector<8x128xf32>
    %320 = arith.subf %319, %311 : vector<8x128xf32>
    %321 = arith.mulf %320, %318 : vector<8x128xf32>
    %322 = arith.mulf %311, %255 : vector<8x128xf32>
    %323 = arith.addf %321, %322 : vector<8x128xf32>
    %324 = vector.extract_strided_slice %291 {offsets = [0, 0], sizes = [8, 128], strides = [1, 1]} : vector<8x384xf32> to vector<8x128xf32>
    %325 = vector.extract_strided_slice %295 {offsets = [0, 0], sizes = [8, 128], strides = [1, 1]} : vector<8x384xf32> to vector<8x128xf32>
    %326 = arith.addf %324, %325 : vector<8x128xf32>
    %327 = arith.negf %326 : vector<8x128xf32>
    %328 = math.exp %327 : vector<8x128xf32>
    %cst_103 = arith.constant 1.000000e+00 : f32
    %329 = vector.broadcast %cst_103 : f32 to vector<8x128xf32>
    %330 = arith.addf %329, %328 : vector<8x128xf32>
    %331 = arith.divf %329, %330 : vector<8x128xf32>
    %332 = vector.extract_strided_slice %291 {offsets = [0, 128], sizes = [8, 128], strides = [1, 1]} : vector<8x384xf32> to vector<8x128xf32>
    %333 = vector.extract_strided_slice %295 {offsets = [0, 128], sizes = [8, 128], strides = [1, 1]} : vector<8x384xf32> to vector<8x128xf32>
    %334 = arith.addf %332, %333 : vector<8x128xf32>
    %335 = arith.negf %334 : vector<8x128xf32>
    %336 = math.exp %335 : vector<8x128xf32>
    %cst_104 = arith.constant 1.000000e+00 : f32
    %337 = vector.broadcast %cst_104 : f32 to vector<8x128xf32>
    %338 = arith.addf %337, %336 : vector<8x128xf32>
    %339 = arith.divf %337, %338 : vector<8x128xf32>
    %340 = vector.extract_strided_slice %291 {offsets = [0, 256], sizes = [8, 128], strides = [1, 1]} : vector<8x384xf32> to vector<8x128xf32>
    %341 = vector.extract_strided_slice %295 {offsets = [0, 256], sizes = [8, 128], strides = [1, 1]} : vector<8x384xf32> to vector<8x128xf32>
    %342 = vector.broadcast %15 : vector<1x128xf32> to vector<8x128xf32>
    %343 = arith.addf %341, %342 : vector<8x128xf32>
    %344 = arith.mulf %331, %343 : vector<8x128xf32>
    %345 = arith.addf %340, %344 : vector<8x128xf32>
    %346 = math.tanh %345 : vector<8x128xf32>
    %cst_105 = arith.constant 1.000000e+00 : f32
    %347 = vector.broadcast %cst_105 : f32 to vector<8x128xf32>
    %348 = arith.subf %347, %339 : vector<8x128xf32>
    %349 = arith.mulf %348, %346 : vector<8x128xf32>
    %350 = arith.mulf %339, %283 : vector<8x128xf32>
    %351 = arith.addf %349, %350 : vector<8x128xf32>
    %c4_106 = arith.constant 4 : index
    %c0_107 = arith.constant 0 : index
    %c0_108 = arith.constant 0 : index
    %352 = vector.load %arg8[%c4_106, %c0_107, %c0_108] : memref<8x8x256xf32, #tpu.memory_space<vmem>>, vector<1x8x128xf32>
    %353 = vector.shape_cast %352 : vector<1x8x128xf32> to vector<8x128xf32>
    %354 = vector.shape_cast %323 : vector<8x128xf32> to vector<1x8x128xf32>
    tpu.vector_store %arg8[%c4_106, %c0_107, %c0_108], %354 {strides = array<i32>} : memref<8x8x256xf32, #tpu.memory_space<vmem>>, vector<1x8x128xf32>,
    %c3_109 = arith.constant 3 : index
    %c0_110 = arith.constant 0 : index
    %c128_111 = arith.constant 128 : index
    %355 = vector.load %arg8[%c3_109, %c0_110, %c128_111] : memref<8x8x256xf32, #tpu.memory_space<vmem>>, vector<1x8x128xf32>
    %356 = vector.shape_cast %355 : vector<1x8x128xf32> to vector<8x128xf32>
    %357 = vector.shape_cast %351 : vector<8x128xf32> to vector<1x8x128xf32>
    tpu.vector_store %arg8[%c3_109, %c0_110, %c128_111], %357 {strides = array<i32>} : memref<8x8x256xf32, #tpu.memory_space<vmem>>, vector<1x8x128xf32>,
    %c40_112 = arith.constant 40 : index
    %c0_113 = arith.constant 0 : index
    %358 = vector.load %arg10[%c40_112, %c0_113] : memref<64x768xf32, #tpu.memory_space<vmem>>, vector<8x384xf32>
    %c16_114 = arith.constant 16 : index
    %c384_115 = arith.constant 384 : index
    %359 = vector.load %arg10[%c16_114, %c384_115] : memref<64x768xf32, #tpu.memory_space<vmem>>, vector<8x384xf32>
    %c0_116 = arith.constant 0 : index
    %c0_117 = arith.constant 0 : index
    %360 = vector.load %arg6[%c0_116, %c0_117] : memref<128x768xf32, #tpu.memory_space<vmem>>, vector<128x384xf32>
    %cst_118 = arith.constant dense<0.000000e+00> : vector<8x384xf32>
    %361 = tpu.matmul %323, %360, %cst_118 {dimension_numbers = #tpu.dot_dimension_numbers<[1], [0], [0], [1], [0, 0, 1, 1], [], []>} : vector<8x128xf32>, vector<128x384xf32>, vector<8x384xf32> -> vector<8x384xf32>
    %c0_119 = arith.constant 0 : index
    %c384_120 = arith.constant 384 : index
    %362 = vector.load %arg6[%c0_119, %c384_120] : memref<128x768xf32, #tpu.memory_space<vmem>>, vector<128x384xf32>
    %cst_121 = arith.constant dense<0.000000e+00> : vector<8x384xf32>
    %363 = tpu.matmul %351, %362, %cst_121 {dimension_numbers = #tpu.dot_dimension_numbers<[1], [0], [0], [1], [0, 0, 1, 1], [], []>} : vector<8x128xf32>, vector<128x384xf32>, vector<8x384xf32> -> vector<8x384xf32>
    %364 = vector.extract_strided_slice %358 {offsets = [0, 0], sizes = [8, 128], strides = [1, 1]} : vector<8x384xf32> to vector<8x128xf32>
    %365 = vector.extract_strided_slice %361 {offsets = [0, 0], sizes = [8, 128], strides = [1, 1]} : vector<8x384xf32> to vector<8x128xf32>
    %366 = arith.addf %364, %365 : vector<8x128xf32>
    %367 = arith.negf %366 : vector<8x128xf32>
    %368 = math.exp %367 : vector<8x128xf32>
    %cst_122 = arith.constant 1.000000e+00 : f32
    %369 = vector.broadcast %cst_122 : f32 to vector<8x128xf32>
    %370 = arith.addf %369, %368 : vector<8x128xf32>
    %371 = arith.divf %369, %370 : vector<8x128xf32>
    %372 = vector.extract_strided_slice %358 {offsets = [0, 128], sizes = [8, 128], strides = [1, 1]} : vector<8x384xf32> to vector<8x128xf32>
    %373 = vector.extract_strided_slice %361 {offsets = [0, 128], sizes = [8, 128], strides = [1, 1]} : vector<8x384xf32> to vector<8x128xf32>
    %374 = arith.addf %372, %373 : vector<8x128xf32>
    %375 = arith.negf %374 : vector<8x128xf32>
    %376 = math.exp %375 : vector<8x128xf32>
    %cst_123 = arith.constant 1.000000e+00 : f32
    %377 = vector.broadcast %cst_123 : f32 to vector<8x128xf32>
    %378 = arith.addf %377, %376 : vector<8x128xf32>
    %379 = arith.divf %377, %378 : vector<8x128xf32>
    %380 = vector.extract_strided_slice %358 {offsets = [0, 256], sizes = [8, 128], strides = [1, 1]} : vector<8x384xf32> to vector<8x128xf32>
    %381 = vector.extract_strided_slice %361 {offsets = [0, 256], sizes = [8, 128], strides = [1, 1]} : vector<8x384xf32> to vector<8x128xf32>
    %382 = vector.broadcast %14 : vector<1x128xf32> to vector<8x128xf32>
    %383 = arith.addf %381, %382 : vector<8x128xf32>
    %384 = arith.mulf %371, %383 : vector<8x128xf32>
    %385 = arith.addf %380, %384 : vector<8x128xf32>
    %386 = math.tanh %385 : vector<8x128xf32>
    %cst_124 = arith.constant 1.000000e+00 : f32
    %387 = vector.broadcast %cst_124 : f32 to vector<8x128xf32>
    %388 = arith.subf %387, %379 : vector<8x128xf32>
    %389 = arith.mulf %388, %386 : vector<8x128xf32>
    %390 = arith.mulf %379, %323 : vector<8x128xf32>
    %391 = arith.addf %389, %390 : vector<8x128xf32>
    %392 = vector.extract_strided_slice %359 {offsets = [0, 0], sizes = [8, 128], strides = [1, 1]} : vector<8x384xf32> to vector<8x128xf32>
    %393 = vector.extract_strided_slice %363 {offsets = [0, 0], sizes = [8, 128], strides = [1, 1]} : vector<8x384xf32> to vector<8x128xf32>
    %394 = arith.addf %392, %393 : vector<8x128xf32>
    %395 = arith.negf %394 : vector<8x128xf32>
    %396 = math.exp %395 : vector<8x128xf32>
    %cst_125 = arith.constant 1.000000e+00 : f32
    %397 = vector.broadcast %cst_125 : f32 to vector<8x128xf32>
    %398 = arith.addf %397, %396 : vector<8x128xf32>
    %399 = arith.divf %397, %398 : vector<8x128xf32>
    %400 = vector.extract_strided_slice %359 {offsets = [0, 128], sizes = [8, 128], strides = [1, 1]} : vector<8x384xf32> to vector<8x128xf32>
    %401 = vector.extract_strided_slice %363 {offsets = [0, 128], sizes = [8, 128], strides = [1, 1]} : vector<8x384xf32> to vector<8x128xf32>
    %402 = arith.addf %400, %401 : vector<8x128xf32>
    %403 = arith.negf %402 : vector<8x128xf32>
    %404 = math.exp %403 : vector<8x128xf32>
    %cst_126 = arith.constant 1.000000e+00 : f32
    %405 = vector.broadcast %cst_126 : f32 to vector<8x128xf32>
    %406 = arith.addf %405, %404 : vector<8x128xf32>
    %407 = arith.divf %405, %406 : vector<8x128xf32>
    %408 = vector.extract_strided_slice %359 {offsets = [0, 256], sizes = [8, 128], strides = [1, 1]} : vector<8x384xf32> to vector<8x128xf32>
    %409 = vector.extract_strided_slice %363 {offsets = [0, 256], sizes = [8, 128], strides = [1, 1]} : vector<8x384xf32> to vector<8x128xf32>
    %410 = vector.broadcast %15 : vector<1x128xf32> to vector<8x128xf32>
    %411 = arith.addf %409, %410 : vector<8x128xf32>
    %412 = arith.mulf %399, %411 : vector<8x128xf32>
    %413 = arith.addf %408, %412 : vector<8x128xf32>
    %414 = math.tanh %413 : vector<8x128xf32>
    %cst_127 = arith.constant 1.000000e+00 : f32
    %415 = vector.broadcast %cst_127 : f32 to vector<8x128xf32>
    %416 = arith.subf %415, %407 : vector<8x128xf32>
    %417 = arith.mulf %416, %414 : vector<8x128xf32>
    %418 = arith.mulf %407, %351 : vector<8x128xf32>
    %419 = arith.addf %417, %418 : vector<8x128xf32>
    %c5_128 = arith.constant 5 : index
    %c0_129 = arith.constant 0 : index
    %c0_130 = arith.constant 0 : index
    %420 = vector.load %arg8[%c5_128, %c0_129, %c0_130] : memref<8x8x256xf32, #tpu.memory_space<vmem>>, vector<1x8x128xf32>
    %421 = vector.shape_cast %420 : vector<1x8x128xf32> to vector<8x128xf32>
    %422 = vector.shape_cast %391 : vector<8x128xf32> to vector<1x8x128xf32>
    tpu.vector_store %arg8[%c5_128, %c0_129, %c0_130], %422 {strides = array<i32>} : memref<8x8x256xf32, #tpu.memory_space<vmem>>, vector<1x8x128xf32>,
    %c2_131 = arith.constant 2 : index
    %c0_132 = arith.constant 0 : index
    %c128_133 = arith.constant 128 : index
    %423 = vector.load %arg8[%c2_131, %c0_132, %c128_133] : memref<8x8x256xf32, #tpu.memory_space<vmem>>, vector<1x8x128xf32>
    %424 = vector.shape_cast %423 : vector<1x8x128xf32> to vector<8x128xf32>
    %425 = vector.shape_cast %419 : vector<8x128xf32> to vector<1x8x128xf32>
    tpu.vector_store %arg8[%c2_131, %c0_132, %c128_133], %425 {strides = array<i32>} : memref<8x8x256xf32, #tpu.memory_space<vmem>>, vector<1x8x128xf32>,
    %c48_134 = arith.constant 48 : index
    %c0_135 = arith.constant 0 : index
    %426 = vector.load %arg10[%c48_134, %c0_135] : memref<64x768xf32, #tpu.memory_space<vmem>>, vector<8x384xf32>
    %c8_136 = arith.constant 8 : index
    %c384_137 = arith.constant 384 : index
    %427 = vector.load %arg10[%c8_136, %c384_137] : memref<64x768xf32, #tpu.memory_space<vmem>>, vector<8x384xf32>
    %c0_138 = arith.constant 0 : index
    %c0_139 = arith.constant 0 : index
    %428 = vector.load %arg6[%c0_138, %c0_139] : memref<128x768xf32, #tpu.memory_space<vmem>>, vector<128x384xf32>
    %cst_140 = arith.constant dense<0.000000e+00> : vector<8x384xf32>
    %429 = tpu.matmul %391, %428, %cst_140 {dimension_numbers = #tpu.dot_dimension_numbers<[1], [0], [0], [1], [0, 0, 1, 1], [], []>} : vector<8x128xf32>, vector<128x384xf32>, vector<8x384xf32> -> vector<8x384xf32>
    %c0_141 = arith.constant 0 : index
    %c384_142 = arith.constant 384 : index
    %430 = vector.load %arg6[%c0_141, %c384_142] : memref<128x768xf32, #tpu.memory_space<vmem>>, vector<128x384xf32>
    %cst_143 = arith.constant dense<0.000000e+00> : vector<8x384xf32>
    %431 = tpu.matmul %419, %430, %cst_143 {dimension_numbers = #tpu.dot_dimension_numbers<[1], [0], [0], [1], [0, 0, 1, 1], [], []>} : vector<8x128xf32>, vector<128x384xf32>, vector<8x384xf32> -> vector<8x384xf32>
    %432 = vector.extract_strided_slice %426 {offsets = [0, 0], sizes = [8, 128], strides = [1, 1]} : vector<8x384xf32> to vector<8x128xf32>
    %433 = vector.extract_strided_slice %429 {offsets = [0, 0], sizes = [8, 128], strides = [1, 1]} : vector<8x384xf32> to vector<8x128xf32>
    %434 = arith.addf %432, %433 : vector<8x128xf32>
    %435 = arith.negf %434 : vector<8x128xf32>
    %436 = math.exp %435 : vector<8x128xf32>
    %cst_144 = arith.constant 1.000000e+00 : f32
    %437 = vector.broadcast %cst_144 : f32 to vector<8x128xf32>
    %438 = arith.addf %437, %436 : vector<8x128xf32>
    %439 = arith.divf %437, %438 : vector<8x128xf32>
    %440 = vector.extract_strided_slice %426 {offsets = [0, 128], sizes = [8, 128], strides = [1, 1]} : vector<8x384xf32> to vector<8x128xf32>
    %441 = vector.extract_strided_slice %429 {offsets = [0, 128], sizes = [8, 128], strides = [1, 1]} : vector<8x384xf32> to vector<8x128xf32>
    %442 = arith.addf %440, %441 : vector<8x128xf32>
    %443 = arith.negf %442 : vector<8x128xf32>
    %444 = math.exp %443 : vector<8x128xf32>
    %cst_145 = arith.constant 1.000000e+00 : f32
    %445 = vector.broadcast %cst_145 : f32 to vector<8x128xf32>
    %446 = arith.addf %445, %444 : vector<8x128xf32>
    %447 = arith.divf %445, %446 : vector<8x128xf32>
    %448 = vector.extract_strided_slice %426 {offsets = [0, 256], sizes = [8, 128], strides = [1, 1]} : vector<8x384xf32> to vector<8x128xf32>
    %449 = vector.extract_strided_slice %429 {offsets = [0, 256], sizes = [8, 128], strides = [1, 1]} : vector<8x384xf32> to vector<8x128xf32>
    %450 = vector.broadcast %14 : vector<1x128xf32> to vector<8x128xf32>
    %451 = arith.addf %449, %450 : vector<8x128xf32>
    %452 = arith.mulf %439, %451 : vector<8x128xf32>
    %453 = arith.addf %448, %452 : vector<8x128xf32>
    %454 = math.tanh %453 : vector<8x128xf32>
    %cst_146 = arith.constant 1.000000e+00 : f32
    %455 = vector.broadcast %cst_146 : f32 to vector<8x128xf32>
    %456 = arith.subf %455, %447 : vector<8x128xf32>
    %457 = arith.mulf %456, %454 : vector<8x128xf32>
    %458 = arith.mulf %447, %391 : vector<8x128xf32>
    %459 = arith.addf %457, %458 : vector<8x128xf32>
    %460 = vector.extract_strided_slice %427 {offsets = [0, 0], sizes = [8, 128], strides = [1, 1]} : vector<8x384xf32> to vector<8x128xf32>
    %461 = vector.extract_strided_slice %431 {offsets = [0, 0], sizes = [8, 128], strides = [1, 1]} : vector<8x384xf32> to vector<8x128xf32>
    %462 = arith.addf %460, %461 : vector<8x128xf32>
    %463 = arith.negf %462 : vector<8x128xf32>
    %464 = math.exp %463 : vector<8x128xf32>
    %cst_147 = arith.constant 1.000000e+00 : f32
    %465 = vector.broadcast %cst_147 : f32 to vector<8x128xf32>
    %466 = arith.addf %465, %464 : vector<8x128xf32>
    %467 = arith.divf %465, %466 : vector<8x128xf32>
    %468 = vector.extract_strided_slice %427 {offsets = [0, 128], sizes = [8, 128], strides = [1, 1]} : vector<8x384xf32> to vector<8x128xf32>
    %469 = vector.extract_strided_slice %431 {offsets = [0, 128], sizes = [8, 128], strides = [1, 1]} : vector<8x384xf32> to vector<8x128xf32>
    %470 = arith.addf %468, %469 : vector<8x128xf32>
    %471 = arith.negf %470 : vector<8x128xf32>
    %472 = math.exp %471 : vector<8x128xf32>
    %cst_148 = arith.constant 1.000000e+00 : f32
    %473 = vector.broadcast %cst_148 : f32 to vector<8x128xf32>
    %474 = arith.addf %473, %472 : vector<8x128xf32>
    %475 = arith.divf %473, %474 : vector<8x128xf32>
    %476 = vector.extract_strided_slice %427 {offsets = [0, 256], sizes = [8, 128], strides = [1, 1]} : vector<8x384xf32> to vector<8x128xf32>
    %477 = vector.extract_strided_slice %431 {offsets = [0, 256], sizes = [8, 128], strides = [1, 1]} : vector<8x384xf32> to vector<8x128xf32>
    %478 = vector.broadcast %15 : vector<1x128xf32> to vector<8x128xf32>
    %479 = arith.addf %477, %478 : vector<8x128xf32>
    %480 = arith.mulf %467, %479 : vector<8x128xf32>
    %481 = arith.addf %476, %480 : vector<8x128xf32>
    %482 = math.tanh %481 : vector<8x128xf32>
    %cst_149 = arith.constant 1.000000e+00 : f32
    %483 = vector.broadcast %cst_149 : f32 to vector<8x128xf32>
    %484 = arith.subf %483, %475 : vector<8x128xf32>
    %485 = arith.mulf %484, %482 : vector<8x128xf32>
    %486 = arith.mulf %475, %419 : vector<8x128xf32>
    %487 = arith.addf %485, %486 : vector<8x128xf32>
    %c6_150 = arith.constant 6 : index
    %c0_151 = arith.constant 0 : index
    %c0_152 = arith.constant 0 : index
    %488 = vector.load %arg8[%c6_150, %c0_151, %c0_152] : memref<8x8x256xf32, #tpu.memory_space<vmem>>, vector<1x8x128xf32>
    %489 = vector.shape_cast %488 : vector<1x8x128xf32> to vector<8x128xf32>
    %490 = vector.shape_cast %459 : vector<8x128xf32> to vector<1x8x128xf32>
    tpu.vector_store %arg8[%c6_150, %c0_151, %c0_152], %490 {strides = array<i32>} : memref<8x8x256xf32, #tpu.memory_space<vmem>>, vector<1x8x128xf32>,
    %c1_153 = arith.constant 1 : index
    %c0_154 = arith.constant 0 : index
    %c128_155 = arith.constant 128 : index
    %491 = vector.load %arg8[%c1_153, %c0_154, %c128_155] : memref<8x8x256xf32, #tpu.memory_space<vmem>>, vector<1x8x128xf32>
    %492 = vector.shape_cast %491 : vector<1x8x128xf32> to vector<8x128xf32>
    %493 = vector.shape_cast %487 : vector<8x128xf32> to vector<1x8x128xf32>
    tpu.vector_store %arg8[%c1_153, %c0_154, %c128_155], %493 {strides = array<i32>} : memref<8x8x256xf32, #tpu.memory_space<vmem>>, vector<1x8x128xf32>,
    %c56_156 = arith.constant 56 : index
    %c0_157 = arith.constant 0 : index
    %494 = vector.load %arg10[%c56_156, %c0_157] : memref<64x768xf32, #tpu.memory_space<vmem>>, vector<8x384xf32>
    %c0_158 = arith.constant 0 : index
    %c384_159 = arith.constant 384 : index
    %495 = vector.load %arg10[%c0_158, %c384_159] : memref<64x768xf32, #tpu.memory_space<vmem>>, vector<8x384xf32>
    %c0_160 = arith.constant 0 : index
    %c0_161 = arith.constant 0 : index
    %496 = vector.load %arg6[%c0_160, %c0_161] : memref<128x768xf32, #tpu.memory_space<vmem>>, vector<128x384xf32>
    %cst_162 = arith.constant dense<0.000000e+00> : vector<8x384xf32>
    %497 = tpu.matmul %459, %496, %cst_162 {dimension_numbers = #tpu.dot_dimension_numbers<[1], [0], [0], [1], [0, 0, 1, 1], [], []>} : vector<8x128xf32>, vector<128x384xf32>, vector<8x384xf32> -> vector<8x384xf32>
    %c0_163 = arith.constant 0 : index
    %c384_164 = arith.constant 384 : index
    %498 = vector.load %arg6[%c0_163, %c384_164] : memref<128x768xf32, #tpu.memory_space<vmem>>, vector<128x384xf32>
    %cst_165 = arith.constant dense<0.000000e+00> : vector<8x384xf32>
    %499 = tpu.matmul %487, %498, %cst_165 {dimension_numbers = #tpu.dot_dimension_numbers<[1], [0], [0], [1], [0, 0, 1, 1], [], []>} : vector<8x128xf32>, vector<128x384xf32>, vector<8x384xf32> -> vector<8x384xf32>
    %500 = vector.extract_strided_slice %494 {offsets = [0, 0], sizes = [8, 128], strides = [1, 1]} : vector<8x384xf32> to vector<8x128xf32>
    %501 = vector.extract_strided_slice %497 {offsets = [0, 0], sizes = [8, 128], strides = [1, 1]} : vector<8x384xf32> to vector<8x128xf32>
    %502 = arith.addf %500, %501 : vector<8x128xf32>
    %503 = arith.negf %502 : vector<8x128xf32>
    %504 = math.exp %503 : vector<8x128xf32>
    %cst_166 = arith.constant 1.000000e+00 : f32
    %505 = vector.broadcast %cst_166 : f32 to vector<8x128xf32>
    %506 = arith.addf %505, %504 : vector<8x128xf32>
    %507 = arith.divf %505, %506 : vector<8x128xf32>
    %508 = vector.extract_strided_slice %494 {offsets = [0, 128], sizes = [8, 128], strides = [1, 1]} : vector<8x384xf32> to vector<8x128xf32>
    %509 = vector.extract_strided_slice %497 {offsets = [0, 128], sizes = [8, 128], strides = [1, 1]} : vector<8x384xf32> to vector<8x128xf32>
    %510 = arith.addf %508, %509 : vector<8x128xf32>
    %511 = arith.negf %510 : vector<8x128xf32>
    %512 = math.exp %511 : vector<8x128xf32>
    %cst_167 = arith.constant 1.000000e+00 : f32
    %513 = vector.broadcast %cst_167 : f32 to vector<8x128xf32>
    %514 = arith.addf %513, %512 : vector<8x128xf32>
    %515 = arith.divf %513, %514 : vector<8x128xf32>
    %516 = vector.extract_strided_slice %494 {offsets = [0, 256], sizes = [8, 128], strides = [1, 1]} : vector<8x384xf32> to vector<8x128xf32>
    %517 = vector.extract_strided_slice %497 {offsets = [0, 256], sizes = [8, 128], strides = [1, 1]} : vector<8x384xf32> to vector<8x128xf32>
    %518 = vector.broadcast %14 : vector<1x128xf32> to vector<8x128xf32>
    %519 = arith.addf %517, %518 : vector<8x128xf32>
    %520 = arith.mulf %507, %519 : vector<8x128xf32>
    %521 = arith.addf %516, %520 : vector<8x128xf32>
    %522 = math.tanh %521 : vector<8x128xf32>
    %cst_168 = arith.constant 1.000000e+00 : f32
    %523 = vector.broadcast %cst_168 : f32 to vector<8x128xf32>
    %524 = arith.subf %523, %515 : vector<8x128xf32>
    %525 = arith.mulf %524, %522 : vector<8x128xf32>
    %526 = arith.mulf %515, %459 : vector<8x128xf32>
    %527 = arith.addf %525, %526 : vector<8x128xf32>
    %528 = vector.extract_strided_slice %495 {offsets = [0, 0], sizes = [8, 128], strides = [1, 1]} : vector<8x384xf32> to vector<8x128xf32>
    %529 = vector.extract_strided_slice %499 {offsets = [0, 0], sizes = [8, 128], strides = [1, 1]} : vector<8x384xf32> to vector<8x128xf32>
    %530 = arith.addf %528, %529 : vector<8x128xf32>
    %531 = arith.negf %530 : vector<8x128xf32>
    %532 = math.exp %531 : vector<8x128xf32>
    %cst_169 = arith.constant 1.000000e+00 : f32
    %533 = vector.broadcast %cst_169 : f32 to vector<8x128xf32>
    %534 = arith.addf %533, %532 : vector<8x128xf32>
    %535 = arith.divf %533, %534 : vector<8x128xf32>
    %536 = vector.extract_strided_slice %495 {offsets = [0, 128], sizes = [8, 128], strides = [1, 1]} : vector<8x384xf32> to vector<8x128xf32>
    %537 = vector.extract_strided_slice %499 {offsets = [0, 128], sizes = [8, 128], strides = [1, 1]} : vector<8x384xf32> to vector<8x128xf32>
    %538 = arith.addf %536, %537 : vector<8x128xf32>
    %539 = arith.negf %538 : vector<8x128xf32>
    %540 = math.exp %539 : vector<8x128xf32>
    %cst_170 = arith.constant 1.000000e+00 : f32
    %541 = vector.broadcast %cst_170 : f32 to vector<8x128xf32>
    %542 = arith.addf %541, %540 : vector<8x128xf32>
    %543 = arith.divf %541, %542 : vector<8x128xf32>
    %544 = vector.extract_strided_slice %495 {offsets = [0, 256], sizes = [8, 128], strides = [1, 1]} : vector<8x384xf32> to vector<8x128xf32>
    %545 = vector.extract_strided_slice %499 {offsets = [0, 256], sizes = [8, 128], strides = [1, 1]} : vector<8x384xf32> to vector<8x128xf32>
    %546 = vector.broadcast %15 : vector<1x128xf32> to vector<8x128xf32>
    %547 = arith.addf %545, %546 : vector<8x128xf32>
    %548 = arith.mulf %535, %547 : vector<8x128xf32>
    %549 = arith.addf %544, %548 : vector<8x128xf32>
    %550 = math.tanh %549 : vector<8x128xf32>
    %cst_171 = arith.constant 1.000000e+00 : f32
    %551 = vector.broadcast %cst_171 : f32 to vector<8x128xf32>
    %552 = arith.subf %551, %543 : vector<8x128xf32>
    %553 = arith.mulf %552, %550 : vector<8x128xf32>
    %554 = arith.mulf %543, %487 : vector<8x128xf32>
    %555 = arith.addf %553, %554 : vector<8x128xf32>
    %c7_172 = arith.constant 7 : index
    %c0_173 = arith.constant 0 : index
    %c0_174 = arith.constant 0 : index
    %556 = vector.load %arg8[%c7_172, %c0_173, %c0_174] : memref<8x8x256xf32, #tpu.memory_space<vmem>>, vector<1x8x128xf32>
    %557 = vector.shape_cast %556 : vector<1x8x128xf32> to vector<8x128xf32>
    %558 = vector.shape_cast %527 : vector<8x128xf32> to vector<1x8x128xf32>
    tpu.vector_store %arg8[%c7_172, %c0_173, %c0_174], %558 {strides = array<i32>} : memref<8x8x256xf32, #tpu.memory_space<vmem>>, vector<1x8x128xf32>,
    %c0_175 = arith.constant 0 : index
    %c0_176 = arith.constant 0 : index
    %c128_177 = arith.constant 128 : index
    %559 = vector.load %arg8[%c0_175, %c0_176, %c128_177] : memref<8x8x256xf32, #tpu.memory_space<vmem>>, vector<1x8x128xf32>
    %560 = vector.shape_cast %559 : vector<1x8x128xf32> to vector<8x128xf32>
    %561 = vector.shape_cast %555 : vector<8x128xf32> to vector<1x8x128xf32>
    tpu.vector_store %arg8[%c0_175, %c0_176, %c128_177], %561 {strides = array<i32>} : memref<8x8x256xf32, #tpu.memory_space<vmem>>, vector<1x8x128xf32>,
    %c0_178 = arith.constant 0 : index
    %c0_179 = arith.constant 0 : index
    %562 = vector.load %arg9[%c0_178, %c0_179] : memref<8x128xf32, #tpu.memory_space<vmem>>, vector<8x128xf32>
    tpu.vector_store %arg9[%c0_178, %c0_179], %527 {strides = array<i32>} : memref<8x128xf32, #tpu.memory_space<vmem>>, vector<8x128xf32>,
    return
  }
  func.func @transform_0(%arg0: i32) -> (i32, i32) {
    %c0_i32 = arith.constant 0 : i32
    %c0_i32_0 = arith.constant 0 : i32
    %c0_i32_1 = arith.constant 0 : i32
    return %c0_i32, %c0_i32_0 : i32, i32
  }
  func.func @transform_1(%arg0: i32) -> (i32, i32) {
    %c0_i32 = arith.constant 0 : i32
    %c0_i32_0 = arith.constant 0 : i32
    %c0_i32_1 = arith.constant 0 : i32
    return %c0_i32, %c0_i32_0 : i32, i32
  }
  func.func @transform_2(%arg0: i32) -> (i32, i32) {
    %c0_i32 = arith.constant 0 : i32
    %c0_i32_0 = arith.constant 0 : i32
    %c0_i32_1 = arith.constant 0 : i32
    return %c0_i32, %c0_i32_0 : i32, i32
  }
  func.func @transform_3(%arg0: i32) -> (i32, i32) {
    %c0_i32 = arith.constant 0 : i32
    %c0_i32_0 = arith.constant 0 : i32
    %c0_i32_1 = arith.constant 0 : i32
    return %c0_i32, %c0_i32_0 : i32, i32
  }
  func.func @transform_4(%arg0: i32) -> (i32, i32) {
    %c0_i32 = arith.constant 0 : i32
    %c0_i32_0 = arith.constant 0 : i32
    %c0_i32_1 = arith.constant 0 : i32
    return %c0_i32, %c0_i32_0 : i32, i32
  }
  func.func @transform_5(%arg0: i32) -> (i32, i32) {
    %c0_i32 = arith.constant 0 : i32
    %c0_i32_0 = arith.constant 0 : i32
    %c0_i32_1 = arith.constant 0 : i32
    return %c0_i32, %c0_i32_0 : i32, i32
  }
  func.func @transform_6(%arg0: i32) -> (i32, i32) {
    %c0_i32 = arith.constant 0 : i32
    %c0_i32_0 = arith.constant 0 : i32
    %c0_i32_1 = arith.constant 0 : i32
    return %c0_i32, %c0_i32_0 : i32, i32
  }
  func.func @transform_7(%arg0: i32) -> (i32, i32, i32) {
    %c0_i32 = arith.constant 0 : i32
    %c0_i32_0 = arith.constant 0 : i32
    %c0_i32_1 = arith.constant 0 : i32
    %c0_i32_2 = arith.constant 0 : i32
    return %c0_i32, %c0_i32_0, %c0_i32_1 : i32, i32, i32
  }
  func.func @transform_8(%arg0: i32) -> (i32, i32) {
    %c0_i32 = arith.constant 0 : i32
    %c0_i32_0 = arith.constant 0 : i32
    %c0_i32_1 = arith.constant 0 : i32
    return %c0_i32, %c0_i32_0 : i32, i32
  }
}

</mosaic_0001>

<llo_original>
// kernel: tpu_custom_call.1
$region0: #{tpu_custom_call.1}
  #allocation0 [shape = 'u32[]', space=smem, size = 0x4, offset = 0x4, fixed_abs, tag = 'smem constant byte address 0x4 - core index']
  #allocation1 [shape = 'u32[144,128]{1,0:T(1,128)}', space=vmem, size = 0x12000, scoped, tag = 'internal scratch']
  #allocation2 [shape = 'f32[64,768]{1,0:T(8,128)}', space=vmem, size = 0x30000, scoped, tag = 'scratch operand']
  %s0 = inlined_call_operand.vmem [shape: s32[64,1], index: 0, kind: input, shape index: {}]
  %s1 = inlined_call_operand.hbm [shape: f32[128,128], index: 1, kind: input, shape index: {}]
  %s2 = inlined_call_operand.vmem [shape: f32[8,256], index: 2, kind: input, shape index: {}]
  %s3 = inlined_call_operand.hbm [shape: f32[128,768], index: 3, kind: input, shape index: {}]
  %s4 = inlined_call_operand.vmem [shape: f32[1,768], index: 4, kind: input, shape index: {}]
  %s5 = inlined_call_operand.hbm [shape: f32[128,768], index: 5, kind: input, shape index: {}]
  %s6 = inlined_call_operand.vmem [shape: f32[1,256], index: 6, kind: input, shape index: {}]
  %s7 = inlined_call_operand.hbm [shape: f32[8,8,256], index: 7, kind: output, shape index: {0}]
  %s8 = inlined_call_operand.hbm [shape: f32[8,128], index: 8, kind: output, shape index: {1}]
  %9 = xla_tuple %s7, %s8
  %s10 = sld [smem:[#allocation0]]
  $region58: #{tpu_custom_call.1} parent=0
    _
  %s12 = ssub.s32 1, %s10
  %s13 = scalar_select 0, %s12, %s10
  $region1: #{tpu_custom_call.1} parent=0
    #allocation3 [shape = 'u8[65536]{0}', space=vmem, size = 0x10000, scoped, tag = 'input window, operand 1, single buffered']
    #allocation4 [shape = 's32[1]{0}', space=sflag, size = 0x4, scoped, tag = 'scoped memory for tpu_custom_call.1']
    #allocation5 [shape = 's32[1]{0}', space=sflag, size = 0x4, scoped, tag = 'scoped memory for tpu_custom_call.1']
    #allocation6 [shape = 'u8[393216]{0}', space=vmem, size = 0x60000, scoped, tag = 'input window, operand 3, single buffered']
    #allocation7 [shape = 's32[1]{0}', space=sflag, size = 0x4, scoped, tag = 'scoped memory for tpu_custom_call.1']
    #allocation8 [shape = 'u8[393216]{0}', space=vmem, size = 0x60000, scoped, tag = 'input window, operand 5, single buffered']
    #allocation9 [shape = 'u8[65536]{0}', space=vmem, size = 0x10000, scoped, tag = 'output window, operand 0, single buffered']
    #allocation10 [shape = 'u8[4096]{0}', space=vmem, size = 0x1000, scoped, tag = 'output window, operand 1, single buffered']
    #allocation11 [shape = 's32[1]{0}', space=sflag, size = 0x4, scoped, tag = 'scoped memory for tpu_custom_call.1']
    %14 = vsyncpa [#allocation4], 0
    %15 = vsyncpa [#allocation7], 0
    %16 = vsyncpa [#allocation5], 0
    %17 = vsyncpa [#allocation11], 0
    // Predicated region
    $region2: #{tpu_custom_call.1} parent=1 // pred_check
      _
    $region3: #{tpu_custom_call.1} parent=1 // pred_check_branch
      %19 = sbr.rel (0) target = $region5
    $region4: #{tpu_custom_call.1} parent=1 // pred_region
      _
    $region5: #{tpu_custom_call.1} parent=1 // pred_fallthru
      _
    // Predicated region
    $region6: #{tpu_custom_call.1} parent=1 // pred_check
      _
    $region7: #{tpu_custom_call.1} parent=1 // pred_check_branch
      %21 = sbr.rel (0) target = $region9
    $region8: #{tpu_custom_call.1} parent=1 // pred_region
      %s23 = ssub.s32 2048, 2048
      %24 = vsyncadd [#allocation4], %s23
      %s25 = sshll.u32 [#allocation3], 4
      %s26 = int_to_ptr.vmem [resolvable:$true] %s25
      %31 = dma.hbm_to_vmem [thread:$0]  %s1, 2048, %s26, [#allocation4], 128, 128, 8
    $region9: #{tpu_custom_call.1} parent=1 // pred_fallthru
      _
    // Predicated region
    $region10: #{tpu_custom_call.1} parent=1 // pred_check
      _
    $region11: #{tpu_custom_call.1} parent=1 // pred_check_branch
      %33 = sbr.rel (0) target = $region13
    $region12: #{tpu_custom_call.1} parent=1 // pred_region
      _
    $region13: #{tpu_custom_call.1} parent=1 // pred_fallthru
      _
    // Predicated region
    $region14: #{tpu_custom_call.1} parent=1 // pred_check
      _
    $region15: #{tpu_custom_call.1} parent=1 // pred_check_branch
      %35 = sbr.rel (0) target = $region17
    $region16: #{tpu_custom_call.1} parent=1 // pred_region
      %s37 = ssub.s32 12288, 12288
      %38 = vsyncadd [#allocation7], %s37
      %s39 = sshll.u32 [#allocation6], 4
      %s40 = int_to_ptr.vmem [resolvable:$true] %s39
      %45 = dma.hbm_to_vmem [thread:$0]  %s3, 12288, %s40, [#allocation7], 768, 768, 48
    $region17: #{tpu_custom_call.1} parent=1 // pred_fallthru
      _
    // Predicated region
    $region18: #{tpu_custom_call.1} parent=1 // pred_check
      _
    $region19: #{tpu_custom_call.1} parent=1 // pred_check_branch
      %47 = sbr.rel (0) target = $region21
    $region20: #{tpu_custom_call.1} parent=1 // pred_region
      _
    $region21: #{tpu_custom_call.1} parent=1 // pred_fallthru
      _
    // Predicated region
    $region22: #{tpu_custom_call.1} parent=1 // pred_check
      _
    $region23: #{tpu_custom_call.1} parent=1 // pred_check_branch
      %49 = sbr.rel (0) target = $region25
    $region24: #{tpu_custom_call.1} parent=1 // pred_region
      %s51 = ssub.s32 12288, 12288
      %52 = vsyncadd [#allocation7], %s51
      %s53 = sshll.u32 [#allocation8], 4
      %s54 = int_to_ptr.vmem [resolvable:$true] %s53
      %59 = dma.hbm_to_vmem [thread:$0]  %s5, 12288, %s54, [#allocation7], 768, 768, 48
    $region25: #{tpu_custom_call.1} parent=1 // pred_fallthru
      _
    // Predicated region
    $region26: #{tpu_custom_call.1} parent=1 // pred_check
      _
    $region27: #{tpu_custom_call.1} parent=1 // pred_check_branch
      %61 = sbr.rel (0) target = $region29
    $region28: #{tpu_custom_call.1} parent=1 // pred_region
      _
    $region29: #{tpu_custom_call.1} parent=1 // pred_fallthru
      _
    // Predicated region
    $region30: #{tpu_custom_call.1} parent=1 // pred_check
      _
    $region31: #{tpu_custom_call.1} parent=1 // pred_check_branch
      %63 = sbr.rel (0) target = $region33
    $region32: #{tpu_custom_call.1} parent=1 // pred_region
      %64 = dma.done [#allocation4], 2048
    $region33: #{tpu_custom_call.1} parent=1 // pred_fallthru
      _
    // Predicated region
    $region34: #{tpu_custom_call.1} parent=1 // pred_check
      _
    $region35: #{tpu_custom_call.1} parent=1 // pred_check_branch
      %66 = sbr.rel (0) target = $region37
    $region36: #{tpu_custom_call.1} parent=1 // pred_region
      %67 = dma.done [#allocation7], 12288
    $region37: #{tpu_custom_call.1} parent=1 // pred_fallthru
      _
    // Predicated region
    $region38: #{tpu_custom_call.1} parent=1 // pred_check
      _
    $region39: #{tpu_custom_call.1} parent=1 // pred_check_branch
      %69 = sbr.rel (0) target = $region41
    $region40: #{tpu_custom_call.1} parent=1 // pred_region
      %70 = dma.done [#allocation7], 12288
    $region41: #{tpu_custom_call.1} parent=1 // pred_fallthru
      _
    %v71 = vld [vmem:[%s0] sm:$0xff]
    %v72 = vld [vmem:[%s0 + $0x8] sm:$0xff]
    %v73 = vld [vmem:[%s0 + $0x10] sm:$0xff]
    %v74 = vld [vmem:[%s0 + $0x18] sm:$0xff]
    %v75 = vld [vmem:[%s0 + $0x20] sm:$0xff]
    %v76 = vld [vmem:[%s0 + $0x28] sm:$0xff]
    %v77 = vld [vmem:[%s0 + $0x30] sm:$0xff]
    %v78 = vld [vmem:[%s0 + $0x38] sm:$0xff]
    %v79 = vlaneseq
    %v80 = vand.u32 %v79, 127
    %81 = vset.pattern.permute.xlu0 0
    %82 = vperm.xlu0 %81, %v71
    %v83 = vpop.permute.xlu0 %82
    %84 = vset.pattern.permute.xlu0 0
    %85 = vperm.xlu0 %84, %v72
    %v86 = vpop.permute.xlu0 %85
    %87 = vset.pattern.permute.xlu0 0
    %88 = vperm.xlu0 %87, %v73
    %v89 = vpop.permute.xlu0 %88
    %90 = vset.pattern.permute.xlu0 0
    %91 = vperm.xlu0 %90, %v74
    %v92 = vpop.permute.xlu0 %91
    %93 = vset.pattern.permute.xlu0 0
    %94 = vperm.xlu0 %93, %v75
    %v95 = vpop.permute.xlu0 %94
    %96 = vset.pattern.permute.xlu0 0
    %97 = vperm.xlu0 %96, %v76
    %v98 = vpop.permute.xlu0 %97
    %99 = vset.pattern.permute.xlu0 0
    %100 = vperm.xlu0 %99, %v77
    %v101 = vpop.permute.xlu0 %100
    %102 = vset.pattern.permute.xlu0 0
    %103 = vperm.xlu0 %102, %v78
    %v104 = vpop.permute.xlu0 %103
    %vm105 = vcmp.eq.s32.totalorder %v83, %v80
    %vm106 = vcmp.eq.s32.totalorder %v86, %v80
    %vm107 = vcmp.eq.s32.totalorder %v89, %v80
    %vm108 = vcmp.eq.s32.totalorder %v92, %v80
    %vm109 = vcmp.eq.s32.totalorder %v95, %v80
    %vm110 = vcmp.eq.s32.totalorder %v98, %v80
    %vm111 = vcmp.eq.s32.totalorder %v101, %v80
    %vm112 = vcmp.eq.s32.totalorder %v104, %v80
    %v113 = vsel %vm105, 1, 0
    %v114 = vsel %vm106, 1, 0
    %v115 = vsel %vm107, 1, 0
    %v116 = vsel %vm108, 1, 0
    %v117 = vsel %vm109, 1, 0
    %v118 = vsel %vm110, 1, 0
    %v119 = vsel %vm111, 1, 0
    %v120 = vsel %vm112, 1, 0
    %v121 = vcvt.s32.f32 %v113
    %v122 = vcvt.s32.f32 %v114
    %v123 = vcvt.s32.f32 %v115
    %v124 = vcvt.s32.f32 %v116
    %v125 = vcvt.s32.f32 %v117
    %v126 = vcvt.s32.f32 %v118
    %v127 = vcvt.s32.f32 %v119
    %v128 = vcvt.s32.f32 %v120
    %v129 = vld [vmem:[#allocation3] sm:$0xff]
    %v130 = vld [vmem:[#allocation3 + $0x8] sm:$0xff]
    %v131 = vld [vmem:[#allocation3 + $0x10] sm:$0xff]
    %v132 = vld [vmem:[#allocation3 + $0x18] sm:$0xff]
    %v133 = vld [vmem:[#allocation3 + $0x20] sm:$0xff]
    %v134 = vld [vmem:[#allocation3 + $0x28] sm:$0xff]
    %v135 = vld [vmem:[#allocation3 + $0x30] sm:$0xff]
    %v136 = vld [vmem:[#allocation3 + $0x38] sm:$0xff]
    %v137 = vld [vmem:[#allocation3 + $0x40] sm:$0xff]
    %v138 = vld [vmem:[#allocation3 + $0x48] sm:$0xff]
    %v139 = vld [vmem:[#allocation3 + $0x50] sm:$0xff]
    %v140 = vld [vmem:[#allocation3 + $0x58] sm:$0xff]
    %v141 = vld [vmem:[#allocation3 + $0x60] sm:$0xff]
    %v142 = vld [vmem:[#allocation3 + $0x68] sm:$0xff]
    %v143 = vld [vmem:[#allocation3 + $0x70] sm:$0xff]
    %v144 = vld [vmem:[#allocation3 + $0x78] sm:$0xff]
    %145 = vmatprep.subr.mxu0 0.0
    %146 = vmatpush1.msra.mxu0 %v144
    %147 = vmatprep.subr.mxu0 0.0
    %148 = vmatpush1.msra.mxu0 %v143
    %149 = vmatprep.subr.mxu0 0.0
    %150 = vmatpush1.msra.mxu0 %v142
    %151 = vmatprep.subr.mxu0 0.0
    %152 = vmatpush1.msra.mxu0 %v141
    %153 = vmatprep.subr.mxu0 0.0
    %154 = vmatpush1.msra.mxu0 %v140
    %155 = vmatprep.subr.mxu0 0.0
    %156 = vmatpush1.msra.mxu0 %v139
    %157 = vmatprep.subr.mxu0 0.0
    %158 = vmatpush1.msra.mxu0 %v138
    %159 = vmatprep.subr.mxu0 0.0
    %160 = vmatpush1.msra.mxu0 %v137
    %161 = vmatprep.subr.mxu0 0.0
    %162 = vmatpush1.msra.mxu0 %v136
    %163 = vmatprep.subr.mxu0 0.0
    %164 = vmatpush1.msra.mxu0 %v135
    %165 = vmatprep.subr.mxu0 0.0
    %166 = vmatpush1.msra.mxu0 %v134
    %167 = vmatprep.subr.mxu0 0.0
    %168 = vmatpush1.msra.mxu0 %v133
    %169 = vmatprep.subr.mxu0 0.0
    %170 = vmatpush1.msra.mxu0 %v132
    %171 = vmatprep.subr.mxu0 0.0
    %172 = vmatpush1.msra.mxu0 %v131
    %173 = vmatprep.subr.mxu0 0.0
    %174 = vmatpush1.msra.mxu0 %v130
    %175 = vmatprep.subr.mxu0 0.0
    %176 = vmatpush1.msra.mxu0 %v129
    %177 = vmatprep.subr.mxu0 0.0
    %178 = vmatpush2.msra.mxu0 0.0
    %179 = vmatprep.subr.mxu0 0.0
    %180 = vmatpush2.msra.mxu0 0.0
    %181 = vmatprep.subr.mxu0 0.0
    %182 = vmatpush2.msra.mxu0 0.0
    %183 = vmatprep.subr.mxu0 0.0
    %184 = vmatpush2.msra.mxu0 0.0
    %185 = vmatprep.subr.mxu0 0.0
    %186 = vmatpush2.msra.mxu0 0.0
    %187 = vmatprep.subr.mxu0 0.0
    %188 = vmatpush2.msra.mxu0 0.0
    %189 = vmatprep.subr.mxu0 0.0
    %190 = vmatpush2.msra.mxu0 0.0
    %191 = vmatprep.subr.mxu0 0.0
    %192 = vmatpush2.msra.mxu0 0.0
    %193 = vmatprep.subr.mxu0 0.0
    %194 = vmatpush2.msra.mxu0 0.0
    %195 = vmatprep.subr.mxu0 0.0
    %196 = vmatpush2.msra.mxu0 0.0
    %197 = vmatprep.subr.mxu0 0.0
    %198 = vmatpush2.msra.mxu0 0.0
    %199 = vmatprep.subr.mxu0 0.0
    %200 = vmatpush2.msra.mxu0 0.0
    %201 = vmatprep.subr.mxu0 0.0
    %202 = vmatpush2.msra.mxu0 0.0
    %203 = vmatprep.subr.mxu0 0.0
    %204 = vmatpush2.msra.mxu0 0.0
    %205 = vmatprep.subr.mxu0 0.0
    %206 = vmatpush2.msra.mxu0 0.0
    %207 = vmatprep.subr.mxu0 0.0
    %208 = vmatpush2.msra.mxu0 0.0
    %209 = vmatprep.mubr.f32.mxu0 0.0
    %210 = vmatmul.mubr.f32.gmra.mxu0 %v121
    %v211 = vpop.f32.mrf.mxu0
    %v212 = vadd.f32 0.0, %v211
    %v213 = vpop.f32.mrf.mxu0
    %214 = vmatprep.mubr.f32.mxu0 0.0
    %215 = vmatmul.mubr.f32.gmra.mxu0 %v122
    %v216 = vpop.f32.mrf.mxu0
    %v217 = vadd.f32 0.0, %v216
    %v218 = vpop.f32.mrf.mxu0
    %219 = vmatprep.mubr.f32.mxu0 0.0
    %220 = vmatmul.mubr.f32.gmra.mxu0 %v123
    %v221 = vpop.f32.mrf.mxu0
    %v222 = vadd.f32 0.0, %v221
    %v223 = vpop.f32.mrf.mxu0
    %224 = vmatprep.mubr.f32.mxu0 0.0
    %225 = vmatmul.mubr.f32.gmra.mxu0 %v124
    %v226 = vpop.f32.mrf.mxu0
    %v227 = vadd.f32 0.0, %v226
    %v228 = vpop.f32.mrf.mxu0
    %229 = vmatprep.mubr.f32.mxu0 0.0
    %230 = vmatmul.mubr.f32.gmra.mxu0 %v125
    %v231 = vpop.f32.mrf.mxu0
    %v232 = vadd.f32 0.0, %v231
    %v233 = vpop.f32.mrf.mxu0
    %234 = vmatprep.mubr.f32.mxu0 0.0
    %235 = vmatmul.mubr.f32.gmra.mxu0 %v126
    %v236 = vpop.f32.mrf.mxu0
    %v237 = vadd.f32 0.0, %v236
    %v238 = vpop.f32.mrf.mxu0
    %239 = vmatprep.mubr.f32.mxu0 0.0
    %240 = vmatmul.mubr.f32.gmra.mxu0 %v127
    %v241 = vpop.f32.mrf.mxu0
    %v242 = vadd.f32 0.0, %v241
    %v243 = vpop.f32.mrf.mxu0
    %244 = vmatprep.mubr.f32.mxu0 0.0
    %245 = vmatmul.mubr.f32.gmra.mxu0 %v128
    %v246 = vpop.f32.mrf.mxu0
    %v247 = vadd.f32 0.0, %v246
    %v248 = vpop.f32.mrf.mxu0
    %249 = vdwg.mxu0
    %v250 = vld [vmem:[#allocation6] sm:$0xff]
    %v251 = vld [vmem:[#allocation6 + $0x8] sm:$0xff]
    %v252 = vld [vmem:[#allocation6 + $0x10] sm:$0xff]
    %v253 = vld [vmem:[#allocation6 + $0x18] sm:$0xff]
    %v254 = vld [vmem:[#allocation6 + $0x20] sm:$0xff]
    %v255 = vld [vmem:[#allocation6 + $0x28] sm:$0xff]
    %v256 = vld [vmem:[#allocation6 + $0x30] sm:$0xff]
    %v257 = vld [vmem:[#allocation6 + $0x38] sm:$0xff]
    %v258 = vld [vmem:[#allocation6 + $0x40] sm:$0xff]
    %v259 = vld [vmem:[#allocation6 + $0x48] sm:$0xff]
    %v260 = vld [vmem:[#allocation6 + $0x50] sm:$0xff]
    %v261 = vld [vmem:[#allocation6 + $0x58] sm:$0xff]
    %v262 = vld [vmem:[#allocation6 + $0x60] sm:$0xff]
    %v263 = vld [vmem:[#allocation6 + $0x68] sm:$0xff]
    %v264 = vld [vmem:[#allocation6 + $0x70] sm:$0xff]
    %v265 = vld [vmem:[#allocation6 + $0x78] sm:$0xff]
    %v266 = vld [vmem:[#allocation6 + $0x80] sm:$0xff]
    %v267 = vld [vmem:[#allocation6 + $0x88] sm:$0xff]
    %v268 = vld [vmem:[#allocation6 + $0x90] sm:$0xff]
    %v269 = vld [vmem:[#allocation6 + $0x98] sm:$0xff]
    %v270 = vld [vmem:[#allocation6 + $0xa0] sm:$0xff]
    %v271 = vld [vmem:[#allocation6 + $0xa8] sm:$0xff]
    %v272 = vld [vmem:[#allocation6 + $0xb0] sm:$0xff]
    %v273 = vld [vmem:[#allocation6 + $0xb8] sm:$0xff]
    %v274 = vld [vmem:[#allocation6 + $0xc0] sm:$0xff]
    %v275 = vld [vmem:[#allocation6 + $0xc8] sm:$0xff]
    %v276 = vld [vmem:[#allocation6 + $0xd0] sm:$0xff]
    %v277 = vld [vmem:[#allocation6 + $0xd8] sm:$0xff]
    %v278 = vld [vmem:[#allocation6 + $0xe0] sm:$0xff]
    %v279 = vld [vmem:[#allocation6 + $0xe8] sm:$0xff]
    %v280 = vld [vmem:[#allocation6 + $0xf0] sm:$0xff]
    %v281 = vld [vmem:[#allocation6 + $0xf8] sm:$0xff]
    %v282 = vld [vmem:[#allocation6 + $0x100] sm:$0xff]
    %v283 = vld [vmem:[#allocation6 + $0x108] sm:$0xff]
    %v284 = vld [vmem:[#allocation6 + $0x110] sm:$0xff]
    %v285 = vld [vmem:[#allocation6 + $0x118] sm:$0xff]
    %v286 = vld [vmem:[#allocation6 + $0x120] sm:$0xff]
    %v287 = vld [vmem:[#allocation6 + $0x128] sm:$0xff]
    %v288 = vld [vmem:[#allocation6 + $0x130] sm:$0xff]
    %v289 = vld [vmem:[#allocation6 + $0x138] sm:$0xff]
    %v290 = vld [vmem:[#allocation6 + $0x140] sm:$0xff]
    %v291 = vld [vmem:[#allocation6 + $0x148] sm:$0xff]
    %v292 = vld [vmem:[#allocation6 + $0x150] sm:$0xff]
    %v293 = vld [vmem:[#allocation6 + $0x158] sm:$0xff]
    %v294 = vld [vmem:[#allocation6 + $0x160] sm:$0xff]
    %v295 = vld [vmem:[#allocation6 + $0x168] sm:$0xff]
    %v296 = vld [vmem:[#allocation6 + $0x170] sm:$0xff]
    %v297 = vld [vmem:[#allocation6 + $0x178] sm:$0xff]
    %v298 = vld [vmem:[#allocation6 + $0x180] sm:$0xff]
    %v299 = vld [vmem:[#allocation6 + $0x188] sm:$0xff]
    %v300 = vld [vmem:[#allocation6 + $0x190] sm:$0xff]
    %v301 = vld [vmem:[#allocation6 + $0x198] sm:$0xff]
    %v302 = vld [vmem:[#allocation6 + $0x1a0] sm:$0xff]
    %v303 = vld [vmem:[#allocation6 + $0x1a8] sm:$0xff]
    %v304 = vld [vmem:[#allocation6 + $0x1b0] sm:$0xff]
    %v305 = vld [vmem:[#allocation6 + $0x1b8] sm:$0xff]
    %v306 = vld [vmem:[#allocation6 + $0x1c0] sm:$0xff]
    %v307 = vld [vmem:[#allocation6 + $0x1c8] sm:$0xff]
    %v308 = vld [vmem:[#allocation6 + $0x1d0] sm:$0xff]
    %v309 = vld [vmem:[#allocation6 + $0x1d8] sm:$0xff]
    %v310 = vld [vmem:[#allocation6 + $0x1e0] sm:$0xff]
    %v311 = vld [vmem:[#allocation6 + $0x1e8] sm:$0xff]
    %v312 = vld [vmem:[#allocation6 + $0x1f0] sm:$0xff]
    %v313 = vld [vmem:[#allocation6 + $0x1f8] sm:$0xff]
    %v314 = vld [vmem:[#allocation6 + $0x200] sm:$0xff]
    %v315 = vld [vmem:[#allocation6 + $0x208] sm:$0xff]
    %v316 = vld [vmem:[#allocation6 + $0x210] sm:$0xff]
    %v317 = vld [vmem:[#allocation6 + $0x218] sm:$0xff]
    %v318 = vld [vmem:[#allocation6 + $0x220] sm:$0xff]
    %v319 = vld [vmem:[#allocation6 + $0x228] sm:$0xff]
    %v320 = vld [vmem:[#allocation6 + $0x230] sm:$0xff]
    %v321 = vld [vmem:[#allocation6 + $0x238] sm:$0xff]
    %v322 = vld [vmem:[#allocation6 + $0x240] sm:$0xff]
    %v323 = vld [vmem:[#allocation6 + $0x248] sm:$0xff]
    %v324 = vld [vmem:[#allocation6 + $0x250] sm:$0xff]
    %v325 = vld [vmem:[#allocation6 + $0x258] sm:$0xff]
    %v326 = vld [vmem:[#allocation6 + $0x260] sm:$0xff]
    %v327 = vld [vmem:[#allocation6 + $0x268] sm:$0xff]
    %v328 = vld [vmem:[#allocation6 + $0x270] sm:$0xff]
    %v329 = vld [vmem:[#allocation6 + $0x278] sm:$0xff]
    %v330 = vld [vmem:[#allocation6 + $0x280] sm:$0xff]
    %v331 = vld [vmem:[#allocation6 + $0x288] sm:$0xff]
    %v332 = vld [vmem:[#allocation6 + $0x290] sm:$0xff]
    %v333 = vld [vmem:[#allocation6 + $0x298] sm:$0xff]
    %v334 = vld [vmem:[#allocation6 + $0x2a0] sm:$0xff]
    %v335 = vld [vmem:[#allocation6 + $0x2a8] sm:$0xff]
    %v336 = vld [vmem:[#allocation6 + $0x2b0] sm:$0xff]
    %v337 = vld [vmem:[#allocation6 + $0x2b8] sm:$0xff]
    %v338 = vld [vmem:[#allocation6 + $0x2c0] sm:$0xff]
    %v339 = vld [vmem:[#allocation6 + $0x2c8] sm:$0xff]
    %v340 = vld [vmem:[#allocation6 + $0x2d0] sm:$0xff]
    %v341 = vld [vmem:[#allocation6 + $0x2d8] sm:$0xff]
    %v342 = vld [vmem:[#allocation6 + $0x2e0] sm:$0xff]
    %v343 = vld [vmem:[#allocation6 + $0x2e8] sm:$0xff]
    %v344 = vld [vmem:[#allocation6 + $0x2f0] sm:$0xff]
    %v345 = vld [vmem:[#allocation6 + $0x2f8] sm:$0xff]
    %v346 = vld [vmem:[%s4] sm:$0x3f]
    %v348 = vlaneseq
    %v349 = vshrl.u32 %v348, 7
    %v350 = vsub.s32 0, %v349
    %v351 = vrot.slane %v346, %v350
    %v352 = vlaneseq
    %v353 = vshrl.u32 %v352, 7
    %v354 = vsub.s32 1, %v353
    %v355 = vrot.slane %v346, %v354
    %v356 = vlaneseq
    %v357 = vshrl.u32 %v356, 7
    %v358 = vsub.s32 2, %v357
    %v359 = vrot.slane %v346, %v358
    %v360 = vlaneseq
    %v361 = vshrl.u32 %v360, 7
    %v362 = vsub.s32 3, %v361
    %v363 = vrot.slane %v346, %v362
    %v364 = vlaneseq
    %v365 = vshrl.u32 %v364, 7
    %v366 = vsub.s32 4, %v365
    %v367 = vrot.slane %v346, %v366
    %v368 = vlaneseq
    %v369 = vshrl.u32 %v368, 7
    %v370 = vsub.s32 5, %v369
    %v371 = vrot.slane %v346, %v370
    %378 = vmatprep.subr.mxu0 %v341
    %379 = vmatpush1.msra.mxu0 %v340
    %380 = vmatprep.subr.mxu0 %v335
    %381 = vmatpush1.msra.mxu0 %v334
    %382 = vmatprep.subr.mxu0 %v329
    %383 = vmatpush1.msra.mxu0 %v328
    %384 = vmatprep.subr.mxu0 %v323
    %385 = vmatpush1.msra.mxu0 %v322
    %386 = vmatprep.subr.mxu0 %v317
    %387 = vmatpush1.msra.mxu0 %v316
    %388 = vmatprep.subr.mxu0 %v311
    %389 = vmatpush1.msra.mxu0 %v310
    %390 = vmatprep.subr.mxu0 %v305
    %391 = vmatpush1.msra.mxu0 %v304
    %392 = vmatprep.subr.mxu0 %v299
    %393 = vmatpush1.msra.mxu0 %v298
    %394 = vmatprep.subr.mxu0 %v293
    %395 = vmatpush1.msra.mxu0 %v292
    %396 = vmatprep.subr.mxu0 %v287
    %397 = vmatpush1.msra.mxu0 %v286
    %398 = vmatprep.subr.mxu0 %v281
    %399 = vmatpush1.msra.mxu0 %v280
    %400 = vmatprep.subr.mxu0 %v275
    %401 = vmatpush1.msra.mxu0 %v274
    %402 = vmatprep.subr.mxu0 %v269
    %403 = vmatpush1.msra.mxu0 %v268
    %404 = vmatprep.subr.mxu0 %v263
    %405 = vmatpush1.msra.mxu0 %v262
    %406 = vmatprep.subr.mxu0 %v257
    %407 = vmatpush1.msra.mxu0 %v256
    %408 = vmatprep.subr.mxu0 %v251
    %409 = vmatpush1.msra.mxu0 %v250
    %410 = vmatprep.subr.mxu0 0.0
    %411 = vmatpush2.msra.mxu0 0.0
    %412 = vmatprep.subr.mxu0 0.0
    %413 = vmatpush2.msra.mxu0 0.0
    %414 = vmatprep.subr.mxu0 0.0
    %415 = vmatpush2.msra.mxu0 0.0
    %416 = vmatprep.subr.mxu0 0.0
    %417 = vmatpush2.msra.mxu0 0.0
    %418 = vmatprep.subr.mxu0 0.0
    %419 = vmatpush2.msra.mxu0 0.0
    %420 = vmatprep.subr.mxu0 0.0
    %421 = vmatpush2.msra.mxu0 0.0
    %422 = vmatprep.subr.mxu0 0.0
    %423 = vmatpush2.msra.mxu0 0.0
    %424 = vmatprep.subr.mxu0 0.0
    %425 = vmatpush2.msra.mxu0 0.0
    %426 = vmatprep.subr.mxu0 0.0
    %427 = vmatpush2.msra.mxu0 0.0
    %428 = vmatprep.subr.mxu0 0.0
    %429 = vmatpush2.msra.mxu0 0.0
    %430 = vmatprep.subr.mxu0 0.0
    %431 = vmatpush2.msra.mxu0 0.0
    %432 = vmatprep.subr.mxu0 0.0
    %433 = vmatpush2.msra.mxu0 0.0
    %434 = vmatprep.subr.mxu0 0.0
    %435 = vmatpush2.msra.mxu0 0.0
    %436 = vmatprep.subr.mxu0 0.0
    %437 = vmatpush2.msra.mxu0 0.0
    %438 = vmatprep.subr.mxu0 0.0
    %439 = vmatpush2.msra.mxu0 0.0
    %440 = vmatprep.subr.mxu0 0.0
    %441 = vmatpush2.msra.mxu0 0.0
    %442 = vmatprep.mubr.f32.mxu0 0.0
    %443 = vmatmul.mubr.f32.gmra.mxu0 %v212
    %v444 = vpop.f32.mrf.mxu0
    %v445 = vadd.f32 %v351, %v444
    %v446 = vpop.f32.mrf.mxu0
    %v447 = vadd.f32 %v355, %v446
    %448 = vmatprep.mubr.f32.mxu0 0.0
    %449 = vmatmul.mubr.f32.gmra.mxu0 %v217
    %v450 = vpop.f32.mrf.mxu0
    %v451 = vadd.f32 %v351, %v450
    %v452 = vpop.f32.mrf.mxu0
    %v453 = vadd.f32 %v355, %v452
    %454 = vmatprep.mubr.f32.mxu0 0.0
    %455 = vmatmul.mubr.f32.gmra.mxu0 %v222
    %v456 = vpop.f32.mrf.mxu0
    %v457 = vadd.f32 %v351, %v456
    %v458 = vpop.f32.mrf.mxu0
    %v459 = vadd.f32 %v355, %v458
    %460 = vmatprep.mubr.f32.mxu0 0.0
    %461 = vmatmul.mubr.f32.gmra.mxu0 %v227
    %v462 = vpop.f32.mrf.mxu0
    %v463 = vadd.f32 %v351, %v462
    %v464 = vpop.f32.mrf.mxu0
    %v465 = vadd.f32 %v355, %v464
    %466 = vmatprep.mubr.f32.mxu0 0.0
    %467 = vmatmul.mubr.f32.gmra.mxu0 %v232
    %v468 = vpop.f32.mrf.mxu0
    %v469 = vadd.f32 %v351, %v468
    %v470 = vpop.f32.mrf.mxu0
    %v471 = vadd.f32 %v355, %v470
    %472 = vmatprep.mubr.f32.mxu0 0.0
    %473 = vmatmul.mubr.f32.gmra.mxu0 %v237
    %v474 = vpop.f32.mrf.mxu0
    %v475 = vadd.f32 %v351, %v474
    %v476 = vpop.f32.mrf.mxu0
    %v477 = vadd.f32 %v355, %v476
    %478 = vmatprep.mubr.f32.mxu0 0.0
    %479 = vmatmul.mubr.f32.gmra.mxu0 %v242
    %v480 = vpop.f32.mrf.mxu0
    %v481 = vadd.f32 %v351, %v480
    %v482 = vpop.f32.mrf.mxu0
    %v483 = vadd.f32 %v355, %v482
    %484 = vmatprep.mubr.f32.mxu0 0.0
    %485 = vmatmul.mubr.f32.gmra.mxu0 %v247
    %v486 = vpop.f32.mrf.mxu0
    %v487 = vadd.f32 %v351, %v486
    %v488 = vpop.f32.mrf.mxu0
    %v489 = vadd.f32 %v355, %v488
    %490 = vdwg.mxu0
    %491 = vmatprep.subr.mxu0 %v343
    %492 = vmatpush1.msra.mxu0 %v342
    %493 = vmatprep.subr.mxu0 %v337
    %494 = vmatpush1.msra.mxu0 %v336
    %495 = vmatprep.subr.mxu0 %v331
    %496 = vmatpush1.msra.mxu0 %v330
    %497 = vmatprep.subr.mxu0 %v325
    %498 = vmatpush1.msra.mxu0 %v324
    %499 = vmatprep.subr.mxu0 %v319
    %500 = vmatpush1.msra.mxu0 %v318
    %501 = vmatprep.subr.mxu0 %v313
    %502 = vmatpush1.msra.mxu0 %v312
    %503 = vmatprep.subr.mxu0 %v307
    %504 = vmatpush1.msra.mxu0 %v306
    %505 = vmatprep.subr.mxu0 %v301
    %506 = vmatpush1.msra.mxu0 %v300
    %507 = vmatprep.subr.mxu0 %v295
    %508 = vmatpush1.msra.mxu0 %v294
    %509 = vmatprep.subr.mxu0 %v289
    %510 = vmatpush1.msra.mxu0 %v288
    %511 = vmatprep.subr.mxu0 %v283
    %512 = vmatpush1.msra.mxu0 %v282
    %513 = vmatprep.subr.mxu0 %v277
    %514 = vmatpush1.msra.mxu0 %v276
    %515 = vmatprep.subr.mxu0 %v271
    %516 = vmatpush1.msra.mxu0 %v270
    %517 = vmatprep.subr.mxu0 %v265
    %518 = vmatpush1.msra.mxu0 %v264
    %519 = vmatprep.subr.mxu0 %v259
    %520 = vmatpush1.msra.mxu0 %v258
    %521 = vmatprep.subr.mxu0 %v253
    %522 = vmatpush1.msra.mxu0 %v252
    %523 = vmatprep.subr.mxu0 0.0
    %524 = vmatpush2.msra.mxu0 0.0
    %525 = vmatprep.subr.mxu0 0.0
    %526 = vmatpush2.msra.mxu0 0.0
    %527 = vmatprep.subr.mxu0 0.0
    %528 = vmatpush2.msra.mxu0 0.0
    %529 = vmatprep.subr.mxu0 0.0
    %530 = vmatpush2.msra.mxu0 0.0
    %531 = vmatprep.subr.mxu0 0.0
    %532 = vmatpush2.msra.mxu0 0.0
    %533 = vmatprep.subr.mxu0 0.0
    %534 = vmatpush2.msra.mxu0 0.0
    %535 = vmatprep.subr.mxu0 0.0
    %536 = vmatpush2.msra.mxu0 0.0
    %537 = vmatprep.subr.mxu0 0.0
    %538 = vmatpush2.msra.mxu0 0.0
    %539 = vmatprep.subr.mxu0 0.0
    %540 = vmatpush2.msra.mxu0 0.0
    %541 = vmatprep.subr.mxu0 0.0
    %542 = vmatpush2.msra.mxu0 0.0
    %543 = vmatprep.subr.mxu0 0.0
    %544 = vmatpush2.msra.mxu0 0.0
    %545 = vmatprep.subr.mxu0 0.0
    %546 = vmatpush2.msra.mxu0 0.0
    %547 = vmatprep.subr.mxu0 0.0
    %548 = vmatpush2.msra.mxu0 0.0
    %549 = vmatprep.subr.mxu0 0.0
    %550 = vmatpush2.msra.mxu0 0.0
    %551 = vmatprep.subr.mxu0 0.0
    %552 = vmatpush2.msra.mxu0 0.0
    %553 = vmatprep.subr.mxu0 0.0
    %554 = vmatpush2.msra.mxu0 0.0
    %555 = vmatprep.mubr.f32.mxu0 0.0
    %556 = vmatmul.mubr.f32.gmra.mxu0 %v212
    %v557 = vpop.f32.mrf.mxu0
    %v558 = vadd.f32 %v359, %v557
    %v559 = vpop.f32.mrf.mxu0
    %v560 = vadd.f32 %v363, %v559
    %561 = vmatprep.mubr.f32.mxu0 0.0
    %562 = vmatmul.mubr.f32.gmra.mxu0 %v217
    %v563 = vpop.f32.mrf.mxu0
    %v564 = vadd.f32 %v359, %v563
    %v565 = vpop.f32.mrf.mxu0
    %v566 = vadd.f32 %v363, %v565
    %567 = vmatprep.mubr.f32.mxu0 0.0
    %568 = vmatmul.mubr.f32.gmra.mxu0 %v222
    %v569 = vpop.f32.mrf.mxu0
    %v570 = vadd.f32 %v359, %v569
    %v571 = vpop.f32.mrf.mxu0
    %v572 = vadd.f32 %v363, %v571
    %573 = vmatprep.mubr.f32.mxu0 0.0
    %574 = vmatmul.mubr.f32.gmra.mxu0 %v227
    %v575 = vpop.f32.mrf.mxu0
    %v576 = vadd.f32 %v359, %v575
    %v577 = vpop.f32.mrf.mxu0
    %v578 = vadd.f32 %v363, %v577
    %579 = vmatprep.mubr.f32.mxu0 0.0
    %580 = vmatmul.mubr.f32.gmra.mxu0 %v232
    %v581 = vpop.f32.mrf.mxu0
    %v582 = vadd.f32 %v359, %v581
    %v583 = vpop.f32.mrf.mxu0
    %v584 = vadd.f32 %v363, %v583
    %585 = vmatprep.mubr.f32.mxu0 0.0
    %586 = vmatmul.mubr.f32.gmra.mxu0 %v237
    %v587 = vpop.f32.mrf.mxu0
    %v588 = vadd.f32 %v359, %v587
    %v589 = vpop.f32.mrf.mxu0
    %v590 = vadd.f32 %v363, %v589
    %591 = vmatprep.mubr.f32.mxu0 0.0
    %592 = vmatmul.mubr.f32.gmra.mxu0 %v242
    %v593 = vpop.f32.mrf.mxu0
    %v594 = vadd.f32 %v359, %v593
    %v595 = vpop.f32.mrf.mxu0
    %v596 = vadd.f32 %v363, %v595
    %597 = vmatprep.mubr.f32.mxu0 0.0
    %598 = vmatmul.mubr.f32.gmra.mxu0 %v247
    %v599 = vpop.f32.mrf.mxu0
    %v600 = vadd.f32 %v359, %v599
    %v601 = vpop.f32.mrf.mxu0
    %v602 = vadd.f32 %v363, %v601
    %603 = vdwg.mxu0
    %604 = vmatprep.subr.mxu0 %v345
    %605 = vmatpush1.msra.mxu0 %v344
    %606 = vmatprep.subr.mxu0 %v339
    %607 = vmatpush1.msra.mxu0 %v338
    %608 = vmatprep.subr.mxu0 %v333
    %609 = vmatpush1.msra.mxu0 %v332
    %610 = vmatprep.subr.mxu0 %v327
    %611 = vmatpush1.msra.mxu0 %v326
    %612 = vmatprep.subr.mxu0 %v321
    %613 = vmatpush1.msra.mxu0 %v320
    %614 = vmatprep.subr.mxu0 %v315
    %615 = vmatpush1.msra.mxu0 %v314
    %616 = vmatprep.subr.mxu0 %v309
    %617 = vmatpush1.msra.mxu0 %v308
    %618 = vmatprep.subr.mxu0 %v303
    %619 = vmatpush1.msra.mxu0 %v302
    %620 = vmatprep.subr.mxu0 %v297
    %621 = vmatpush1.msra.mxu0 %v296
    %622 = vmatprep.subr.mxu0 %v291
    %623 = vmatpush1.msra.mxu0 %v290
    %624 = vmatprep.subr.mxu0 %v285
    %625 = vmatpush1.msra.mxu0 %v284
    %626 = vmatprep.subr.mxu0 %v279
    %627 = vmatpush1.msra.mxu0 %v278
    %628 = vmatprep.subr.mxu0 %v273
    %629 = vmatpush1.msra.mxu0 %v272
    %630 = vmatprep.subr.mxu0 %v267
    %631 = vmatpush1.msra.mxu0 %v266
    %632 = vmatprep.subr.mxu0 %v261
    %633 = vmatpush1.msra.mxu0 %v260
    %634 = vmatprep.subr.mxu0 %v255
    %635 = vmatpush1.msra.mxu0 %v254
    %636 = vmatprep.subr.mxu0 0.0
    %637 = vmatpush2.msra.mxu0 0.0
    %638 = vmatprep.subr.mxu0 0.0
    %639 = vmatpush2.msra.mxu0 0.0
    %640 = vmatprep.subr.mxu0 0.0
    %641 = vmatpush2.msra.mxu0 0.0
    %642 = vmatprep.subr.mxu0 0.0
    %643 = vmatpush2.msra.mxu0 0.0
    %644 = vmatprep.subr.mxu0 0.0
    %645 = vmatpush2.msra.mxu0 0.0
    %646 = vmatprep.subr.mxu0 0.0
    %647 = vmatpush2.msra.mxu0 0.0
    %648 = vmatprep.subr.mxu0 0.0
    %649 = vmatpush2.msra.mxu0 0.0
    %650 = vmatprep.subr.mxu0 0.0
    %651 = vmatpush2.msra.mxu0 0.0
    %652 = vmatprep.subr.mxu0 0.0
    %653 = vmatpush2.msra.mxu0 0.0
    %654 = vmatprep.subr.mxu0 0.0
    %655 = vmatpush2.msra.mxu0 0.0
    %656 = vmatprep.subr.mxu0 0.0
    %657 = vmatpush2.msra.mxu0 0.0
    %658 = vmatprep.subr.mxu0 0.0
    %659 = vmatpush2.msra.mxu0 0.0
    %660 = vmatprep.subr.mxu0 0.0
    %661 = vmatpush2.msra.mxu0 0.0
    %662 = vmatprep.subr.mxu0 0.0
    %663 = vmatpush2.msra.mxu0 0.0
    %664 = vmatprep.subr.mxu0 0.0
    %665 = vmatpush2.msra.mxu0 0.0
    %666 = vmatprep.subr.mxu0 0.0
    %667 = vmatpush2.msra.mxu0 0.0
    %668 = vmatprep.mubr.f32.mxu0 0.0
    %669 = vmatmul.mubr.f32.gmra.mxu0 %v212
    %v670 = vpop.f32.mrf.mxu0
    %v671 = vadd.f32 %v367, %v670
    %v672 = vpop.f32.mrf.mxu0
    %v673 = vadd.f32 %v371, %v672
    %674 = vmatprep.mubr.f32.mxu0 0.0
    %675 = vmatmul.mubr.f32.gmra.mxu0 %v217
    %v676 = vpop.f32.mrf.mxu0
    %v677 = vadd.f32 %v367, %v676
    %v678 = vpop.f32.mrf.mxu0
    %v679 = vadd.f32 %v371, %v678
    %680 = vmatprep.mubr.f32.mxu0 0.0
    %681 = vmatmul.mubr.f32.gmra.mxu0 %v222
    %v682 = vpop.f32.mrf.mxu0
    %v683 = vadd.f32 %v367, %v682
    %v684 = vpop.f32.mrf.mxu0
    %v685 = vadd.f32 %v371, %v684
    %686 = vmatprep.mubr.f32.mxu0 0.0
    %687 = vmatmul.mubr.f32.gmra.mxu0 %v227
    %v688 = vpop.f32.mrf.mxu0
    %v689 = vadd.f32 %v367, %v688
    %v690 = vpop.f32.mrf.mxu0
    %v691 = vadd.f32 %v371, %v690
    %692 = vmatprep.mubr.f32.mxu0 0.0
    %693 = vmatmul.mubr.f32.gmra.mxu0 %v232
    %v694 = vpop.f32.mrf.mxu0
    %v695 = vadd.f32 %v367, %v694
    %v696 = vpop.f32.mrf.mxu0
    %v697 = vadd.f32 %v371, %v696
    %698 = vmatprep.mubr.f32.mxu0 0.0
    %699 = vmatmul.mubr.f32.gmra.mxu0 %v237
    %v700 = vpop.f32.mrf.mxu0
    %v701 = vadd.f32 %v367, %v700
    %v702 = vpop.f32.mrf.mxu0
    %v703 = vadd.f32 %v371, %v702
    %704 = vmatprep.mubr.f32.mxu0 0.0
    %705 = vmatmul.mubr.f32.gmra.mxu0 %v242
    %v706 = vpop.f32.mrf.mxu0
    %v707 = vadd.f32 %v367, %v706
    %v708 = vpop.f32.mrf.mxu0
    %v709 = vadd.f32 %v371, %v708
    %710 = vmatprep.mubr.f32.mxu0 0.0
    %711 = vmatmul.mubr.f32.gmra.mxu0 %v247
    %v712 = vpop.f32.mrf.mxu0
    %v713 = vadd.f32 %v367, %v712
    %v714 = vpop.f32.mrf.mxu0
    %v715 = vadd.f32 %v371, %v714
    %716 = vdwg.mxu0
    %717 = vst [vmem:[#allocation2] sm:$0xff] %v445
    %718 = vst [vmem:[#allocation2 + $0x8] sm:$0xff] %v447
    %719 = vst [vmem:[#allocation2 + $0x10] sm:$0xff] %v558
    %720 = vst [vmem:[#allocation2 + $0x18] sm:$0xff] %v560
    %721 = vst [vmem:[#allocation2 + $0x20] sm:$0xff] %v671
    %722 = vst [vmem:[#allocation2 + $0x28] sm:$0xff] %v673
    %723 = vst [vmem:[#allocation2 + $0x30] sm:$0xff] %v451
    %724 = vst [vmem:[#allocation2 + $0x38] sm:$0xff] %v453
    %725 = vst [vmem:[#allocation2 + $0x40] sm:$0xff] %v564
    %726 = vst [vmem:[#allocation2 + $0x48] sm:$0xff] %v566
    %727 = vst [vmem:[#allocation2 + $0x50] sm:$0xff] %v677
    %728 = vst [vmem:[#allocation2 + $0x58] sm:$0xff] %v679
    %729 = vst [vmem:[#allocation2 + $0x60] sm:$0xff] %v457
    %730 = vst [vmem:[#allocation2 + $0x68] sm:$0xff] %v459
    %731 = vst [vmem:[#allocation2 + $0x70] sm:$0xff] %v570
    %732 = vst [vmem:[#allocation2 + $0x78] sm:$0xff] %v572
    %733 = vst [vmem:[#allocation2 + $0x80] sm:$0xff] %v683
    %734 = vst [vmem:[#allocation2 + $0x88] sm:$0xff] %v685
    %735 = vst [vmem:[#allocation2 + $0x90] sm:$0xff] %v463
    %736 = vst [vmem:[#allocation2 + $0x98] sm:$0xff] %v465
    %737 = vst [vmem:[#allocation2 + $0xa0] sm:$0xff] %v576
    %738 = vst [vmem:[#allocation2 + $0xa8] sm:$0xff] %v578
    %739 = vst [vmem:[#allocation2 + $0xb0] sm:$0xff] %v689
    %740 = vst [vmem:[#allocation2 + $0xb8] sm:$0xff] %v691
    %741 = vst [vmem:[#allocation2 + $0xc0] sm:$0xff] %v469
    %742 = vst [vmem:[#allocation2 + $0xc8] sm:$0xff] %v471
    %743 = vst [vmem:[#allocation2 + $0xd0] sm:$0xff] %v582
    %744 = vst [vmem:[#allocation2 + $0xd8] sm:$0xff] %v584
    %745 = vst [vmem:[#allocation2 + $0xe0] sm:$0xff] %v695
    %746 = vst [vmem:[#allocation2 + $0xe8] sm:$0xff] %v697
    %747 = vst [vmem:[#allocation2 + $0xf0] sm:$0xff] %v475
    %748 = vst [vmem:[#allocation2 + $0xf8] sm:$0xff] %v477
    %749 = vst [vmem:[#allocation2 + $0x100] sm:$0xff] %v588
    %750 = vst [vmem:[#allocation2 + $0x108] sm:$0xff] %v590
    %751 = vst [vmem:[#allocation2 + $0x110] sm:$0xff] %v701
    %752 = vst [vmem:[#allocation2 + $0x118] sm:$0xff] %v703
    %753 = vst [vmem:[#allocation2 + $0x120] sm:$0xff] %v481
    %754 = vst [vmem:[#allocation2 + $0x128] sm:$0xff] %v483
    %755 = vst [vmem:[#allocation2 + $0x130] sm:$0xff] %v594
    %756 = vst [vmem:[#allocation2 + $0x138] sm:$0xff] %v596
    %757 = vst [vmem:[#allocation2 + $0x140] sm:$0xff] %v707
    %758 = vst [vmem:[#allocation2 + $0x148] sm:$0xff] %v709
    %759 = vst [vmem:[#allocation2 + $0x150] sm:$0xff] %v487
    %760 = vst [vmem:[#allocation2 + $0x158] sm:$0xff] %v489
    %761 = vst [vmem:[#allocation2 + $0x160] sm:$0xff] %v600
    %762 = vst [vmem:[#allocation2 + $0x168] sm:$0xff] %v602
    %763 = vst [vmem:[#allocation2 + $0x170] sm:$0xff] %v713
    %764 = vst [vmem:[#allocation2 + $0x178] sm:$0xff] %v715
    %v765 = vld [vmem:[%s6] sm:$0x1]
    %v766 = vld [vmem:[%s6 + $0x1] sm:$0x1]
    %v767 = vld [vmem:[%s2] sm:$0xff]
    %v768 = vld [vmem:[%s2 + $0x8] sm:$0xff]
    %v769 = vld [vmem:[#allocation2] sm:$0xff]
    %v770 = vld [vmem:[#allocation2 + $0x8] sm:$0xff]
    %v771 = vld [vmem:[#allocation2 + $0x10] sm:$0xff]
    %v772 = vld [vmem:[#allocation2 + $0x168] sm:$0xff]
    %v773 = vld [vmem:[#allocation2 + $0x170] sm:$0xff]
    %v774 = vld [vmem:[#allocation2 + $0x178] sm:$0xff]
    %v775 = vld [vmem:[#allocation8] sm:$0xff]
    %v776 = vld [vmem:[#allocation8 + $0x8] sm:$0xff]
    %v777 = vld [vmem:[#allocation8 + $0x10] sm:$0xff]
    %v778 = vld [vmem:[#allocation8 + $0x30] sm:$0xff]
    %v779 = vld [vmem:[#allocation8 + $0x38] sm:$0xff]
    %v780 = vld [vmem:[#allocation8 + $0x40] sm:$0xff]
    %v781 = vld [vmem:[#allocation8 + $0x60] sm:$0xff]
    %v782 = vld [vmem:[#allocation8 + $0x68] sm:$0xff]
    %v783 = vld [vmem:[#allocation8 + $0x70] sm:$0xff]
    %v784 = vld [vmem:[#allocation8 + $0x90] sm:$0xff]
    %v785 = vld [vmem:[#allocation8 + $0x98] sm:$0xff]
    %v786 = vld [vmem:[#allocation8 + $0xa0] sm:$0xff]
    %v787 = vld [vmem:[#allocation8 + $0xc0] sm:$0xff]
    %v788 = vld [vmem:[#allocation8 + $0xc8] sm:$0xff]
    %v789 = vld [vmem:[#allocation8 + $0xd0] sm:$0xff]
    %v790 = vld [vmem:[#allocation8 + $0xf0] sm:$0xff]
    %v791 = vld [vmem:[#allocation8 + $0xf8] sm:$0xff]
    %v792 = vld [vmem:[#allocation8 + $0x100] sm:$0xff]
    %v793 = vld [vmem:[#allocation8 + $0x120] sm:$0xff]
    %v794 = vld [vmem:[#allocation8 + $0x128] sm:$0xff]
    %v795 = vld [vmem:[#allocation8 + $0x130] sm:$0xff]
    %v796 = vld [vmem:[#allocation8 + $0x150] sm:$0xff]
    %v797 = vld [vmem:[#allocation8 + $0x158] sm:$0xff]
    %v798 = vld [vmem:[#allocation8 + $0x160] sm:$0xff]
    %v799 = vld [vmem:[#allocation8 + $0x180] sm:$0xff]
    %v800 = vld [vmem:[#allocation8 + $0x188] sm:$0xff]
    %v801 = vld [vmem:[#allocation8 + $0x190] sm:$0xff]
    %v802 = vld [vmem:[#allocation8 + $0x1b0] sm:$0xff]
    %v803 = vld [vmem:[#allocation8 + $0x1b8] sm:$0xff]
    %v804 = vld [vmem:[#allocation8 + $0x1c0] sm:$0xff]
    %v805 = vld [vmem:[#allocation8 + $0x1e0] sm:$0xff]
    %v806 = vld [vmem:[#allocation8 + $0x1e8] sm:$0xff]
    %v807 = vld [vmem:[#allocation8 + $0x1f0] sm:$0xff]
    %v808 = vld [vmem:[#allocation8 + $0x210] sm:$0xff]
    %v809 = vld [vmem:[#allocation8 + $0x218] sm:$0xff]
    %v810 = vld [vmem:[#allocation8 + $0x220] sm:$0xff]
    %v811 = vld [vmem:[#allocation8 + $0x240] sm:$0xff]
    %v812 = vld [vmem:[#allocation8 + $0x248] sm:$0xff]
    %v813 = vld [vmem:[#allocation8 + $0x250] sm:$0xff]
    %v814 = vld [vmem:[#allocation8 + $0x270] sm:$0xff]
    %v815 = vld [vmem:[#allocation8 + $0x278] sm:$0xff]
    %v816 = vld [vmem:[#allocation8 + $0x280] sm:$0xff]
    %v817 = vld [vmem:[#allocation8 + $0x2a0] sm:$0xff]
    %v818 = vld [vmem:[#allocation8 + $0x2a8] sm:$0xff]
    %v819 = vld [vmem:[#allocation8 + $0x2b0] sm:$0xff]
    %v820 = vld [vmem:[#allocation8 + $0x2d0] sm:$0xff]
    %v821 = vld [vmem:[#allocation8 + $0x2d8] sm:$0xff]
    %v822 = vld [vmem:[#allocation8 + $0x2e0] sm:$0xff]
    %823 = vmatprep.subr.mxu0 %v821
    %824 = vmatpush1.msra.mxu0 %v820
    %825 = vmatprep.subr.mxu0 %v818
    %826 = vmatpush1.msra.mxu0 %v817
    %827 = vmatprep.subr.mxu0 %v815
    %828 = vmatpush1.msra.mxu0 %v814
    %829 = vmatprep.subr.mxu0 %v812
    %830 = vmatpush1.msra.mxu0 %v811
    %831 = vmatprep.subr.mxu0 %v809
    %832 = vmatpush1.msra.mxu0 %v808
    %833 = vmatprep.subr.mxu0 %v806
    %834 = vmatpush1.msra.mxu0 %v805
    %835 = vmatprep.subr.mxu0 %v803
    %836 = vmatpush1.msra.mxu0 %v802
    %837 = vmatprep.subr.mxu0 %v800
    %838 = vmatpush1.msra.mxu0 %v799
    %839 = vmatprep.subr.mxu0 %v797
    %840 = vmatpush1.msra.mxu0 %v796
    %841 = vmatprep.subr.mxu0 %v794
    %842 = vmatpush1.msra.mxu0 %v793
    %843 = vmatprep.subr.mxu0 %v791
    %844 = vmatpush1.msra.mxu0 %v790
    %845 = vmatprep.subr.mxu0 %v788
    %846 = vmatpush1.msra.mxu0 %v787
    %847 = vmatprep.subr.mxu0 %v785
    %848 = vmatpush1.msra.mxu0 %v784
    %849 = vmatprep.subr.mxu0 %v782
    %850 = vmatpush1.msra.mxu0 %v781
    %851 = vmatprep.subr.mxu0 %v779
    %852 = vmatpush1.msra.mxu0 %v778
    %853 = vmatprep.subr.mxu0 %v776
    %854 = vmatpush1.msra.mxu0 %v775
    %855 = vmatprep.subr.mxu0 0.0
    %856 = vmatpush2.msra.mxu0 0.0
    %857 = vmatprep.subr.mxu0 0.0
    %858 = vmatpush2.msra.mxu0 0.0
    %859 = vmatprep.subr.mxu0 0.0
    %860 = vmatpush2.msra.mxu0 0.0
    %861 = vmatprep.subr.mxu0 0.0
    %862 = vmatpush2.msra.mxu0 0.0
    %863 = vmatprep.subr.mxu0 0.0
    %864 = vmatpush2.msra.mxu0 0.0
    %865 = vmatprep.subr.mxu0 0.0
    %866 = vmatpush2.msra.mxu0 0.0
    %867 = vmatprep.subr.mxu0 0.0
    %868 = vmatpush2.msra.mxu0 0.0
    %869 = vmatprep.subr.mxu0 0.0
    %870 = vmatpush2.msra.mxu0 0.0
    %871 = vmatprep.subr.mxu0 0.0
    %872 = vmatpush2.msra.mxu0 0.0
    %873 = vmatprep.subr.mxu0 0.0
    %874 = vmatpush2.msra.mxu0 0.0
    %875 = vmatprep.subr.mxu0 0.0
    %876 = vmatpush2.msra.mxu0 0.0
    %877 = vmatprep.subr.mxu0 0.0
    %878 = vmatpush2.msra.mxu0 0.0
    %879 = vmatprep.subr.mxu0 0.0
    %880 = vmatpush2.msra.mxu0 0.0
    %881 = vmatprep.subr.mxu0 0.0
    %882 = vmatpush2.msra.mxu0 0.0
    %883 = vmatprep.subr.mxu0 0.0
    %884 = vmatpush2.msra.mxu0 0.0
    %885 = vmatprep.subr.mxu0 0.0
    %886 = vmatpush2.msra.mxu0 0.0
    %887 = vmatprep.mubr.f32.mxu0 0.0
    %888 = vmatmul.mubr.f32.gmra.mxu0 %v767
    %v889 = vpop.f32.mrf.mxu0
    %v890 = vadd.f32 0.0, %v889
    %v891 = vpop.f32.mrf.mxu0
    %v892 = vadd.f32 0.0, %v891
    %893 = vdwg.mxu0
    %894 = vmatprep.subr.mxu0 0.0
    %895 = vmatpush1.msra.mxu0 %v822
    %896 = vmatprep.subr.mxu0 0.0
    %897 = vmatpush1.msra.mxu0 %v819
    %898 = vmatprep.subr.mxu0 0.0
    %899 = vmatpush1.msra.mxu0 %v816
    %900 = vmatprep.subr.mxu0 0.0
    %901 = vmatpush1.msra.mxu0 %v813
    %902 = vmatprep.subr.mxu0 0.0
    %903 = vmatpush1.msra.mxu0 %v810
    %904 = vmatprep.subr.mxu0 0.0
    %905 = vmatpush1.msra.mxu0 %v807
    %906 = vmatprep.subr.mxu0 0.0
    %907 = vmatpush1.msra.mxu0 %v804
    %908 = vmatprep.subr.mxu0 0.0
    %909 = vmatpush1.msra.mxu0 %v801
    %910 = vmatprep.subr.mxu0 0.0
    %911 = vmatpush1.msra.mxu0 %v798
    %912 = vmatprep.subr.mxu0 0.0
    %913 = vmatpush1.msra.mxu0 %v795
    %914 = vmatprep.subr.mxu0 0.0
    %915 = vmatpush1.msra.mxu0 %v792
    %916 = vmatprep.subr.mxu0 0.0
    %917 = vmatpush1.msra.mxu0 %v789
    %918 = vmatprep.subr.mxu0 0.0
    %919 = vmatpush1.msra.mxu0 %v786
    %920 = vmatprep.subr.mxu0 0.0
    %921 = vmatpush1.msra.mxu0 %v783
    %922 = vmatprep.subr.mxu0 0.0
    %923 = vmatpush1.msra.mxu0 %v780
    %924 = vmatprep.subr.mxu0 0.0
    %925 = vmatpush1.msra.mxu0 %v777
    %926 = vmatprep.subr.mxu0 0.0
    %927 = vmatpush2.msra.mxu0 0.0
    %928 = vmatprep.subr.mxu0 0.0
    %929 = vmatpush2.msra.mxu0 0.0
    %930 = vmatprep.subr.mxu0 0.0
    %931 = vmatpush2.msra.mxu0 0.0
    %932 = vmatprep.subr.mxu0 0.0
    %933 = vmatpush2.msra.mxu0 0.0
    %934 = vmatprep.subr.mxu0 0.0
    %935 = vmatpush2.msra.mxu0 0.0
    %936 = vmatprep.subr.mxu0 0.0
    %937 = vmatpush2.msra.mxu0 0.0
    %938 = vmatprep.subr.mxu0 0.0
    %939 = vmatpush2.msra.mxu0 0.0
    %940 = vmatprep.subr.mxu0 0.0
    %941 = vmatpush2.msra.mxu0 0.0
    %942 = vmatprep.subr.mxu0 0.0
    %943 = vmatpush2.msra.mxu0 0.0
    %944 = vmatprep.subr.mxu0 0.0
    %945 = vmatpush2.msra.mxu0 0.0
    %946 = vmatprep.subr.mxu0 0.0
    %947 = vmatpush2.msra.mxu0 0.0
    %948 = vmatprep.subr.mxu0 0.0
    %949 = vmatpush2.msra.mxu0 0.0
    %950 = vmatprep.subr.mxu0 0.0
    %951 = vmatpush2.msra.mxu0 0.0
    %952 = vmatprep.subr.mxu0 0.0
    %953 = vmatpush2.msra.mxu0 0.0
    %954 = vmatprep.subr.mxu0 0.0
    %955 = vmatpush2.msra.mxu0 0.0
    %956 = vmatprep.subr.mxu0 0.0
    %957 = vmatpush2.msra.mxu0 0.0
    %958 = vmatprep.mubr.f32.mxu0 0.0
    %959 = vmatmul.mubr.f32.gmra.mxu0 %v767
    %v960 = vpop.f32.mrf.mxu0
    %v961 = vadd.f32 0.0, %v960
    %v962 = vpop.f32.mrf.mxu0
    %963 = vdwg.mxu0
    %v964 = vld [vmem:[#allocation8 + $0x18] sm:$0xff]
    %v965 = vld [vmem:[#allocation8 + $0x20] sm:$0xff]
    %v966 = vld [vmem:[#allocation8 + $0x28] sm:$0xff]
    %v967 = vld [vmem:[#allocation8 + $0x48] sm:$0xff]
    %v968 = vld [vmem:[#allocation8 + $0x50] sm:$0xff]
    %v969 = vld [vmem:[#allocation8 + $0x58] sm:$0xff]
    %v970 = vld [vmem:[#allocation8 + $0x78] sm:$0xff]
    %v971 = vld [vmem:[#allocation8 + $0x80] sm:$0xff]
    %v972 = vld [vmem:[#allocation8 + $0x88] sm:$0xff]
    %v973 = vld [vmem:[#allocation8 + $0xa8] sm:$0xff]
    %v974 = vld [vmem:[#allocation8 + $0xb0] sm:$0xff]
    %v975 = vld [vmem:[#allocation8 + $0xb8] sm:$0xff]
    %v976 = vld [vmem:[#allocation8 + $0xd8] sm:$0xff]
    %v977 = vld [vmem:[#allocation8 + $0xe0] sm:$0xff]
    %v978 = vld [vmem:[#allocation8 + $0xe8] sm:$0xff]
    %v979 = vld [vmem:[#allocation8 + $0x108] sm:$0xff]
    %v980 = vld [vmem:[#allocation8 + $0x110] sm:$0xff]
    %v981 = vld [vmem:[#allocation8 + $0x118] sm:$0xff]
    %v982 = vld [vmem:[#allocation8 + $0x138] sm:$0xff]
    %v983 = vld [vmem:[#allocation8 + $0x140] sm:$0xff]
    %v984 = vld [vmem:[#allocation8 + $0x148] sm:$0xff]
    %v985 = vld [vmem:[#allocation8 + $0x168] sm:$0xff]
    %v986 = vld [vmem:[#allocation8 + $0x170] sm:$0xff]
    %v987 = vld [vmem:[#allocation8 + $0x178] sm:$0xff]
    %v988 = vld [vmem:[#allocation8 + $0x198] sm:$0xff]
    %v989 = vld [vmem:[#allocation8 + $0x1a0] sm:$0xff]
    %v990 = vld [vmem:[#allocation8 + $0x1a8] sm:$0xff]
    %v991 = vld [vmem:[#allocation8 + $0x1c8] sm:$0xff]
    %v992 = vld [vmem:[#allocation8 + $0x1d0] sm:$0xff]
    %v993 = vld [vmem:[#allocation8 + $0x1d8] sm:$0xff]
    %v994 = vld [vmem:[#allocation8 + $0x1f8] sm:$0xff]
    %v995 = vld [vmem:[#allocation8 + $0x200] sm:$0xff]
    %v996 = vld [vmem:[#allocation8 + $0x208] sm:$0xff]
    %v997 = vld [vmem:[#allocation8 + $0x228] sm:$0xff]
    %v998 = vld [vmem:[#allocation8 + $0x230] sm:$0xff]
    %v999 = vld [vmem:[#allocation8 + $0x238] sm:$0xff]
    %v1000 = vld [vmem:[#allocation8 + $0x258] sm:$0xff]
    %v1001 = vld [vmem:[#allocation8 + $0x260] sm:$0xff]
    %v1002 = vld [vmem:[#allocation8 + $0x268] sm:$0xff]
    %v1003 = vld [vmem:[#allocation8 + $0x288] sm:$0xff]
    %v1004 = vld [vmem:[#allocation8 + $0x290] sm:$0xff]
    %v1005 = vld [vmem:[#allocation8 + $0x298] sm:$0xff]
    %v1006 = vld [vmem:[#allocation8 + $0x2b8] sm:$0xff]
    %v1007 = vld [vmem:[#allocation8 + $0x2c0] sm:$0xff]
    %v1008 = vld [vmem:[#allocation8 + $0x2c8] sm:$0xff]
    %v1009 = vld [vmem:[#allocation8 + $0x2e8] sm:$0xff]
    %v1010 = vld [vmem:[#allocation8 + $0x2f0] sm:$0xff]
    %v1011 = vld [vmem:[#allocation8 + $0x2f8] sm:$0xff]
    %1012 = vmatprep.subr.mxu0 %v1010
    %1013 = vmatpush1.msra.mxu0 %v1009
    %1014 = vmatprep.subr.mxu0 %v1007
    %1015 = vmatpush1.msra.mxu0 %v1006
    %1016 = vmatprep.subr.mxu0 %v1004
    %1017 = vmatpush1.msra.mxu0 %v1003
    %1018 = vmatprep.subr.mxu0 %v1001
    %1019 = vmatpush1.msra.mxu0 %v1000
    %1020 = vmatprep.subr.mxu0 %v998
    %1021 = vmatpush1.msra.mxu0 %v997
    %1022 = vmatprep.subr.mxu0 %v995
    %1023 = vmatpush1.msra.mxu0 %v994
    %1024 = vmatprep.subr.mxu0 %v992
    %1025 = vmatpush1.msra.mxu0 %v991
    %1026 = vmatprep.subr.mxu0 %v989
    %1027 = vmatpush1.msra.mxu0 %v988
    %1028 = vmatprep.subr.mxu0 %v986
    %1029 = vmatpush1.msra.mxu0 %v985
    %1030 = vmatprep.subr.mxu0 %v983
    %1031 = vmatpush1.msra.mxu0 %v982
    %1032 = vmatprep.subr.mxu0 %v980
    %1033 = vmatpush1.msra.mxu0 %v979
    %1034 = vmatprep.subr.mxu0 %v977
    %1035 = vmatpush1.msra.mxu0 %v976
    %1036 = vmatprep.subr.mxu0 %v974
    %1037 = vmatpush1.msra.mxu0 %v973
    %1038 = vmatprep.subr.mxu0 %v971
    %1039 = vmatpush1.msra.mxu0 %v970
    %1040 = vmatprep.subr.mxu0 %v968
    %1041 = vmatpush1.msra.mxu0 %v967
    %1042 = vmatprep.subr.mxu0 %v965
    %1043 = vmatpush1.msra.mxu0 %v964
    %1044 = vmatprep.subr.mxu0 0.0
    %1045 = vmatpush2.msra.mxu0 0.0
    %1046 = vmatprep.subr.mxu0 0.0
    %1047 = vmatpush2.msra.mxu0 0.0
    %1048 = vmatprep.subr.mxu0 0.0
    %1049 = vmatpush2.msra.mxu0 0.0
    %1050 = vmatprep.subr.mxu0 0.0
    %1051 = vmatpush2.msra.mxu0 0.0
    %1052 = vmatprep.subr.mxu0 0.0
    %1053 = vmatpush2.msra.mxu0 0.0
    %1054 = vmatprep.subr.mxu0 0.0
    %1055 = vmatpush2.msra.mxu0 0.0
    %1056 = vmatprep.subr.mxu0 0.0
    %1057 = vmatpush2.msra.mxu0 0.0
    %1058 = vmatprep.subr.mxu0 0.0
    %1059 = vmatpush2.msra.mxu0 0.0
    %1060 = vmatprep.subr.mxu0 0.0
    %1061 = vmatpush2.msra.mxu0 0.0
    %1062 = vmatprep.subr.mxu0 0.0
    %1063 = vmatpush2.msra.mxu0 0.0
    %1064 = vmatprep.subr.mxu0 0.0
    %1065 = vmatpush2.msra.mxu0 0.0
    %1066 = vmatprep.subr.mxu0 0.0
    %1067 = vmatpush2.msra.mxu0 0.0
    %1068 = vmatprep.subr.mxu0 0.0
    %1069 = vmatpush2.msra.mxu0 0.0
    %1070 = vmatprep.subr.mxu0 0.0
    %1071 = vmatpush2.msra.mxu0 0.0
    %1072 = vmatprep.subr.mxu0 0.0
    %1073 = vmatpush2.msra.mxu0 0.0
    %1074 = vmatprep.subr.mxu0 0.0
    %1075 = vmatpush2.msra.mxu0 0.0
    %1076 = vmatprep.mubr.f32.mxu0 0.0
    %1077 = vmatmul.mubr.f32.gmra.mxu0 %v768
    %v1078 = vpop.f32.mrf.mxu0
    %v1079 = vadd.f32 0.0, %v1078
    %v1080 = vpop.f32.mrf.mxu0
    %v1081 = vadd.f32 0.0, %v1080
    %1082 = vdwg.mxu0
    %1083 = vmatprep.subr.mxu0 0.0
    %1084 = vmatpush1.msra.mxu0 %v1011
    %1085 = vmatprep.subr.mxu0 0.0
    %1086 = vmatpush1.msra.mxu0 %v1008
    %1087 = vmatprep.subr.mxu0 0.0
    %1088 = vmatpush1.msra.mxu0 %v1005
    %1089 = vmatprep.subr.mxu0 0.0
    %1090 = vmatpush1.msra.mxu0 %v1002
    %1091 = vmatprep.subr.mxu0 0.0
    %1092 = vmatpush1.msra.mxu0 %v999
    %1093 = vmatprep.subr.mxu0 0.0
    %1094 = vmatpush1.msra.mxu0 %v996
    %1095 = vmatprep.subr.mxu0 0.0
    %1096 = vmatpush1.msra.mxu0 %v993
    %1097 = vmatprep.subr.mxu0 0.0
    %1098 = vmatpush1.msra.mxu0 %v990
    %1099 = vmatprep.subr.mxu0 0.0
    %1100 = vmatpush1.msra.mxu0 %v987
    %1101 = vmatprep.subr.mxu0 0.0
    %1102 = vmatpush1.msra.mxu0 %v984
    %1103 = vmatprep.subr.mxu0 0.0
    %1104 = vmatpush1.msra.mxu0 %v981
    %1105 = vmatprep.subr.mxu0 0.0
    %1106 = vmatpush1.msra.mxu0 %v978
    %1107 = vmatprep.subr.mxu0 0.0
    %1108 = vmatpush1.msra.mxu0 %v975
    %1109 = vmatprep.subr.mxu0 0.0
    %1110 = vmatpush1.msra.mxu0 %v972
    %1111 = vmatprep.subr.mxu0 0.0
    %1112 = vmatpush1.msra.mxu0 %v969
    %1113 = vmatprep.subr.mxu0 0.0
    %1114 = vmatpush1.msra.mxu0 %v966
    %1115 = vmatprep.subr.mxu0 0.0
    %1116 = vmatpush2.msra.mxu0 0.0
    %1117 = vmatprep.subr.mxu0 0.0
    %1118 = vmatpush2.msra.mxu0 0.0
    %1119 = vmatprep.subr.mxu0 0.0
    %1120 = vmatpush2.msra.mxu0 0.0
    %1121 = vmatprep.subr.mxu0 0.0
    %1122 = vmatpush2.msra.mxu0 0.0
    %1123 = vmatprep.subr.mxu0 0.0
    %1124 = vmatpush2.msra.mxu0 0.0
    %1125 = vmatprep.subr.mxu0 0.0
    %1126 = vmatpush2.msra.mxu0 0.0
    %1127 = vmatprep.subr.mxu0 0.0
    %1128 = vmatpush2.msra.mxu0 0.0
    %1129 = vmatprep.subr.mxu0 0.0
    %1130 = vmatpush2.msra.mxu0 0.0
    %1131 = vmatprep.subr.mxu0 0.0
    %1132 = vmatpush2.msra.mxu0 0.0
    %1133 = vmatprep.subr.mxu0 0.0
    %1134 = vmatpush2.msra.mxu0 0.0
    %1135 = vmatprep.subr.mxu0 0.0
    %1136 = vmatpush2.msra.mxu0 0.0
    %1137 = vmatprep.subr.mxu0 0.0
    %1138 = vmatpush2.msra.mxu0 0.0
    %1139 = vmatprep.subr.mxu0 0.0
    %1140 = vmatpush2.msra.mxu0 0.0
    %1141 = vmatprep.subr.mxu0 0.0
    %1142 = vmatpush2.msra.mxu0 0.0
    %1143 = vmatprep.subr.mxu0 0.0
    %1144 = vmatpush2.msra.mxu0 0.0
    %1145 = vmatprep.subr.mxu0 0.0
    %1146 = vmatpush2.msra.mxu0 0.0
    %1147 = vmatprep.mubr.f32.mxu0 0.0
    %1148 = vmatmul.mubr.f32.gmra.mxu0 %v768
    %v1149 = vpop.f32.mrf.mxu0
    %v1150 = vadd.f32 0.0, %v1149
    %v1151 = vpop.f32.mrf.mxu0
    %1152 = vdwg.mxu0
    %v1153 = vadd.f32 %v769, %v890
    %v1154 = vxor.u32 %v1153, 2147483648
    %v1155 = vmul.f32 %v1154, 1.442695
    %v1156 = vpow.pop %v1155
    %v1157 = vadd.f32 %v1156, 1.0
    %v1158 = vrcp.pop %v1157
    %v1159 = vmul.f32 1.0, %v1158
    %v1160 = vadd.f32 %v770, %v892
    %v1161 = vxor.u32 %v1160, 2147483648
    %v1162 = vmul.f32 %v1161, 1.442695
    %v1163 = vpow.pop %v1162
    %v1164 = vadd.f32 %v1163, 1.0
    %v1165 = vrcp.pop %v1164
    %v1166 = vmul.f32 1.0, %v1165
    %v1168 = vlaneseq
    %v1169 = vshrl.u32 %v1168, 7
    %v1170 = vsub.s32 0, %v1169
    %v1171 = vrot.slane %v765, %v1170
    %v1173 = vadd.f32 %v961, %v1171
    %v1174 = vmul.f32 %v1159, %v1173
    %v1175 = vadd.f32 %v771, %v1174
    %v1176 = vtanh.pop %v1175
    %v1177 = vsub.f32 1.0, %v1166
    %v1178 = vmul.f32 %v1177, %v1176
    %v1179 = vmul.f32 %v1166, %v767
    %v1180 = vadd.f32 %v1178, %v1179
    %v1181 = vadd.f32 %v772, %v1079
    %v1182 = vxor.u32 %v1181, 2147483648
    %v1183 = vmul.f32 %v1182, 1.442695
    %v1184 = vpow.pop %v1183
    %v1185 = vadd.f32 %v1184, 1.0
    %v1186 = vrcp.pop %v1185
    %v1187 = vmul.f32 1.0, %v1186
    %v1188 = vadd.f32 %v773, %v1081
    %v1189 = vxor.u32 %v1188, 2147483648
    %v1190 = vmul.f32 %v1189, 1.442695
    %v1191 = vpow.pop %v1190
    %v1192 = vadd.f32 %v1191, 1.0
    %v1193 = vrcp.pop %v1192
    %v1194 = vmul.f32 1.0, %v1193
    %v1196 = vlaneseq
    %v1197 = vshrl.u32 %v1196, 7
    %v1198 = vsub.s32 0, %v1197
    %v1199 = vrot.slane %v766, %v1198
    %v1201 = vadd.f32 %v1150, %v1199
    %v1202 = vmul.f32 %v1187, %v1201
    %v1203 = vadd.f32 %v774, %v1202
    %v1204 = vtanh.pop %v1203
    %v1205 = vsub.f32 1.0, %v1194
    %v1206 = vmul.f32 %v1205, %v1204
    %v1207 = vmul.f32 %v1194, %v768
    %v1208 = vadd.f32 %v1206, %v1207
    %1209 = vst [vmem:[#allocation9] sm:$0xff] %v1180
    %s1210 = scalar_lea.vmem [#allocation9], 112
    %1211 = vst [vmem:[%s1210 + $0x8] sm:$0xff] %v1208
    %v1212 = vld [vmem:[#allocation2 + $0x30] sm:$0xff]
    %v1213 = vld [vmem:[#allocation2 + $0x38] sm:$0xff]
    %v1214 = vld [vmem:[#allocation2 + $0x40] sm:$0xff]
    %v1215 = vld [vmem:[#allocation2 + $0x138] sm:$0xff]
    %v1216 = vld [vmem:[#allocation2 + $0x140] sm:$0xff]
    %v1217 = vld [vmem:[#allocation2 + $0x148] sm:$0xff]
    %v1218 = vld [vmem:[#allocation8] sm:$0xff]
    %v1219 = vld [vmem:[#allocation8 + $0x8] sm:$0xff]
    %v1220 = vld [vmem:[#allocation8 + $0x10] sm:$0xff]
    %v1221 = vld [vmem:[#allocation8 + $0x30] sm:$0xff]
    %v1222 = vld [vmem:[#allocation8 + $0x38] sm:$0xff]
    %v1223 = vld [vmem:[#allocation8 + $0x40] sm:$0xff]
    %v1224 = vld [vmem:[#allocation8 + $0x60] sm:$0xff]
    %v1225 = vld [vmem:[#allocation8 + $0x68] sm:$0xff]
    %v1226 = vld [vmem:[#allocation8 + $0x70] sm:$0xff]
    %v1227 = vld [vmem:[#allocation8 + $0x90] sm:$0xff]
    %v1228 = vld [vmem:[#allocation8 + $0x98] sm:$0xff]
    %v1229 = vld [vmem:[#allocation8 + $0xa0] sm:$0xff]
    %v1230 = vld [vmem:[#allocation8 + $0xc0] sm:$0xff]
    %v1231 = vld [vmem:[#allocation8 + $0xc8] sm:$0xff]
    %v1232 = vld [vmem:[#allocation8 + $0xd0] sm:$0xff]
    %v1233 = vld [vmem:[#allocation8 + $0xf0] sm:$0xff]
    %v1234 = vld [vmem:[#allocation8 + $0xf8] sm:$0xff]
    %v1235 = vld [vmem:[#allocation8 + $0x100] sm:$0xff]
    %v1236 = vld [vmem:[#allocation8 + $0x120] sm:$0xff]
    %v1237 = vld [vmem:[#allocation8 + $0x128] sm:$0xff]
    %v1238 = vld [vmem:[#allocation8 + $0x130] sm:$0xff]
    %v1239 = vld [vmem:[#allocation8 + $0x150] sm:$0xff]
    %v1240 = vld [vmem:[#allocation8 + $0x158] sm:$0xff]
    %v1241 = vld [vmem:[#allocation8 + $0x160] sm:$0xff]
    %v1242 = vld [vmem:[#allocation8 + $0x180] sm:$0xff]
    %v1243 = vld [vmem:[#allocation8 + $0x188] sm:$0xff]
    %v1244 = vld [vmem:[#allocation8 + $0x190] sm:$0xff]
    %v1245 = vld [vmem:[#allocation8 + $0x1b0] sm:$0xff]
    %v1246 = vld [vmem:[#allocation8 + $0x1b8] sm:$0xff]
    %v1247 = vld [vmem:[#allocation8 + $0x1c0] sm:$0xff]
    %v1248 = vld [vmem:[#allocation8 + $0x1e0] sm:$0xff]
    %v1249 = vld [vmem:[#allocation8 + $0x1e8] sm:$0xff]
    %v1250 = vld [vmem:[#allocation8 + $0x1f0] sm:$0xff]
    %v1251 = vld [vmem:[#allocation8 + $0x210] sm:$0xff]
    %v1252 = vld [vmem:[#allocation8 + $0x218] sm:$0xff]
    %v1253 = vld [vmem:[#allocation8 + $0x220] sm:$0xff]
    %v1254 = vld [vmem:[#allocation8 + $0x240] sm:$0xff]
    %v1255 = vld [vmem:[#allocation8 + $0x248] sm:$0xff]
    %v1256 = vld [vmem:[#allocation8 + $0x250] sm:$0xff]
    %v1257 = vld [vmem:[#allocation8 + $0x270] sm:$0xff]
    %v1258 = vld [vmem:[#allocation8 + $0x278] sm:$0xff]
    %v1259 = vld [vmem:[#allocation8 + $0x280] sm:$0xff]
    %v1260 = vld [vmem:[#allocation8 + $0x2a0] sm:$0xff]
    %v1261 = vld [vmem:[#allocation8 + $0x2a8] sm:$0xff]
    %v1262 = vld [vmem:[#allocation8 + $0x2b0] sm:$0xff]
    %v1263 = vld [vmem:[#allocation8 + $0x2d0] sm:$0xff]
    %v1264 = vld [vmem:[#allocation8 + $0x2d8] sm:$0xff]
    %v1265 = vld [vmem:[#allocation8 + $0x2e0] sm:$0xff]
    %1266 = vmatprep.subr.mxu0 %v1264
    %1267 = vmatpush1.msra.mxu0 %v1263
    %1268 = vmatprep.subr.mxu0 %v1261
    %1269 = vmatpush1.msra.mxu0 %v1260
    %1270 = vmatprep.subr.mxu0 %v1258
    %1271 = vmatpush1.msra.mxu0 %v1257
    %1272 = vmatprep.subr.mxu0 %v1255
    %1273 = vmatpush1.msra.mxu0 %v1254
    %1274 = vmatprep.subr.mxu0 %v1252
    %1275 = vmatpush1.msra.mxu0 %v1251
    %1276 = vmatprep.subr.mxu0 %v1249
    %1277 = vmatpush1.msra.mxu0 %v1248
    %1278 = vmatprep.subr.mxu0 %v1246
    %1279 = vmatpush1.msra.mxu0 %v1245
    %1280 = vmatprep.subr.mxu0 %v1243
    %1281 = vmatpush1.msra.mxu0 %v1242
    %1282 = vmatprep.subr.mxu0 %v1240
    %1283 = vmatpush1.msra.mxu0 %v1239
    %1284 = vmatprep.subr.mxu0 %v1237
    %1285 = vmatpush1.msra.mxu0 %v1236
    %1286 = vmatprep.subr.mxu0 %v1234
    %1287 = vmatpush1.msra.mxu0 %v1233
    %1288 = vmatprep.subr.mxu0 %v1231
    %1289 = vmatpush1.msra.mxu0 %v1230
    %1290 = vmatprep.subr.mxu0 %v1228
    %1291 = vmatpush1.msra.mxu0 %v1227
    %1292 = vmatprep.subr.mxu0 %v1225
    %1293 = vmatpush1.msra.mxu0 %v1224
    %1294 = vmatprep.subr.mxu0 %v1222
    %1295 = vmatpush1.msra.mxu0 %v1221
    %1296 = vmatprep.subr.mxu0 %v1219
    %1297 = vmatpush1.msra.mxu0 %v1218
    %1298 = vmatprep.subr.mxu0 0.0
    %1299 = vmatpush2.msra.mxu0 0.0
    %1300 = vmatprep.subr.mxu0 0.0
    %1301 = vmatpush2.msra.mxu0 0.0
    %1302 = vmatprep.subr.mxu0 0.0
    %1303 = vmatpush2.msra.mxu0 0.0
    %1304 = vmatprep.subr.mxu0 0.0
    %1305 = vmatpush2.msra.mxu0 0.0
    %1306 = vmatprep.subr.mxu0 0.0
    %1307 = vmatpush2.msra.mxu0 0.0
    %1308 = vmatprep.subr.mxu0 0.0
    %1309 = vmatpush2.msra.mxu0 0.0
    %1310 = vmatprep.subr.mxu0 0.0
    %1311 = vmatpush2.msra.mxu0 0.0
    %1312 = vmatprep.subr.mxu0 0.0
    %1313 = vmatpush2.msra.mxu0 0.0
    %1314 = vmatprep.subr.mxu0 0.0
    %1315 = vmatpush2.msra.mxu0 0.0
    %1316 = vmatprep.subr.mxu0 0.0
    %1317 = vmatpush2.msra.mxu0 0.0
    %1318 = vmatprep.subr.mxu0 0.0
    %1319 = vmatpush2.msra.mxu0 0.0
    %1320 = vmatprep.subr.mxu0 0.0
    %1321 = vmatpush2.msra.mxu0 0.0
    %1322 = vmatprep.subr.mxu0 0.0
    %1323 = vmatpush2.msra.mxu0 0.0
    %1324 = vmatprep.subr.mxu0 0.0
    %1325 = vmatpush2.msra.mxu0 0.0
    %1326 = vmatprep.subr.mxu0 0.0
    %1327 = vmatpush2.msra.mxu0 0.0
    %1328 = vmatprep.subr.mxu0 0.0
    %1329 = vmatpush2.msra.mxu0 0.0
    %1330 = vmatprep.mubr.f32.mxu0 0.0
    %1331 = vmatmul.mubr.f32.gmra.mxu0 %v1180
    %v1332 = vpop.f32.mrf.mxu0
    %v1333 = vadd.f32 0.0, %v1332
    %v1334 = vpop.f32.mrf.mxu0
    %v1335 = vadd.f32 0.0, %v1334
    %1336 = vdwg.mxu0
    %1337 = vmatprep.subr.mxu0 0.0
    %1338 = vmatpush1.msra.mxu0 %v1265
    %1339 = vmatprep.subr.mxu0 0.0
    %1340 = vmatpush1.msra.mxu0 %v1262
    %1341 = vmatprep.subr.mxu0 0.0
    %1342 = vmatpush1.msra.mxu0 %v1259
    %1343 = vmatprep.subr.mxu0 0.0
    %1344 = vmatpush1.msra.mxu0 %v1256
    %1345 = vmatprep.subr.mxu0 0.0
    %1346 = vmatpush1.msra.mxu0 %v1253
    %1347 = vmatprep.subr.mxu0 0.0
    %1348 = vmatpush1.msra.mxu0 %v1250
    %1349 = vmatprep.subr.mxu0 0.0
    %1350 = vmatpush1.msra.mxu0 %v1247
    %1351 = vmatprep.subr.mxu0 0.0
    %1352 = vmatpush1.msra.mxu0 %v1244
    %1353 = vmatprep.subr.mxu0 0.0
    %1354 = vmatpush1.msra.mxu0 %v1241
    %1355 = vmatprep.subr.mxu0 0.0
    %1356 = vmatpush1.msra.mxu0 %v1238
    %1357 = vmatprep.subr.mxu0 0.0
    %1358 = vmatpush1.msra.mxu0 %v1235
    %1359 = vmatprep.subr.mxu0 0.0
    %1360 = vmatpush1.msra.mxu0 %v1232
    %1361 = vmatprep.subr.mxu0 0.0
    %1362 = vmatpush1.msra.mxu0 %v1229
    %1363 = vmatprep.subr.mxu0 0.0
    %1364 = vmatpush1.msra.mxu0 %v1226
    %1365 = vmatprep.subr.mxu0 0.0
    %1366 = vmatpush1.msra.mxu0 %v1223
    %1367 = vmatprep.subr.mxu0 0.0
    %1368 = vmatpush1.msra.mxu0 %v1220
    %1369 = vmatprep.subr.mxu0 0.0
    %1370 = vmatpush2.msra.mxu0 0.0
    %1371 = vmatprep.subr.mxu0 0.0
    %1372 = vmatpush2.msra.mxu0 0.0
    %1373 = vmatprep.subr.mxu0 0.0
    %1374 = vmatpush2.msra.mxu0 0.0
    %1375 = vmatprep.subr.mxu0 0.0
    %1376 = vmatpush2.msra.mxu0 0.0
    %1377 = vmatprep.subr.mxu0 0.0
    %1378 = vmatpush2.msra.mxu0 0.0
    %1379 = vmatprep.subr.mxu0 0.0
    %1380 = vmatpush2.msra.mxu0 0.0
    %1381 = vmatprep.subr.mxu0 0.0
    %1382 = vmatpush2.msra.mxu0 0.0
    %1383 = vmatprep.subr.mxu0 0.0
    %1384 = vmatpush2.msra.mxu0 0.0
    %1385 = vmatprep.subr.mxu0 0.0
    %1386 = vmatpush2.msra.mxu0 0.0
    %1387 = vmatprep.subr.mxu0 0.0
    %1388 = vmatpush2.msra.mxu0 0.0
    %1389 = vmatprep.subr.mxu0 0.0
    %1390 = vmatpush2.msra.mxu0 0.0
    %1391 = vmatprep.subr.mxu0 0.0
    %1392 = vmatpush2.msra.mxu0 0.0
    %1393 = vmatprep.subr.mxu0 0.0
    %1394 = vmatpush2.msra.mxu0 0.0
    %1395 = vmatprep.subr.mxu0 0.0
    %1396 = vmatpush2.msra.mxu0 0.0
    %1397 = vmatprep.subr.mxu0 0.0
    %1398 = vmatpush2.msra.mxu0 0.0
    %1399 = vmatprep.subr.mxu0 0.0
    %1400 = vmatpush2.msra.mxu0 0.0
    %1401 = vmatprep.mubr.f32.mxu0 0.0
    %1402 = vmatmul.mubr.f32.gmra.mxu0 %v1180
    %v1403 = vpop.f32.mrf.mxu0
    %v1404 = vadd.f32 0.0, %v1403
    %v1405 = vpop.f32.mrf.mxu0
    %1406 = vdwg.mxu0
    %v1407 = vld [vmem:[#allocation8 + $0x18] sm:$0xff]
    %v1408 = vld [vmem:[#allocation8 + $0x20] sm:$0xff]
    %v1409 = vld [vmem:[#allocation8 + $0x28] sm:$0xff]
    %v1410 = vld [vmem:[#allocation8 + $0x48] sm:$0xff]
    %v1411 = vld [vmem:[#allocation8 + $0x50] sm:$0xff]
    %v1412 = vld [vmem:[#allocation8 + $0x58] sm:$0xff]
    %v1413 = vld [vmem:[#allocation8 + $0x78] sm:$0xff]
    %v1414 = vld [vmem:[#allocation8 + $0x80] sm:$0xff]
    %v1415 = vld [vmem:[#allocation8 + $0x88] sm:$0xff]
    %v1416 = vld [vmem:[#allocation8 + $0xa8] sm:$0xff]
    %v1417 = vld [vmem:[#allocation8 + $0xb0] sm:$0xff]
    %v1418 = vld [vmem:[#allocation8 + $0xb8] sm:$0xff]
    %v1419 = vld [vmem:[#allocation8 + $0xd8] sm:$0xff]
    %v1420 = vld [vmem:[#allocation8 + $0xe0] sm:$0xff]
    %v1421 = vld [vmem:[#allocation8 + $0xe8] sm:$0xff]
    %v1422 = vld [vmem:[#allocation8 + $0x108] sm:$0xff]
    %v1423 = vld [vmem:[#allocation8 + $0x110] sm:$0xff]
    %v1424 = vld [vmem:[#allocation8 + $0x118] sm:$0xff]
    %v1425 = vld [vmem:[#allocation8 + $0x138] sm:$0xff]
    %v1426 = vld [vmem:[#allocation8 + $0x140] sm:$0xff]
    %v1427 = vld [vmem:[#allocation8 + $0x148] sm:$0xff]
    %v1428 = vld [vmem:[#allocation8 + $0x168] sm:$0xff]
    %v1429 = vld [vmem:[#allocation8 + $0x170] sm:$0xff]
    %v1430 = vld [vmem:[#allocation8 + $0x178] sm:$0xff]
    %v1431 = vld [vmem:[#allocation8 + $0x198] sm:$0xff]
    %v1432 = vld [vmem:[#allocation8 + $0x1a0] sm:$0xff]
    %v1433 = vld [vmem:[#allocation8 + $0x1a8] sm:$0xff]
    %v1434 = vld [vmem:[#allocation8 + $0x1c8] sm:$0xff]
    %v1435 = vld [vmem:[#allocation8 + $0x1d0] sm:$0xff]
    %v1436 = vld [vmem:[#allocation8 + $0x1d8] sm:$0xff]
    %v1437 = vld [vmem:[#allocation8 + $0x1f8] sm:$0xff]
    %v1438 = vld [vmem:[#allocation8 + $0x200] sm:$0xff]
    %v1439 = vld [vmem:[#allocation8 + $0x208] sm:$0xff]
    %v1440 = vld [vmem:[#allocation8 + $0x228] sm:$0xff]
    %v1441 = vld [vmem:[#allocation8 + $0x230] sm:$0xff]
    %v1442 = vld [vmem:[#allocation8 + $0x238] sm:$0xff]
    %v1443 = vld [vmem:[#allocation8 + $0x258] sm:$0xff]
    %v1444 = vld [vmem:[#allocation8 + $0x260] sm:$0xff]
    %v1445 = vld [vmem:[#allocation8 + $0x268] sm:$0xff]
    %v1446 = vld [vmem:[#allocation8 + $0x288] sm:$0xff]
    %v1447 = vld [vmem:[#allocation8 + $0x290] sm:$0xff]
    %v1448 = vld [vmem:[#allocation8 + $0x298] sm:$0xff]
    %v1449 = vld [vmem:[#allocation8 + $0x2b8] sm:$0xff]
    %v1450 = vld [vmem:[#allocation8 + $0x2c0] sm:$0xff]
    %v1451 = vld [vmem:[#allocation8 + $0x2c8] sm:$0xff]
    %v1452 = vld [vmem:[#allocation8 + $0x2e8] sm:$0xff]
    %v1453 = vld [vmem:[#allocation8 + $0x2f0] sm:$0xff]
    %v1454 = vld [vmem:[#allocation8 + $0x2f8] sm:$0xff]
    %1455 = vmatprep.subr.mxu0 %v1453
    %1456 = vmatpush1.msra.mxu0 %v1452
    %1457 = vmatprep.subr.mxu0 %v1450
    %1458 = vmatpush1.msra.mxu0 %v1449
    %1459 = vmatprep.subr.mxu0 %v1447
    %1460 = vmatpush1.msra.mxu0 %v1446
    %1461 = vmatprep.subr.mxu0 %v1444
    %1462 = vmatpush1.msra.mxu0 %v1443
    %1463 = vmatprep.subr.mxu0 %v1441
    %1464 = vmatpush1.msra.mxu0 %v1440
    %1465 = vmatprep.subr.mxu0 %v1438
    %1466 = vmatpush1.msra.mxu0 %v1437
    %1467 = vmatprep.subr.mxu0 %v1435
    %1468 = vmatpush1.msra.mxu0 %v1434
    %1469 = vmatprep.subr.mxu0 %v1432
    %1470 = vmatpush1.msra.mxu0 %v1431
    %1471 = vmatprep.subr.mxu0 %v1429
    %1472 = vmatpush1.msra.mxu0 %v1428
    %1473 = vmatprep.subr.mxu0 %v1426
    %1474 = vmatpush1.msra.mxu0 %v1425
    %1475 = vmatprep.subr.mxu0 %v1423
    %1476 = vmatpush1.msra.mxu0 %v1422
    %1477 = vmatprep.subr.mxu0 %v1420
    %1478 = vmatpush1.msra.mxu0 %v1419
    %1479 = vmatprep.subr.mxu0 %v1417
    %1480 = vmatpush1.msra.mxu0 %v1416
    %1481 = vmatprep.subr.mxu0 %v1414
    %1482 = vmatpush1.msra.mxu0 %v1413
    %1483 = vmatprep.subr.mxu0 %v1411
    %1484 = vmatpush1.msra.mxu0 %v1410
    %1485 = vmatprep.subr.mxu0 %v1408
    %1486 = vmatpush1.msra.mxu0 %v1407
    %1487 = vmatprep.subr.mxu0 0.0
    %1488 = vmatpush2.msra.mxu0 0.0
    %1489 = vmatprep.subr.mxu0 0.0
    %1490 = vmatpush2.msra.mxu0 0.0
    %1491 = vmatprep.subr.mxu0 0.0
    %1492 = vmatpush2.msra.mxu0 0.0
    %1493 = vmatprep.subr.mxu0 0.0
    %1494 = vmatpush2.msra.mxu0 0.0
    %1495 = vmatprep.subr.mxu0 0.0
    %1496 = vmatpush2.msra.mxu0 0.0
    %1497 = vmatprep.subr.mxu0 0.0
    %1498 = vmatpush2.msra.mxu0 0.0
    %1499 = vmatprep.subr.mxu0 0.0
    %1500 = vmatpush2.msra.mxu0 0.0
    %1501 = vmatprep.subr.mxu0 0.0
    %1502 = vmatpush2.msra.mxu0 0.0
    %1503 = vmatprep.subr.mxu0 0.0
    %1504 = vmatpush2.msra.mxu0 0.0
    %1505 = vmatprep.subr.mxu0 0.0
    %1506 = vmatpush2.msra.mxu0 0.0
    %1507 = vmatprep.subr.mxu0 0.0
    %1508 = vmatpush2.msra.mxu0 0.0
    %1509 = vmatprep.subr.mxu0 0.0
    %1510 = vmatpush2.msra.mxu0 0.0
    %1511 = vmatprep.subr.mxu0 0.0
    %1512 = vmatpush2.msra.mxu0 0.0
    %1513 = vmatprep.subr.mxu0 0.0
    %1514 = vmatpush2.msra.mxu0 0.0
    %1515 = vmatprep.subr.mxu0 0.0
    %1516 = vmatpush2.msra.mxu0 0.0
    %1517 = vmatprep.subr.mxu0 0.0
    %1518 = vmatpush2.msra.mxu0 0.0
    %1519 = vmatprep.mubr.f32.mxu0 0.0
    %1520 = vmatmul.mubr.f32.gmra.mxu0 %v1208
    %v1521 = vpop.f32.mrf.mxu0
    %v1522 = vadd.f32 0.0, %v1521
    %v1523 = vpop.f32.mrf.mxu0
    %v1524 = vadd.f32 0.0, %v1523
    %1525 = vdwg.mxu0
    %1526 = vmatprep.subr.mxu0 0.0
    %1527 = vmatpush1.msra.mxu0 %v1454
    %1528 = vmatprep.subr.mxu0 0.0
    %1529 = vmatpush1.msra.mxu0 %v1451
    %1530 = vmatprep.subr.mxu0 0.0
    %1531 = vmatpush1.msra.mxu0 %v1448
    %1532 = vmatprep.subr.mxu0 0.0
    %1533 = vmatpush1.msra.mxu0 %v1445
    %1534 = vmatprep.subr.mxu0 0.0
    %1535 = vmatpush1.msra.mxu0 %v1442
    %1536 = vmatprep.subr.mxu0 0.0
    %1537 = vmatpush1.msra.mxu0 %v1439
    %1538 = vmatprep.subr.mxu0 0.0
    %1539 = vmatpush1.msra.mxu0 %v1436
    %1540 = vmatprep.subr.mxu0 0.0
    %1541 = vmatpush1.msra.mxu0 %v1433
    %1542 = vmatprep.subr.mxu0 0.0
    %1543 = vmatpush1.msra.mxu0 %v1430
    %1544 = vmatprep.subr.mxu0 0.0
    %1545 = vmatpush1.msra.mxu0 %v1427
    %1546 = vmatprep.subr.mxu0 0.0
    %1547 = vmatpush1.msra.mxu0 %v1424
    %1548 = vmatprep.subr.mxu0 0.0
    %1549 = vmatpush1.msra.mxu0 %v1421
    %1550 = vmatprep.subr.mxu0 0.0
    %1551 = vmatpush1.msra.mxu0 %v1418
    %1552 = vmatprep.subr.mxu0 0.0
    %1553 = vmatpush1.msra.mxu0 %v1415
    %1554 = vmatprep.subr.mxu0 0.0
    %1555 = vmatpush1.msra.mxu0 %v1412
    %1556 = vmatprep.subr.mxu0 0.0
    %1557 = vmatpush1.msra.mxu0 %v1409
    %1558 = vmatprep.subr.mxu0 0.0
    %1559 = vmatpush2.msra.mxu0 0.0
    %1560 = vmatprep.subr.mxu0 0.0
    %1561 = vmatpush2.msra.mxu0 0.0
    %1562 = vmatprep.subr.mxu0 0.0
    %1563 = vmatpush2.msra.mxu0 0.0
    %1564 = vmatprep.subr.mxu0 0.0
    %1565 = vmatpush2.msra.mxu0 0.0
    %1566 = vmatprep.subr.mxu0 0.0
    %1567 = vmatpush2.msra.mxu0 0.0
    %1568 = vmatprep.subr.mxu0 0.0
    %1569 = vmatpush2.msra.mxu0 0.0
    %1570 = vmatprep.subr.mxu0 0.0
    %1571 = vmatpush2.msra.mxu0 0.0
    %1572 = vmatprep.subr.mxu0 0.0
    %1573 = vmatpush2.msra.mxu0 0.0
    %1574 = vmatprep.subr.mxu0 0.0
    %1575 = vmatpush2.msra.mxu0 0.0
    %1576 = vmatprep.subr.mxu0 0.0
    %1577 = vmatpush2.msra.mxu0 0.0
    %1578 = vmatprep.subr.mxu0 0.0
    %1579 = vmatpush2.msra.mxu0 0.0
    %1580 = vmatprep.subr.mxu0 0.0
    %1581 = vmatpush2.msra.mxu0 0.0
    %1582 = vmatprep.subr.mxu0 0.0
    %1583 = vmatpush2.msra.mxu0 0.0
    %1584 = vmatprep.subr.mxu0 0.0
    %1585 = vmatpush2.msra.mxu0 0.0
    %1586 = vmatprep.subr.mxu0 0.0
    %1587 = vmatpush2.msra.mxu0 0.0
    %1588 = vmatprep.subr.mxu0 0.0
    %1589 = vmatpush2.msra.mxu0 0.0
    %1590 = vmatprep.mubr.f32.mxu0 0.0
    %1591 = vmatmul.mubr.f32.gmra.mxu0 %v1208
    %v1592 = vpop.f32.mrf.mxu0
    %v1593 = vadd.f32 0.0, %v1592
    %v1594 = vpop.f32.mrf.mxu0
    %1595 = vdwg.mxu0
    %v1596 = vadd.f32 %v1212, %v1333
    %v1597 = vxor.u32 %v1596, 2147483648
    %v1598 = vmul.f32 %v1597, 1.442695
    %v1599 = vpow.pop %v1598
    %v1600 = vadd.f32 %v1599, 1.0
    %v1601 = vrcp.pop %v1600
    %v1602 = vmul.f32 1.0, %v1601
    %v1603 = vadd.f32 %v1213, %v1335
    %v1604 = vxor.u32 %v1603, 2147483648
    %v1605 = vmul.f32 %v1604, 1.442695
    %v1606 = vpow.pop %v1605
    %v1607 = vadd.f32 %v1606, 1.0
    %v1608 = vrcp.pop %v1607
    %v1609 = vmul.f32 1.0, %v1608
    %v1610 = vadd.f32 %v1404, %v1171
    %v1611 = vmul.f32 %v1602, %v1610
    %v1612 = vadd.f32 %v1214, %v1611
    %v1613 = vtanh.pop %v1612
    %v1614 = vsub.f32 1.0, %v1609
    %v1615 = vmul.f32 %v1614, %v1613
    %v1616 = vmul.f32 %v1609, %v1180
    %v1617 = vadd.f32 %v1615, %v1616
    %v1618 = vadd.f32 %v1215, %v1522
    %v1619 = vxor.u32 %v1618, 2147483648
    %v1620 = vmul.f32 %v1619, 1.442695
    %v1621 = vpow.pop %v1620
    %v1622 = vadd.f32 %v1621, 1.0
    %v1623 = vrcp.pop %v1622
    %v1624 = vmul.f32 1.0, %v1623
    %v1625 = vadd.f32 %v1216, %v1524
    %v1626 = vxor.u32 %v1625, 2147483648
    %v1627 = vmul.f32 %v1626, 1.442695
    %v1628 = vpow.pop %v1627
    %v1629 = vadd.f32 %v1628, 1.0
    %v1630 = vrcp.pop %v1629
    %v1631 = vmul.f32 1.0, %v1630
    %v1632 = vadd.f32 %v1593, %v1199
    %v1633 = vmul.f32 %v1624, %v1632
    %v1634 = vadd.f32 %v1217, %v1633
    %v1635 = vtanh.pop %v1634
    %v1636 = vsub.f32 1.0, %v1631
    %v1637 = vmul.f32 %v1636, %v1635
    %v1638 = vmul.f32 %v1631, %v1208
    %v1639 = vadd.f32 %v1637, %v1638
    %s1640 = scalar_lea.vmem [#allocation9], 16
    %1641 = vst [vmem:[%s1640] sm:$0xff] %v1617
    %s1642 = scalar_lea.vmem [#allocation9], 96
    %1643 = vst [vmem:[%s1642 + $0x8] sm:$0xff] %v1639
    %v1644 = vld [vmem:[#allocation2 + $0x60] sm:$0xff]
    %v1645 = vld [vmem:[#allocation2 + $0x68] sm:$0xff]
    %v1646 = vld [vmem:[#allocation2 + $0x70] sm:$0xff]
    %v1647 = vld [vmem:[#allocation2 + $0x108] sm:$0xff]
    %v1648 = vld [vmem:[#allocation2 + $0x110] sm:$0xff]
    %v1649 = vld [vmem:[#allocation2 + $0x118] sm:$0xff]
    %v1650 = vld [vmem:[#allocation8] sm:$0xff]
    %v1651 = vld [vmem:[#allocation8 + $0x8] sm:$0xff]
    %v1652 = vld [vmem:[#allocation8 + $0x10] sm:$0xff]
    %v1653 = vld [vmem:[#allocation8 + $0x30] sm:$0xff]
    %v1654 = vld [vmem:[#allocation8 + $0x38] sm:$0xff]
    %v1655 = vld [vmem:[#allocation8 + $0x40] sm:$0xff]
    %v1656 = vld [vmem:[#allocation8 + $0x60] sm:$0xff]
    %v1657 = vld [vmem:[#allocation8 + $0x68] sm:$0xff]
    %v1658 = vld [vmem:[#allocation8 + $0x70] sm:$0xff]
    %v1659 = vld [vmem:[#allocation8 + $0x90] sm:$0xff]
    %v1660 = vld [vmem:[#allocation8 + $0x98] sm:$0xff]
    %v1661 = vld [vmem:[#allocation8 + $0xa0] sm:$0xff]
    %v1662 = vld [vmem:[#allocation8 + $0xc0] sm:$0xff]
    %v1663 = vld [vmem:[#allocation8 + $0xc8] sm:$0xff]
    %v1664 = vld [vmem:[#allocation8 + $0xd0] sm:$0xff]
    %v1665 = vld [vmem:[#allocation8 + $0xf0] sm:$0xff]
    %v1666 = vld [vmem:[#allocation8 + $0xf8] sm:$0xff]
    %v1667 = vld [vmem:[#allocation8 + $0x100] sm:$0xff]
    %v1668 = vld [vmem:[#allocation8 + $0x120] sm:$0xff]
    %v1669 = vld [vmem:[#allocation8 + $0x128] sm:$0xff]
    %v1670 = vld [vmem:[#allocation8 + $0x130] sm:$0xff]
    %v1671 = vld [vmem:[#allocation8 + $0x150] sm:$0xff]
    %v1672 = vld [vmem:[#allocation8 + $0x158] sm:$0xff]
    %v1673 = vld [vmem:[#allocation8 + $0x160] sm:$0xff]
    %v1674 = vld [vmem:[#allocation8 + $0x180] sm:$0xff]
    %v1675 = vld [vmem:[#allocation8 + $0x188] sm:$0xff]
    %v1676 = vld [vmem:[#allocation8 + $0x190] sm:$0xff]
    %v1677 = vld [vmem:[#allocation8 + $0x1b0] sm:$0xff]
    %v1678 = vld [vmem:[#allocation8 + $0x1b8] sm:$0xff]
    %v1679 = vld [vmem:[#allocation8 + $0x1c0] sm:$0xff]
    %v1680 = vld [vmem:[#allocation8 + $0x1e0] sm:$0xff]
    %v1681 = vld [vmem:[#allocation8 + $0x1e8] sm:$0xff]
    %v1682 = vld [vmem:[#allocation8 + $0x1f0] sm:$0xff]
    %v1683 = vld [vmem:[#allocation8 + $0x210] sm:$0xff]
    %v1684 = vld [vmem:[#allocation8 + $0x218] sm:$0xff]
    %v1685 = vld [vmem:[#allocation8 + $0x220] sm:$0xff]
    %v1686 = vld [vmem:[#allocation8 + $0x240] sm:$0xff]
    %v1687 = vld [vmem:[#allocation8 + $0x248] sm:$0xff]
    %v1688 = vld [vmem:[#allocation8 + $0x250] sm:$0xff]
    %v1689 = vld [vmem:[#allocation8 + $0x270] sm:$0xff]
    %v1690 = vld [vmem:[#allocation8 + $0x278] sm:$0xff]
    %v1691 = vld [vmem:[#allocation8 + $0x280] sm:$0xff]
    %v1692 = vld [vmem:[#allocation8 + $0x2a0] sm:$0xff]
    %v1693 = vld [vmem:[#allocation8 + $0x2a8] sm:$0xff]
    %v1694 = vld [vmem:[#allocation8 + $0x2b0] sm:$0xff]
    %v1695 = vld [vmem:[#allocation8 + $0x2d0] sm:$0xff]
    %v1696 = vld [vmem:[#allocation8 + $0x2d8] sm:$0xff]
    %v1697 = vld [vmem:[#allocation8 + $0x2e0] sm:$0xff]
    %1698 = vmatprep.subr.mxu0 %v1696
    %1699 = vmatpush1.msra.mxu0 %v1695
    %1700 = vmatprep.subr.mxu0 %v1693
    %1701 = vmatpush1.msra.mxu0 %v1692
    %1702 = vmatprep.subr.mxu0 %v1690
    %1703 = vmatpush1.msra.mxu0 %v1689
    %1704 = vmatprep.subr.mxu0 %v1687
    %1705 = vmatpush1.msra.mxu0 %v1686
    %1706 = vmatprep.subr.mxu0 %v1684
    %1707 = vmatpush1.msra.mxu0 %v1683
    %1708 = vmatprep.subr.mxu0 %v1681
    %1709 = vmatpush1.msra.mxu0 %v1680
    %1710 = vmatprep.subr.mxu0 %v1678
    %1711 = vmatpush1.msra.mxu0 %v1677
    %1712 = vmatprep.subr.mxu0 %v1675
    %1713 = vmatpush1.msra.mxu0 %v1674
    %1714 = vmatprep.subr.mxu0 %v1672
    %1715 = vmatpush1.msra.mxu0 %v1671
    %1716 = vmatprep.subr.mxu0 %v1669
    %1717 = vmatpush1.msra.mxu0 %v1668
    %1718 = vmatprep.subr.mxu0 %v1666
    %1719 = vmatpush1.msra.mxu0 %v1665
    %1720 = vmatprep.subr.mxu0 %v1663
    %1721 = vmatpush1.msra.mxu0 %v1662
    %1722 = vmatprep.subr.mxu0 %v1660
    %1723 = vmatpush1.msra.mxu0 %v1659
    %1724 = vmatprep.subr.mxu0 %v1657
    %1725 = vmatpush1.msra.mxu0 %v1656
    %1726 = vmatprep.subr.mxu0 %v1654
    %1727 = vmatpush1.msra.mxu0 %v1653
    %1728 = vmatprep.subr.mxu0 %v1651
    %1729 = vmatpush1.msra.mxu0 %v1650
    %1730 = vmatprep.subr.mxu0 0.0
    %1731 = vmatpush2.msra.mxu0 0.0
    %1732 = vmatprep.subr.mxu0 0.0
    %1733 = vmatpush2.msra.mxu0 0.0
    %1734 = vmatprep.subr.mxu0 0.0
    %1735 = vmatpush2.msra.mxu0 0.0
    %1736 = vmatprep.subr.mxu0 0.0
    %1737 = vmatpush2.msra.mxu0 0.0
    %1738 = vmatprep.subr.mxu0 0.0
    %1739 = vmatpush2.msra.mxu0 0.0
    %1740 = vmatprep.subr.mxu0 0.0
    %1741 = vmatpush2.msra.mxu0 0.0
    %1742 = vmatprep.subr.mxu0 0.0
    %1743 = vmatpush2.msra.mxu0 0.0
    %1744 = vmatprep.subr.mxu0 0.0
    %1745 = vmatpush2.msra.mxu0 0.0
    %1746 = vmatprep.subr.mxu0 0.0
    %1747 = vmatpush2.msra.mxu0 0.0
    %1748 = vmatprep.subr.mxu0 0.0
    %1749 = vmatpush2.msra.mxu0 0.0
    %1750 = vmatprep.subr.mxu0 0.0
    %1751 = vmatpush2.msra.mxu0 0.0
    %1752 = vmatprep.subr.mxu0 0.0
    %1753 = vmatpush2.msra.mxu0 0.0
    %1754 = vmatprep.subr.mxu0 0.0
    %1755 = vmatpush2.msra.mxu0 0.0
    %1756 = vmatprep.subr.mxu0 0.0
    %1757 = vmatpush2.msra.mxu0 0.0
    %1758 = vmatprep.subr.mxu0 0.0
    %1759 = vmatpush2.msra.mxu0 0.0
    %1760 = vmatprep.subr.mxu0 0.0
    %1761 = vmatpush2.msra.mxu0 0.0
    %1762 = vmatprep.mubr.f32.mxu0 0.0
    %1763 = vmatmul.mubr.f32.gmra.mxu0 %v1617
    %v1764 = vpop.f32.mrf.mxu0
    %v1765 = vadd.f32 0.0, %v1764
    %v1766 = vpop.f32.mrf.mxu0
    %v1767 = vadd.f32 0.0, %v1766
    %1768 = vdwg.mxu0
    %1769 = vmatprep.subr.mxu0 0.0
    %1770 = vmatpush1.msra.mxu0 %v1697
    %1771 = vmatprep.subr.mxu0 0.0
    %1772 = vmatpush1.msra.mxu0 %v1694
    %1773 = vmatprep.subr.mxu0 0.0
    %1774 = vmatpush1.msra.mxu0 %v1691
    %1775 = vmatprep.subr.mxu0 0.0
    %1776 = vmatpush1.msra.mxu0 %v1688
    %1777 = vmatprep.subr.mxu0 0.0
    %1778 = vmatpush1.msra.mxu0 %v1685
    %1779 = vmatprep.subr.mxu0 0.0
    %1780 = vmatpush1.msra.mxu0 %v1682
    %1781 = vmatprep.subr.mxu0 0.0
    %1782 = vmatpush1.msra.mxu0 %v1679
    %1783 = vmatprep.subr.mxu0 0.0
    %1784 = vmatpush1.msra.mxu0 %v1676
    %1785 = vmatprep.subr.mxu0 0.0
    %1786 = vmatpush1.msra.mxu0 %v1673
    %1787 = vmatprep.subr.mxu0 0.0
    %1788 = vmatpush1.msra.mxu0 %v1670
    %1789 = vmatprep.subr.mxu0 0.0
    %1790 = vmatpush1.msra.mxu0 %v1667
    %1791 = vmatprep.subr.mxu0 0.0
    %1792 = vmatpush1.msra.mxu0 %v1664
    %1793 = vmatprep.subr.mxu0 0.0
    %1794 = vmatpush1.msra.mxu0 %v1661
    %1795 = vmatprep.subr.mxu0 0.0
    %1796 = vmatpush1.msra.mxu0 %v1658
    %1797 = vmatprep.subr.mxu0 0.0
    %1798 = vmatpush1.msra.mxu0 %v1655
    %1799 = vmatprep.subr.mxu0 0.0
    %1800 = vmatpush1.msra.mxu0 %v1652
    %1801 = vmatprep.subr.mxu0 0.0
    %1802 = vmatpush2.msra.mxu0 0.0
    %1803 = vmatprep.subr.mxu0 0.0
    %1804 = vmatpush2.msra.mxu0 0.0
    %1805 = vmatprep.subr.mxu0 0.0
    %1806 = vmatpush2.msra.mxu0 0.0
    %1807 = vmatprep.subr.mxu0 0.0
    %1808 = vmatpush2.msra.mxu0 0.0
    %1809 = vmatprep.subr.mxu0 0.0
    %1810 = vmatpush2.msra.mxu0 0.0
    %1811 = vmatprep.subr.mxu0 0.0
    %1812 = vmatpush2.msra.mxu0 0.0
    %1813 = vmatprep.subr.mxu0 0.0
    %1814 = vmatpush2.msra.mxu0 0.0
    %1815 = vmatprep.subr.mxu0 0.0
    %1816 = vmatpush2.msra.mxu0 0.0
    %1817 = vmatprep.subr.mxu0 0.0
    %1818 = vmatpush2.msra.mxu0 0.0
    %1819 = vmatprep.subr.mxu0 0.0
    %1820 = vmatpush2.msra.mxu0 0.0
    %1821 = vmatprep.subr.mxu0 0.0
    %1822 = vmatpush2.msra.mxu0 0.0
    %1823 = vmatprep.subr.mxu0 0.0
    %1824 = vmatpush2.msra.mxu0 0.0
    %1825 = vmatprep.subr.mxu0 0.0
    %1826 = vmatpush2.msra.mxu0 0.0
    %1827 = vmatprep.subr.mxu0 0.0
    %1828 = vmatpush2.msra.mxu0 0.0
    %1829 = vmatprep.subr.mxu0 0.0
    %1830 = vmatpush2.msra.mxu0 0.0
    %1831 = vmatprep.subr.mxu0 0.0
    %1832 = vmatpush2.msra.mxu0 0.0
    %1833 = vmatprep.mubr.f32.mxu0 0.0
    %1834 = vmatmul.mubr.f32.gmra.mxu0 %v1617
    %v1835 = vpop.f32.mrf.mxu0
    %v1836 = vadd.f32 0.0, %v1835
    %v1837 = vpop.f32.mrf.mxu0
    %1838 = vdwg.mxu0
    %v1839 = vld [vmem:[#allocation8 + $0x18] sm:$0xff]
    %v1840 = vld [vmem:[#allocation8 + $0x20] sm:$0xff]
    %v1841 = vld [vmem:[#allocation8 + $0x28] sm:$0xff]
    %v1842 = vld [vmem:[#allocation8 + $0x48] sm:$0xff]
    %v1843 = vld [vmem:[#allocation8 + $0x50] sm:$0xff]
    %v1844 = vld [vmem:[#allocation8 + $0x58] sm:$0xff]
    %v1845 = vld [vmem:[#allocation8 + $0x78] sm:$0xff]
    %v1846 = vld [vmem:[#allocation8 + $0x80] sm:$0xff]
    %v1847 = vld [vmem:[#allocation8 + $0x88] sm:$0xff]
    %v1848 = vld [vmem:[#allocation8 + $0xa8] sm:$0xff]
    %v1849 = vld [vmem:[#allocation8 + $0xb0] sm:$0xff]
    %v1850 = vld [vmem:[#allocation8 + $0xb8] sm:$0xff]
    %v1851 = vld [vmem:[#allocation8 + $0xd8] sm:$0xff]
    %v1852 = vld [vmem:[#allocation8 + $0xe0] sm:$0xff]
    %v1853 = vld [vmem:[#allocation8 + $0xe8] sm:$0xff]
    %v1854 = vld [vmem:[#allocation8 + $0x108] sm:$0xff]
    %v1855 = vld [vmem:[#allocation8 + $0x110] sm:$0xff]
    %v1856 = vld [vmem:[#allocation8 + $0x118] sm:$0xff]
    %v1857 = vld [vmem:[#allocation8 + $0x138] sm:$0xff]
    %v1858 = vld [vmem:[#allocation8 + $0x140] sm:$0xff]
    %v1859 = vld [vmem:[#allocation8 + $0x148] sm:$0xff]
    %v1860 = vld [vmem:[#allocation8 + $0x168] sm:$0xff]
    %v1861 = vld [vmem:[#allocation8 + $0x170] sm:$0xff]
    %v1862 = vld [vmem:[#allocation8 + $0x178] sm:$0xff]
    %v1863 = vld [vmem:[#allocation8 + $0x198] sm:$0xff]
    %v1864 = vld [vmem:[#allocation8 + $0x1a0] sm:$0xff]
    %v1865 = vld [vmem:[#allocation8 + $0x1a8] sm:$0xff]
    %v1866 = vld [vmem:[#allocation8 + $0x1c8] sm:$0xff]
    %v1867 = vld [vmem:[#allocation8 + $0x1d0] sm:$0xff]
    %v1868 = vld [vmem:[#allocation8 + $0x1d8] sm:$0xff]
    %v1869 = vld [vmem:[#allocation8 + $0x1f8] sm:$0xff]
    %v1870 = vld [vmem:[#allocation8 + $0x200] sm:$0xff]
    %v1871 = vld [vmem:[#allocation8 + $0x208] sm:$0xff]
    %v1872 = vld [vmem:[#allocation8 + $0x228] sm:$0xff]
    %v1873 = vld [vmem:[#allocation8 + $0x230] sm:$0xff]
    %v1874 = vld [vmem:[#allocation8 + $0x238] sm:$0xff]
    %v1875 = vld [vmem:[#allocation8 + $0x258] sm:$0xff]
    %v1876 = vld [vmem:[#allocation8 + $0x260] sm:$0xff]
    %v1877 = vld [vmem:[#allocation8 + $0x268] sm:$0xff]
    %v1878 = vld [vmem:[#allocation8 + $0x288] sm:$0xff]
    %v1879 = vld [vmem:[#allocation8 + $0x290] sm:$0xff]
    %v1880 = vld [vmem:[#allocation8 + $0x298] sm:$0xff]
    %v1881 = vld [vmem:[#allocation8 + $0x2b8] sm:$0xff]
    %v1882 = vld [vmem:[#allocation8 + $0x2c0] sm:$0xff]
    %v1883 = vld [vmem:[#allocation8 + $0x2c8] sm:$0xff]
    %v1884 = vld [vmem:[#allocation8 + $0x2e8] sm:$0xff]
    %v1885 = vld [vmem:[#allocation8 + $0x2f0] sm:$0xff]
    %v1886 = vld [vmem:[#allocation8 + $0x2f8] sm:$0xff]
    %1887 = vmatprep.subr.mxu0 %v1885
    %1888 = vmatpush1.msra.mxu0 %v1884
    %1889 = vmatprep.subr.mxu0 %v1882
    %1890 = vmatpush1.msra.mxu0 %v1881
    %1891 = vmatprep.subr.mxu0 %v1879
    %1892 = vmatpush1.msra.mxu0 %v1878
    %1893 = vmatprep.subr.mxu0 %v1876
    %1894 = vmatpush1.msra.mxu0 %v1875
    %1895 = vmatprep.subr.mxu0 %v1873
    %1896 = vmatpush1.msra.mxu0 %v1872
    %1897 = vmatprep.subr.mxu0 %v1870
    %1898 = vmatpush1.msra.mxu0 %v1869
    %1899 = vmatprep.subr.mxu0 %v1867
    %1900 = vmatpush1.msra.mxu0 %v1866
    %1901 = vmatprep.subr.mxu0 %v1864
    %1902 = vmatpush1.msra.mxu0 %v1863
    %1903 = vmatprep.subr.mxu0 %v1861
    %1904 = vmatpush1.msra.mxu0 %v1860
    %1905 = vmatprep.subr.mxu0 %v1858
    %1906 = vmatpush1.msra.mxu0 %v1857
    %1907 = vmatprep.subr.mxu0 %v1855
    %1908 = vmatpush1.msra.mxu0 %v1854
    %1909 = vmatprep.subr.mxu0 %v1852
    %1910 = vmatpush1.msra.mxu0 %v1851
    %1911 = vmatprep.subr.mxu0 %v1849
    %1912 = vmatpush1.msra.mxu0 %v1848
    %1913 = vmatprep.subr.mxu0 %v1846
    %1914 = vmatpush1.msra.mxu0 %v1845
    %1915 = vmatprep.subr.mxu0 %v1843
    %1916 = vmatpush1.msra.mxu0 %v1842
    %1917 = vmatprep.subr.mxu0 %v1840
    %1918 = vmatpush1.msra.mxu0 %v1839
    %1919 = vmatprep.subr.mxu0 0.0
    %1920 = vmatpush2.msra.mxu0 0.0
    %1921 = vmatprep.subr.mxu0 0.0
    %1922 = vmatpush2.msra.mxu0 0.0
    %1923 = vmatprep.subr.mxu0 0.0
    %1924 = vmatpush2.msra.mxu0 0.0
    %1925 = vmatprep.subr.mxu0 0.0
    %1926 = vmatpush2.msra.mxu0 0.0
    %1927 = vmatprep.subr.mxu0 0.0
    %1928 = vmatpush2.msra.mxu0 0.0
    %1929 = vmatprep.subr.mxu0 0.0
    %1930 = vmatpush2.msra.mxu0 0.0
    %1931 = vmatprep.subr.mxu0 0.0
    %1932 = vmatpush2.msra.mxu0 0.0
    %1933 = vmatprep.subr.mxu0 0.0
    %1934 = vmatpush2.msra.mxu0 0.0
    %1935 = vmatprep.subr.mxu0 0.0
    %1936 = vmatpush2.msra.mxu0 0.0
    %1937 = vmatprep.subr.mxu0 0.0
    %1938 = vmatpush2.msra.mxu0 0.0
    %1939 = vmatprep.subr.mxu0 0.0
    %1940 = vmatpush2.msra.mxu0 0.0
    %1941 = vmatprep.subr.mxu0 0.0
    %1942 = vmatpush2.msra.mxu0 0.0
    %1943 = vmatprep.subr.mxu0 0.0
    %1944 = vmatpush2.msra.mxu0 0.0
    %1945 = vmatprep.subr.mxu0 0.0
    %1946 = vmatpush2.msra.mxu0 0.0
    %1947 = vmatprep.subr.mxu0 0.0
    %1948 = vmatpush2.msra.mxu0 0.0
    %1949 = vmatprep.subr.mxu0 0.0
    %1950 = vmatpush2.msra.mxu0 0.0
    %1951 = vmatprep.mubr.f32.mxu0 0.0
    %1952 = vmatmul.mubr.f32.gmra.mxu0 %v1639
    %v1953 = vpop.f32.mrf.mxu0
    %v1954 = vadd.f32 0.0, %v1953
    %v1955 = vpop.f32.mrf.mxu0
    %v1956 = vadd.f32 0.0, %v1955
    %1957 = vdwg.mxu0
    %1958 = vmatprep.subr.mxu0 0.0
    %1959 = vmatpush1.msra.mxu0 %v1886
    %1960 = vmatprep.subr.mxu0 0.0
    %1961 = vmatpush1.msra.mxu0 %v1883
    %1962 = vmatprep.subr.mxu0 0.0
    %1963 = vmatpush1.msra.mxu0 %v1880
    %1964 = vmatprep.subr.mxu0 0.0
    %1965 = vmatpush1.msra.mxu0 %v1877
    %1966 = vmatprep.subr.mxu0 0.0
    %1967 = vmatpush1.msra.mxu0 %v1874
    %1968 = vmatprep.subr.mxu0 0.0
    %1969 = vmatpush1.msra.mxu0 %v1871
    %1970 = vmatprep.subr.mxu0 0.0
    %1971 = vmatpush1.msra.mxu0 %v1868
    %1972 = vmatprep.subr.mxu0 0.0
    %1973 = vmatpush1.msra.mxu0 %v1865
    %1974 = vmatprep.subr.mxu0 0.0
    %1975 = vmatpush1.msra.mxu0 %v1862
    %1976 = vmatprep.subr.mxu0 0.0
    %1977 = vmatpush1.msra.mxu0 %v1859
    %1978 = vmatprep.subr.mxu0 0.0
    %1979 = vmatpush1.msra.mxu0 %v1856
    %1980 = vmatprep.subr.mxu0 0.0
    %1981 = vmatpush1.msra.mxu0 %v1853
    %1982 = vmatprep.subr.mxu0 0.0
    %1983 = vmatpush1.msra.mxu0 %v1850
    %1984 = vmatprep.subr.mxu0 0.0
    %1985 = vmatpush1.msra.mxu0 %v1847
    %1986 = vmatprep.subr.mxu0 0.0
    %1987 = vmatpush1.msra.mxu0 %v1844
    %1988 = vmatprep.subr.mxu0 0.0
    %1989 = vmatpush1.msra.mxu0 %v1841
    %1990 = vmatprep.subr.mxu0 0.0
    %1991 = vmatpush2.msra.mxu0 0.0
    %1992 = vmatprep.subr.mxu0 0.0
    %1993 = vmatpush2.msra.mxu0 0.0
    %1994 = vmatprep.subr.mxu0 0.0
    %1995 = vmatpush2.msra.mxu0 0.0
    %1996 = vmatprep.subr.mxu0 0.0
    %1997 = vmatpush2.msra.mxu0 0.0
    %1998 = vmatprep.subr.mxu0 0.0
    %1999 = vmatpush2.msra.mxu0 0.0
    %2000 = vmatprep.subr.mxu0 0.0
    %2001 = vmatpush2.msra.mxu0 0.0
    %2002 = vmatprep.subr.mxu0 0.0
    %2003 = vmatpush2.msra.mxu0 0.0
    %2004 = vmatprep.subr.mxu0 0.0
    %2005 = vmatpush2.msra.mxu0 0.0
    %2006 = vmatprep.subr.mxu0 0.0
    %2007 = vmatpush2.msra.mxu0 0.0
    %2008 = vmatprep.subr.mxu0 0.0
    %2009 = vmatpush2.msra.mxu0 0.0
    %2010 = vmatprep.subr.mxu0 0.0
    %2011 = vmatpush2.msra.mxu0 0.0
    %2012 = vmatprep.subr.mxu0 0.0
    %2013 = vmatpush2.msra.mxu0 0.0
    %2014 = vmatprep.subr.mxu0 0.0
    %2015 = vmatpush2.msra.mxu0 0.0
    %2016 = vmatprep.subr.mxu0 0.0
    %2017 = vmatpush2.msra.mxu0 0.0
    %2018 = vmatprep.subr.mxu0 0.0
    %2019 = vmatpush2.msra.mxu0 0.0
    %2020 = vmatprep.subr.mxu0 0.0
    %2021 = vmatpush2.msra.mxu0 0.0
    %2022 = vmatprep.mubr.f32.mxu0 0.0
    %2023 = vmatmul.mubr.f32.gmra.mxu0 %v1639
    %v2024 = vpop.f32.mrf.mxu0
    %v2025 = vadd.f32 0.0, %v2024
    %v2026 = vpop.f32.mrf.mxu0
    %2027 = vdwg.mxu0
    %v2028 = vadd.f32 %v1644, %v1765
    %v2029 = vxor.u32 %v2028, 2147483648
    %v2030 = vmul.f32 %v2029, 1.442695
    %v2031 = vpow.pop %v2030
    %v2032 = vadd.f32 %v2031, 1.0
    %v2033 = vrcp.pop %v2032
    %v2034 = vmul.f32 1.0, %v2033
    %v2035 = vadd.f32 %v1645, %v1767
    %v2036 = vxor.u32 %v2035, 2147483648
    %v2037 = vmul.f32 %v2036, 1.442695
    %v2038 = vpow.pop %v2037
    %v2039 = vadd.f32 %v2038, 1.0
    %v2040 = vrcp.pop %v2039
    %v2041 = vmul.f32 1.0, %v2040
    %v2042 = vadd.f32 %v1836, %v1171
    %v2043 = vmul.f32 %v2034, %v2042
    %v2044 = vadd.f32 %v1646, %v2043
    %v2045 = vtanh.pop %v2044
    %v2046 = vsub.f32 1.0, %v2041
    %v2047 = vmul.f32 %v2046, %v2045
    %v2048 = vmul.f32 %v2041, %v1617
    %v2049 = vadd.f32 %v2047, %v2048
    %v2050 = vadd.f32 %v1647, %v1954
    %v2051 = vxor.u32 %v2050, 2147483648
    %v2052 = vmul.f32 %v2051, 1.442695
    %v2053 = vpow.pop %v2052
    %v2054 = vadd.f32 %v2053, 1.0
    %v2055 = vrcp.pop %v2054
    %v2056 = vmul.f32 1.0, %v2055
    %v2057 = vadd.f32 %v1648, %v1956
    %v2058 = vxor.u32 %v2057, 2147483648
    %v2059 = vmul.f32 %v2058, 1.442695
    %v2060 = vpow.pop %v2059
    %v2061 = vadd.f32 %v2060, 1.0
    %v2062 = vrcp.pop %v2061
    %v2063 = vmul.f32 1.0, %v2062
    %v2064 = vadd.f32 %v2025, %v1199
    %v2065 = vmul.f32 %v2056, %v2064
    %v2066 = vadd.f32 %v1649, %v2065
    %v2067 = vtanh.pop %v2066
    %v2068 = vsub.f32 1.0, %v2063
    %v2069 = vmul.f32 %v2068, %v2067
    %v2070 = vmul.f32 %v2063, %v1639
    %v2071 = vadd.f32 %v2069, %v2070
    %s2072 = scalar_lea.vmem [#allocation9], 32
    %2073 = vst [vmem:[%s2072] sm:$0xff] %v2049
    %s2074 = scalar_lea.vmem [#allocation9], 80
    %2075 = vst [vmem:[%s2074 + $0x8] sm:$0xff] %v2071
    %v2076 = vld [vmem:[#allocation2 + $0x90] sm:$0xff]
    %v2077 = vld [vmem:[#allocation2 + $0x98] sm:$0xff]
    %v2078 = vld [vmem:[#allocation2 + $0xa0] sm:$0xff]
    %v2079 = vld [vmem:[#allocation2 + $0xd8] sm:$0xff]
    %v2080 = vld [vmem:[#allocation2 + $0xe0] sm:$0xff]
    %v2081 = vld [vmem:[#allocation2 + $0xe8] sm:$0xff]
    %v2082 = vld [vmem:[#allocation8] sm:$0xff]
    %v2083 = vld [vmem:[#allocation8 + $0x8] sm:$0xff]
    %v2084 = vld [vmem:[#allocation8 + $0x10] sm:$0xff]
    %v2085 = vld [vmem:[#allocation8 + $0x30] sm:$0xff]
    %v2086 = vld [vmem:[#allocation8 + $0x38] sm:$0xff]
    %v2087 = vld [vmem:[#allocation8 + $0x40] sm:$0xff]
    %v2088 = vld [vmem:[#allocation8 + $0x60] sm:$0xff]
    %v2089 = vld [vmem:[#allocation8 + $0x68] sm:$0xff]
    %v2090 = vld [vmem:[#allocation8 + $0x70] sm:$0xff]
    %v2091 = vld [vmem:[#allocation8 + $0x90] sm:$0xff]
    %v2092 = vld [vmem:[#allocation8 + $0x98] sm:$0xff]
    %v2093 = vld [vmem:[#allocation8 + $0xa0] sm:$0xff]
    %v2094 = vld [vmem:[#allocation8 + $0xc0] sm:$0xff]
    %v2095 = vld [vmem:[#allocation8 + $0xc8] sm:$0xff]
    %v2096 = vld [vmem:[#allocation8 + $0xd0] sm:$0xff]
    %v2097 = vld [vmem:[#allocation8 + $0xf0] sm:$0xff]
    %v2098 = vld [vmem:[#allocation8 + $0xf8] sm:$0xff]
    %v2099 = vld [vmem:[#allocation8 + $0x100] sm:$0xff]
    %v2100 = vld [vmem:[#allocation8 + $0x120] sm:$0xff]
    %v2101 = vld [vmem:[#allocation8 + $0x128] sm:$0xff]
    %v2102 = vld [vmem:[#allocation8 + $0x130] sm:$0xff]
    %v2103 = vld [vmem:[#allocation8 + $0x150] sm:$0xff]
    %v2104 = vld [vmem:[#allocation8 + $0x158] sm:$0xff]
    %v2105 = vld [vmem:[#allocation8 + $0x160] sm:$0xff]
    %v2106 = vld [vmem:[#allocation8 + $0x180] sm:$0xff]
    %v2107 = vld [vmem:[#allocation8 + $0x188] sm:$0xff]
    %v2108 = vld [vmem:[#allocation8 + $0x190] sm:$0xff]
    %v2109 = vld [vmem:[#allocation8 + $0x1b0] sm:$0xff]
    %v2110 = vld [vmem:[#allocation8 + $0x1b8] sm:$0xff]
    %v2111 = vld [vmem:[#allocation8 + $0x1c0] sm:$0xff]
    %v2112 = vld [vmem:[#allocation8 + $0x1e0] sm:$0xff]
    %v2113 = vld [vmem:[#allocation8 + $0x1e8] sm:$0xff]
    %v2114 = vld [vmem:[#allocation8 + $0x1f0] sm:$0xff]
    %v2115 = vld [vmem:[#allocation8 + $0x210] sm:$0xff]
    %v2116 = vld [vmem:[#allocation8 + $0x218] sm:$0xff]
    %v2117 = vld [vmem:[#allocation8 + $0x220] sm:$0xff]
    %v2118 = vld [vmem:[#allocation8 + $0x240] sm:$0xff]
    %v2119 = vld [vmem:[#allocation8 + $0x248] sm:$0xff]
    %v2120 = vld [vmem:[#allocation8 + $0x250] sm:$0xff]
    %v2121 = vld [vmem:[#allocation8 + $0x270] sm:$0xff]
    %v2122 = vld [vmem:[#allocation8 + $0x278] sm:$0xff]
    %v2123 = vld [vmem:[#allocation8 + $0x280] sm:$0xff]
    %v2124 = vld [vmem:[#allocation8 + $0x2a0] sm:$0xff]
    %v2125 = vld [vmem:[#allocation8 + $0x2a8] sm:$0xff]
    %v2126 = vld [vmem:[#allocation8 + $0x2b0] sm:$0xff]
    %v2127 = vld [vmem:[#allocation8 + $0x2d0] sm:$0xff]
    %v2128 = vld [vmem:[#allocation8 + $0x2d8] sm:$0xff]
    %v2129 = vld [vmem:[#allocation8 + $0x2e0] sm:$0xff]
    %2130 = vmatprep.subr.mxu0 %v2128
    %2131 = vmatpush1.msra.mxu0 %v2127
    %2132 = vmatprep.subr.mxu0 %v2125
    %2133 = vmatpush1.msra.mxu0 %v2124
    %2134 = vmatprep.subr.mxu0 %v2122
    %2135 = vmatpush1.msra.mxu0 %v2121
    %2136 = vmatprep.subr.mxu0 %v2119
    %2137 = vmatpush1.msra.mxu0 %v2118
    %2138 = vmatprep.subr.mxu0 %v2116
    %2139 = vmatpush1.msra.mxu0 %v2115
    %2140 = vmatprep.subr.mxu0 %v2113
    %2141 = vmatpush1.msra.mxu0 %v2112
    %2142 = vmatprep.subr.mxu0 %v2110
    %2143 = vmatpush1.msra.mxu0 %v2109
    %2144 = vmatprep.subr.mxu0 %v2107
    %2145 = vmatpush1.msra.mxu0 %v2106
    %2146 = vmatprep.subr.mxu0 %v2104
    %2147 = vmatpush1.msra.mxu0 %v2103
    %2148 = vmatprep.subr.mxu0 %v2101
    %2149 = vmatpush1.msra.mxu0 %v2100
    %2150 = vmatprep.subr.mxu0 %v2098
    %2151 = vmatpush1.msra.mxu0 %v2097
    %2152 = vmatprep.subr.mxu0 %v2095
    %2153 = vmatpush1.msra.mxu0 %v2094
    %2154 = vmatprep.subr.mxu0 %v2092
    %2155 = vmatpush1.msra.mxu0 %v2091
    %2156 = vmatprep.subr.mxu0 %v2089
    %2157 = vmatpush1.msra.mxu0 %v2088
    %2158 = vmatprep.subr.mxu0 %v2086
    %2159 = vmatpush1.msra.mxu0 %v2085
    %2160 = vmatprep.subr.mxu0 %v2083
    %2161 = vmatpush1.msra.mxu0 %v2082
    %2162 = vmatprep.subr.mxu0 0.0
    %2163 = vmatpush2.msra.mxu0 0.0
    %2164 = vmatprep.subr.mxu0 0.0
    %2165 = vmatpush2.msra.mxu0 0.0
    %2166 = vmatprep.subr.mxu0 0.0
    %2167 = vmatpush2.msra.mxu0 0.0
    %2168 = vmatprep.subr.mxu0 0.0
    %2169 = vmatpush2.msra.mxu0 0.0
    %2170 = vmatprep.subr.mxu0 0.0
    %2171 = vmatpush2.msra.mxu0 0.0
    %2172 = vmatprep.subr.mxu0 0.0
    %2173 = vmatpush2.msra.mxu0 0.0
    %2174 = vmatprep.subr.mxu0 0.0
    %2175 = vmatpush2.msra.mxu0 0.0
    %2176 = vmatprep.subr.mxu0 0.0
    %2177 = vmatpush2.msra.mxu0 0.0
    %2178 = vmatprep.subr.mxu0 0.0
    %2179 = vmatpush2.msra.mxu0 0.0
    %2180 = vmatprep.subr.mxu0 0.0
    %2181 = vmatpush2.msra.mxu0 0.0
    %2182 = vmatprep.subr.mxu0 0.0
    %2183 = vmatpush2.msra.mxu0 0.0
    %2184 = vmatprep.subr.mxu0 0.0
    %2185 = vmatpush2.msra.mxu0 0.0
    %2186 = vmatprep.subr.mxu0 0.0
    %2187 = vmatpush2.msra.mxu0 0.0
    %2188 = vmatprep.subr.mxu0 0.0
    %2189 = vmatpush2.msra.mxu0 0.0
    %2190 = vmatprep.subr.mxu0 0.0
    %2191 = vmatpush2.msra.mxu0 0.0
    %2192 = vmatprep.subr.mxu0 0.0
    %2193 = vmatpush2.msra.mxu0 0.0
    %2194 = vmatprep.mubr.f32.mxu0 0.0
    %2195 = vmatmul.mubr.f32.gmra.mxu0 %v2049
    %v2196 = vpop.f32.mrf.mxu0
    %v2197 = vadd.f32 0.0, %v2196
    %v2198 = vpop.f32.mrf.mxu0
    %v2199 = vadd.f32 0.0, %v2198
    %2200 = vdwg.mxu0
    %2201 = vmatprep.subr.mxu0 0.0
    %2202 = vmatpush1.msra.mxu0 %v2129
    %2203 = vmatprep.subr.mxu0 0.0
    %2204 = vmatpush1.msra.mxu0 %v2126
    %2205 = vmatprep.subr.mxu0 0.0
    %2206 = vmatpush1.msra.mxu0 %v2123
    %2207 = vmatprep.subr.mxu0 0.0
    %2208 = vmatpush1.msra.mxu0 %v2120
    %2209 = vmatprep.subr.mxu0 0.0
    %2210 = vmatpush1.msra.mxu0 %v2117
    %2211 = vmatprep.subr.mxu0 0.0
    %2212 = vmatpush1.msra.mxu0 %v2114
    %2213 = vmatprep.subr.mxu0 0.0
    %2214 = vmatpush1.msra.mxu0 %v2111
    %2215 = vmatprep.subr.mxu0 0.0
    %2216 = vmatpush1.msra.mxu0 %v2108
    %2217 = vmatprep.subr.mxu0 0.0
    %2218 = vmatpush1.msra.mxu0 %v2105
    %2219 = vmatprep.subr.mxu0 0.0
    %2220 = vmatpush1.msra.mxu0 %v2102
    %2221 = vmatprep.subr.mxu0 0.0
    %2222 = vmatpush1.msra.mxu0 %v2099
    %2223 = vmatprep.subr.mxu0 0.0
    %2224 = vmatpush1.msra.mxu0 %v2096
    %2225 = vmatprep.subr.mxu0 0.0
    %2226 = vmatpush1.msra.mxu0 %v2093
    %2227 = vmatprep.subr.mxu0 0.0
    %2228 = vmatpush1.msra.mxu0 %v2090
    %2229 = vmatprep.subr.mxu0 0.0
    %2230 = vmatpush1.msra.mxu0 %v2087
    %2231 = vmatprep.subr.mxu0 0.0
    %2232 = vmatpush1.msra.mxu0 %v2084
    %2233 = vmatprep.subr.mxu0 0.0
    %2234 = vmatpush2.msra.mxu0 0.0
    %2235 = vmatprep.subr.mxu0 0.0
    %2236 = vmatpush2.msra.mxu0 0.0
    %2237 = vmatprep.subr.mxu0 0.0
    %2238 = vmatpush2.msra.mxu0 0.0
    %2239 = vmatprep.subr.mxu0 0.0
    %2240 = vmatpush2.msra.mxu0 0.0
    %2241 = vmatprep.subr.mxu0 0.0
    %2242 = vmatpush2.msra.mxu0 0.0
    %2243 = vmatprep.subr.mxu0 0.0
    %2244 = vmatpush2.msra.mxu0 0.0
    %2245 = vmatprep.subr.mxu0 0.0
    %2246 = vmatpush2.msra.mxu0 0.0
    %2247 = vmatprep.subr.mxu0 0.0
    %2248 = vmatpush2.msra.mxu0 0.0
    %2249 = vmatprep.subr.mxu0 0.0
    %2250 = vmatpush2.msra.mxu0 0.0
    %2251 = vmatprep.subr.mxu0 0.0
    %2252 = vmatpush2.msra.mxu0 0.0
    %2253 = vmatprep.subr.mxu0 0.0
    %2254 = vmatpush2.msra.mxu0 0.0
    %2255 = vmatprep.subr.mxu0 0.0
    %2256 = vmatpush2.msra.mxu0 0.0
    %2257 = vmatprep.subr.mxu0 0.0
    %2258 = vmatpush2.msra.mxu0 0.0
    %2259 = vmatprep.subr.mxu0 0.0
    %2260 = vmatpush2.msra.mxu0 0.0
    %2261 = vmatprep.subr.mxu0 0.0
    %2262 = vmatpush2.msra.mxu0 0.0
    %2263 = vmatprep.subr.mxu0 0.0
    %2264 = vmatpush2.msra.mxu0 0.0
    %2265 = vmatprep.mubr.f32.mxu0 0.0
    %2266 = vmatmul.mubr.f32.gmra.mxu0 %v2049
    %v2267 = vpop.f32.mrf.mxu0
    %v2268 = vadd.f32 0.0, %v2267
    %v2269 = vpop.f32.mrf.mxu0
    %2270 = vdwg.mxu0
    %v2271 = vld [vmem:[#allocation8 + $0x18] sm:$0xff]
    %v2272 = vld [vmem:[#allocation8 + $0x20] sm:$0xff]
    %v2273 = vld [vmem:[#allocation8 + $0x28] sm:$0xff]
    %v2274 = vld [vmem:[#allocation8 + $0x48] sm:$0xff]
    %v2275 = vld [vmem:[#allocation8 + $0x50] sm:$0xff]
    %v2276 = vld [vmem:[#allocation8 + $0x58] sm:$0xff]
    %v2277 = vld [vmem:[#allocation8 + $0x78] sm:$0xff]
    %v2278 = vld [vmem:[#allocation8 + $0x80] sm:$0xff]
    %v2279 = vld [vmem:[#allocation8 + $0x88] sm:$0xff]
    %v2280 = vld [vmem:[#allocation8 + $0xa8] sm:$0xff]
    %v2281 = vld [vmem:[#allocation8 + $0xb0] sm:$0xff]
    %v2282 = vld [vmem:[#allocation8 + $0xb8] sm:$0xff]
    %v2283 = vld [vmem:[#allocation8 + $0xd8] sm:$0xff]
    %v2284 = vld [vmem:[#allocation8 + $0xe0] sm:$0xff]
    %v2285 = vld [vmem:[#allocation8 + $0xe8] sm:$0xff]
    %v2286 = vld [vmem:[#allocation8 + $0x108] sm:$0xff]
    %v2287 = vld [vmem:[#allocation8 + $0x110] sm:$0xff]
    %v2288 = vld [vmem:[#allocation8 + $0x118] sm:$0xff]
    %v2289 = vld [vmem:[#allocation8 + $0x138] sm:$0xff]
    %v2290 = vld [vmem:[#allocation8 + $0x140] sm:$0xff]
    %v2291 = vld [vmem:[#allocation8 + $0x148] sm:$0xff]
    %v2292 = vld [vmem:[#allocation8 + $0x168] sm:$0xff]
    %v2293 = vld [vmem:[#allocation8 + $0x170] sm:$0xff]
    %v2294 = vld [vmem:[#allocation8 + $0x178] sm:$0xff]
    %v2295 = vld [vmem:[#allocation8 + $0x198] sm:$0xff]
    %v2296 = vld [vmem:[#allocation8 + $0x1a0] sm:$0xff]
    %v2297 = vld [vmem:[#allocation8 + $0x1a8] sm:$0xff]
    %v2298 = vld [vmem:[#allocation8 + $0x1c8] sm:$0xff]
    %v2299 = vld [vmem:[#allocation8 + $0x1d0] sm:$0xff]
    %v2300 = vld [vmem:[#allocation8 + $0x1d8] sm:$0xff]
    %v2301 = vld [vmem:[#allocation8 + $0x1f8] sm:$0xff]
    %v2302 = vld [vmem:[#allocation8 + $0x200] sm:$0xff]
    %v2303 = vld [vmem:[#allocation8 + $0x208] sm:$0xff]
    %v2304 = vld [vmem:[#allocation8 + $0x228] sm:$0xff]
    %v2305 = vld [vmem:[#allocation8 + $0x230] sm:$0xff]
    %v2306 = vld [vmem:[#allocation8 + $0x238] sm:$0xff]
    %v2307 = vld [vmem:[#allocation8 + $0x258] sm:$0xff]
    %v2308 = vld [vmem:[#allocation8 + $0x260] sm:$0xff]
    %v2309 = vld [vmem:[#allocation8 + $0x268] sm:$0xff]
    %v2310 = vld [vmem:[#allocation8 + $0x288] sm:$0xff]
    %v2311 = vld [vmem:[#allocation8 + $0x290] sm:$0xff]
    %v2312 = vld [vmem:[#allocation8 + $0x298] sm:$0xff]
    %v2313 = vld [vmem:[#allocation8 + $0x2b8] sm:$0xff]
    %v2314 = vld [vmem:[#allocation8 + $0x2c0] sm:$0xff]
    %v2315 = vld [vmem:[#allocation8 + $0x2c8] sm:$0xff]
    %v2316 = vld [vmem:[#allocation8 + $0x2e8] sm:$0xff]
    %v2317 = vld [vmem:[#allocation8 + $0x2f0] sm:$0xff]
    %v2318 = vld [vmem:[#allocation8 + $0x2f8] sm:$0xff]
    %2319 = vmatprep.subr.mxu0 %v2317
    %2320 = vmatpush1.msra.mxu0 %v2316
    %2321 = vmatprep.subr.mxu0 %v2314
    %2322 = vmatpush1.msra.mxu0 %v2313
    %2323 = vmatprep.subr.mxu0 %v2311
    %2324 = vmatpush1.msra.mxu0 %v2310
    %2325 = vmatprep.subr.mxu0 %v2308
    %2326 = vmatpush1.msra.mxu0 %v2307
    %2327 = vmatprep.subr.mxu0 %v2305
    %2328 = vmatpush1.msra.mxu0 %v2304
    %2329 = vmatprep.subr.mxu0 %v2302
    %2330 = vmatpush1.msra.mxu0 %v2301
    %2331 = vmatprep.subr.mxu0 %v2299
    %2332 = vmatpush1.msra.mxu0 %v2298
    %2333 = vmatprep.subr.mxu0 %v2296
    %2334 = vmatpush1.msra.mxu0 %v2295
    %2335 = vmatprep.subr.mxu0 %v2293
    %2336 = vmatpush1.msra.mxu0 %v2292
    %2337 = vmatprep.subr.mxu0 %v2290
    %2338 = vmatpush1.msra.mxu0 %v2289
    %2339 = vmatprep.subr.mxu0 %v2287
    %2340 = vmatpush1.msra.mxu0 %v2286
    %2341 = vmatprep.subr.mxu0 %v2284
    %2342 = vmatpush1.msra.mxu0 %v2283
    %2343 = vmatprep.subr.mxu0 %v2281
    %2344 = vmatpush1.msra.mxu0 %v2280
    %2345 = vmatprep.subr.mxu0 %v2278
    %2346 = vmatpush1.msra.mxu0 %v2277
    %2347 = vmatprep.subr.mxu0 %v2275
    %2348 = vmatpush1.msra.mxu0 %v2274
    %2349 = vmatprep.subr.mxu0 %v2272
    %2350 = vmatpush1.msra.mxu0 %v2271
    %2351 = vmatprep.subr.mxu0 0.0
    %2352 = vmatpush2.msra.mxu0 0.0
    %2353 = vmatprep.subr.mxu0 0.0
    %2354 = vmatpush2.msra.mxu0 0.0
    %2355 = vmatprep.subr.mxu0 0.0
    %2356 = vmatpush2.msra.mxu0 0.0
    %2357 = vmatprep.subr.mxu0 0.0
    %2358 = vmatpush2.msra.mxu0 0.0
    %2359 = vmatprep.subr.mxu0 0.0
    %2360 = vmatpush2.msra.mxu0 0.0
    %2361 = vmatprep.subr.mxu0 0.0
    %2362 = vmatpush2.msra.mxu0 0.0
    %2363 = vmatprep.subr.mxu0 0.0
    %2364 = vmatpush2.msra.mxu0 0.0
    %2365 = vmatprep.subr.mxu0 0.0
    %2366 = vmatpush2.msra.mxu0 0.0
    %2367 = vmatprep.subr.mxu0 0.0
    %2368 = vmatpush2.msra.mxu0 0.0
    %2369 = vmatprep.subr.mxu0 0.0
    %2370 = vmatpush2.msra.mxu0 0.0
    %2371 = vmatprep.subr.mxu0 0.0
    %2372 = vmatpush2.msra.mxu0 0.0
    %2373 = vmatprep.subr.mxu0 0.0
    %2374 = vmatpush2.msra.mxu0 0.0
    %2375 = vmatprep.subr.mxu0 0.0
    %2376 = vmatpush2.msra.mxu0 0.0
    %2377 = vmatprep.subr.mxu0 0.0
    %2378 = vmatpush2.msra.mxu0 0.0
    %2379 = vmatprep.subr.mxu0 0.0
    %2380 = vmatpush2.msra.mxu0 0.0
    %2381 = vmatprep.subr.mxu0 0.0
    %2382 = vmatpush2.msra.mxu0 0.0
    %2383 = vmatprep.mubr.f32.mxu0 0.0
    %2384 = vmatmul.mubr.f32.gmra.mxu0 %v2071
    %v2385 = vpop.f32.mrf.mxu0
    %v2386 = vadd.f32 0.0, %v2385
    %v2387 = vpop.f32.mrf.mxu0
    %v2388 = vadd.f32 0.0, %v2387
    %2389 = vdwg.mxu0
    %2390 = vmatprep.subr.mxu0 0.0
    %2391 = vmatpush1.msra.mxu0 %v2318
    %2392 = vmatprep.subr.mxu0 0.0
    %2393 = vmatpush1.msra.mxu0 %v2315
    %2394 = vmatprep.subr.mxu0 0.0
    %2395 = vmatpush1.msra.mxu0 %v2312
    %2396 = vmatprep.subr.mxu0 0.0
    %2397 = vmatpush1.msra.mxu0 %v2309
    %2398 = vmatprep.subr.mxu0 0.0
    %2399 = vmatpush1.msra.mxu0 %v2306
    %2400 = vmatprep.subr.mxu0 0.0
    %2401 = vmatpush1.msra.mxu0 %v2303
    %2402 = vmatprep.subr.mxu0 0.0
    %2403 = vmatpush1.msra.mxu0 %v2300
    %2404 = vmatprep.subr.mxu0 0.0
    %2405 = vmatpush1.msra.mxu0 %v2297
    %2406 = vmatprep.subr.mxu0 0.0
    %2407 = vmatpush1.msra.mxu0 %v2294
    %2408 = vmatprep.subr.mxu0 0.0
    %2409 = vmatpush1.msra.mxu0 %v2291
    %2410 = vmatprep.subr.mxu0 0.0
    %2411 = vmatpush1.msra.mxu0 %v2288
    %2412 = vmatprep.subr.mxu0 0.0
    %2413 = vmatpush1.msra.mxu0 %v2285
    %2414 = vmatprep.subr.mxu0 0.0
    %2415 = vmatpush1.msra.mxu0 %v2282
    %2416 = vmatprep.subr.mxu0 0.0
    %2417 = vmatpush1.msra.mxu0 %v2279
    %2418 = vmatprep.subr.mxu0 0.0
    %2419 = vmatpush1.msra.mxu0 %v2276
    %2420 = vmatprep.subr.mxu0 0.0
    %2421 = vmatpush1.msra.mxu0 %v2273
    %2422 = vmatprep.subr.mxu0 0.0
    %2423 = vmatpush2.msra.mxu0 0.0
    %2424 = vmatprep.subr.mxu0 0.0
    %2425 = vmatpush2.msra.mxu0 0.0
    %2426 = vmatprep.subr.mxu0 0.0
    %2427 = vmatpush2.msra.mxu0 0.0
    %2428 = vmatprep.subr.mxu0 0.0
    %2429 = vmatpush2.msra.mxu0 0.0
    %2430 = vmatprep.subr.mxu0 0.0
    %2431 = vmatpush2.msra.mxu0 0.0
    %2432 = vmatprep.subr.mxu0 0.0
    %2433 = vmatpush2.msra.mxu0 0.0
    %2434 = vmatprep.subr.mxu0 0.0
    %2435 = vmatpush2.msra.mxu0 0.0
    %2436 = vmatprep.subr.mxu0 0.0
    %2437 = vmatpush2.msra.mxu0 0.0
    %2438 = vmatprep.subr.mxu0 0.0
    %2439 = vmatpush2.msra.mxu0 0.0
    %2440 = vmatprep.subr.mxu0 0.0
    %2441 = vmatpush2.msra.mxu0 0.0
    %2442 = vmatprep.subr.mxu0 0.0
    %2443 = vmatpush2.msra.mxu0 0.0
    %2444 = vmatprep.subr.mxu0 0.0
    %2445 = vmatpush2.msra.mxu0 0.0
    %2446 = vmatprep.subr.mxu0 0.0
    %2447 = vmatpush2.msra.mxu0 0.0
    %2448 = vmatprep.subr.mxu0 0.0
    %2449 = vmatpush2.msra.mxu0 0.0
    %2450 = vmatprep.subr.mxu0 0.0
    %2451 = vmatpush2.msra.mxu0 0.0
    %2452 = vmatprep.subr.mxu0 0.0
    %2453 = vmatpush2.msra.mxu0 0.0
    %2454 = vmatprep.mubr.f32.mxu0 0.0
    %2455 = vmatmul.mubr.f32.gmra.mxu0 %v2071
    %v2456 = vpop.f32.mrf.mxu0
    %v2457 = vadd.f32 0.0, %v2456
    %v2458 = vpop.f32.mrf.mxu0
    %2459 = vdwg.mxu0
    %v2460 = vadd.f32 %v2076, %v2197
    %v2461 = vxor.u32 %v2460, 2147483648
    %v2462 = vmul.f32 %v2461, 1.442695
    %v2463 = vpow.pop %v2462
    %v2464 = vadd.f32 %v2463, 1.0
    %v2465 = vrcp.pop %v2464
    %v2466 = vmul.f32 1.0, %v2465
    %v2467 = vadd.f32 %v2077, %v2199
    %v2468 = vxor.u32 %v2467, 2147483648
    %v2469 = vmul.f32 %v2468, 1.442695
    %v2470 = vpow.pop %v2469
    %v2471 = vadd.f32 %v2470, 1.0
    %v2472 = vrcp.pop %v2471
    %v2473 = vmul.f32 1.0, %v2472
    %v2474 = vadd.f32 %v2268, %v1171
    %v2475 = vmul.f32 %v2466, %v2474
    %v2476 = vadd.f32 %v2078, %v2475
    %v2477 = vtanh.pop %v2476
    %v2478 = vsub.f32 1.0, %v2473
    %v2479 = vmul.f32 %v2478, %v2477
    %v2480 = vmul.f32 %v2473, %v2049
    %v2481 = vadd.f32 %v2479, %v2480
    %v2482 = vadd.f32 %v2079, %v2386
    %v2483 = vxor.u32 %v2482, 2147483648
    %v2484 = vmul.f32 %v2483, 1.442695
    %v2485 = vpow.pop %v2484
    %v2486 = vadd.f32 %v2485, 1.0
    %v2487 = vrcp.pop %v2486
    %v2488 = vmul.f32 1.0, %v2487
    %v2489 = vadd.f32 %v2080, %v2388
    %v2490 = vxor.u32 %v2489, 2147483648
    %v2491 = vmul.f32 %v2490, 1.442695
    %v2492 = vpow.pop %v2491
    %v2493 = vadd.f32 %v2492, 1.0
    %v2494 = vrcp.pop %v2493
    %v2495 = vmul.f32 1.0, %v2494
    %v2496 = vadd.f32 %v2457, %v1199
    %v2497 = vmul.f32 %v2488, %v2496
    %v2498 = vadd.f32 %v2081, %v2497
    %v2499 = vtanh.pop %v2498
    %v2500 = vsub.f32 1.0, %v2495
    %v2501 = vmul.f32 %v2500, %v2499
    %v2502 = vmul.f32 %v2495, %v2071
    %v2503 = vadd.f32 %v2501, %v2502
    %s2504 = scalar_lea.vmem [#allocation9], 48
    %2505 = vst [vmem:[%s2504] sm:$0xff] %v2481
    %s2506 = scalar_lea.vmem [#allocation9], 64
    %2507 = vst [vmem:[%s2506 + $0x8] sm:$0xff] %v2503
    %v2508 = vld [vmem:[#allocation2 + $0xc0] sm:$0xff]
    %v2509 = vld [vmem:[#allocation2 + $0xc8] sm:$0xff]
    %v2510 = vld [vmem:[#allocation2 + $0xd0] sm:$0xff]
    %v2511 = vld [vmem:[#allocation2 + $0xa8] sm:$0xff]
    %v2512 = vld [vmem:[#allocation2 + $0xb0] sm:$0xff]
    %v2513 = vld [vmem:[#allocation2 + $0xb8] sm:$0xff]
    %v2514 = vld [vmem:[#allocation8] sm:$0xff]
    %v2515 = vld [vmem:[#allocation8 + $0x8] sm:$0xff]
    %v2516 = vld [vmem:[#allocation8 + $0x10] sm:$0xff]
    %v2517 = vld [vmem:[#allocation8 + $0x30] sm:$0xff]
    %v2518 = vld [vmem:[#allocation8 + $0x38] sm:$0xff]
    %v2519 = vld [vmem:[#allocation8 + $0x40] sm:$0xff]
    %v2520 = vld [vmem:[#allocation8 + $0x60] sm:$0xff]
    %v2521 = vld [vmem:[#allocation8 + $0x68] sm:$0xff]
    %v2522 = vld [vmem:[#allocation8 + $0x70] sm:$0xff]
    %v2523 = vld [vmem:[#allocation8 + $0x90] sm:$0xff]
    %v2524 = vld [vmem:[#allocation8 + $0x98] sm:$0xff]
    %v2525 = vld [vmem:[#allocation8 + $0xa0] sm:$0xff]
    %v2526 = vld [vmem:[#allocation8 + $0xc0] sm:$0xff]
    %v2527 = vld [vmem:[#allocation8 + $0xc8] sm:$0xff]
    %v2528 = vld [vmem:[#allocation8 + $0xd0] sm:$0xff]
    %v2529 = vld [vmem:[#allocation8 + $0xf0] sm:$0xff]
    %v2530 = vld [vmem:[#allocation8 + $0xf8] sm:$0xff]
    %v2531 = vld [vmem:[#allocation8 + $0x100] sm:$0xff]
    %v2532 = vld [vmem:[#allocation8 + $0x120] sm:$0xff]
    %v2533 = vld [vmem:[#allocation8 + $0x128] sm:$0xff]
    %v2534 = vld [vmem:[#allocation8 + $0x130] sm:$0xff]
    %v2535 = vld [vmem:[#allocation8 + $0x150] sm:$0xff]
    %v2536 = vld [vmem:[#allocation8 + $0x158] sm:$0xff]
    %v2537 = vld [vmem:[#allocation8 + $0x160] sm:$0xff]
    %v2538 = vld [vmem:[#allocation8 + $0x180] sm:$0xff]
    %v2539 = vld [vmem:[#allocation8 + $0x188] sm:$0xff]
    %v2540 = vld [vmem:[#allocation8 + $0x190] sm:$0xff]
    %v2541 = vld [vmem:[#allocation8 + $0x1b0] sm:$0xff]
    %v2542 = vld [vmem:[#allocation8 + $0x1b8] sm:$0xff]
    %v2543 = vld [vmem:[#allocation8 + $0x1c0] sm:$0xff]
    %v2544 = vld [vmem:[#allocation8 + $0x1e0] sm:$0xff]
    %v2545 = vld [vmem:[#allocation8 + $0x1e8] sm:$0xff]
    %v2546 = vld [vmem:[#allocation8 + $0x1f0] sm:$0xff]
    %v2547 = vld [vmem:[#allocation8 + $0x210] sm:$0xff]
    %v2548 = vld [vmem:[#allocation8 + $0x218] sm:$0xff]
    %v2549 = vld [vmem:[#allocation8 + $0x220] sm:$0xff]
    %v2550 = vld [vmem:[#allocation8 + $0x240] sm:$0xff]
    %v2551 = vld [vmem:[#allocation8 + $0x248] sm:$0xff]
    %v2552 = vld [vmem:[#allocation8 + $0x250] sm:$0xff]
    %v2553 = vld [vmem:[#allocation8 + $0x270] sm:$0xff]
    %v2554 = vld [vmem:[#allocation8 + $0x278] sm:$0xff]
    %v2555 = vld [vmem:[#allocation8 + $0x280] sm:$0xff]
    %v2556 = vld [vmem:[#allocation8 + $0x2a0] sm:$0xff]
    %v2557 = vld [vmem:[#allocation8 + $0x2a8] sm:$0xff]
    %v2558 = vld [vmem:[#allocation8 + $0x2b0] sm:$0xff]
    %v2559 = vld [vmem:[#allocation8 + $0x2d0] sm:$0xff]
    %v2560 = vld [vmem:[#allocation8 + $0x2d8] sm:$0xff]
    %v2561 = vld [vmem:[#allocation8 + $0x2e0] sm:$0xff]
    %2562 = vmatprep.subr.mxu0 %v2560
    %2563 = vmatpush1.msra.mxu0 %v2559
    %2564 = vmatprep.subr.mxu0 %v2557
    %2565 = vmatpush1.msra.mxu0 %v2556
    %2566 = vmatprep.subr.mxu0 %v2554
    %2567 = vmatpush1.msra.mxu0 %v2553
    %2568 = vmatprep.subr.mxu0 %v2551
    %2569 = vmatpush1.msra.mxu0 %v2550
    %2570 = vmatprep.subr.mxu0 %v2548
    %2571 = vmatpush1.msra.mxu0 %v2547
    %2572 = vmatprep.subr.mxu0 %v2545
    %2573 = vmatpush1.msra.mxu0 %v2544
    %2574 = vmatprep.subr.mxu0 %v2542
    %2575 = vmatpush1.msra.mxu0 %v2541
    %2576 = vmatprep.subr.mxu0 %v2539
    %2577 = vmatpush1.msra.mxu0 %v2538
    %2578 = vmatprep.subr.mxu0 %v2536
    %2579 = vmatpush1.msra.mxu0 %v2535
    %2580 = vmatprep.subr.mxu0 %v2533
    %2581 = vmatpush1.msra.mxu0 %v2532
    %2582 = vmatprep.subr.mxu0 %v2530
    %2583 = vmatpush1.msra.mxu0 %v2529
    %2584 = vmatprep.subr.mxu0 %v2527
    %2585 = vmatpush1.msra.mxu0 %v2526
    %2586 = vmatprep.subr.mxu0 %v2524
    %2587 = vmatpush1.msra.mxu0 %v2523
    %2588 = vmatprep.subr.mxu0 %v2521
    %2589 = vmatpush1.msra.mxu0 %v2520
    %2590 = vmatprep.subr.mxu0 %v2518
    %2591 = vmatpush1.msra.mxu0 %v2517
    %2592 = vmatprep.subr.mxu0 %v2515
    %2593 = vmatpush1.msra.mxu0 %v2514
    %2594 = vmatprep.subr.mxu0 0.0
    %2595 = vmatpush2.msra.mxu0 0.0
    %2596 = vmatprep.subr.mxu0 0.0
    %2597 = vmatpush2.msra.mxu0 0.0
    %2598 = vmatprep.subr.mxu0 0.0
    %2599 = vmatpush2.msra.mxu0 0.0
    %2600 = vmatprep.subr.mxu0 0.0
    %2601 = vmatpush2.msra.mxu0 0.0
    %2602 = vmatprep.subr.mxu0 0.0
    %2603 = vmatpush2.msra.mxu0 0.0
    %2604 = vmatprep.subr.mxu0 0.0
    %2605 = vmatpush2.msra.mxu0 0.0
    %2606 = vmatprep.subr.mxu0 0.0
    %2607 = vmatpush2.msra.mxu0 0.0
    %2608 = vmatprep.subr.mxu0 0.0
    %2609 = vmatpush2.msra.mxu0 0.0
    %2610 = vmatprep.subr.mxu0 0.0
    %2611 = vmatpush2.msra.mxu0 0.0
    %2612 = vmatprep.subr.mxu0 0.0
    %2613 = vmatpush2.msra.mxu0 0.0
    %2614 = vmatprep.subr.mxu0 0.0
    %2615 = vmatpush2.msra.mxu0 0.0
    %2616 = vmatprep.subr.mxu0 0.0
    %2617 = vmatpush2.msra.mxu0 0.0
    %2618 = vmatprep.subr.mxu0 0.0
    %2619 = vmatpush2.msra.mxu0 0.0
    %2620 = vmatprep.subr.mxu0 0.0
    %2621 = vmatpush2.msra.mxu0 0.0
    %2622 = vmatprep.subr.mxu0 0.0
    %2623 = vmatpush2.msra.mxu0 0.0
    %2624 = vmatprep.subr.mxu0 0.0
    %2625 = vmatpush2.msra.mxu0 0.0
    %2626 = vmatprep.mubr.f32.mxu0 0.0
    %2627 = vmatmul.mubr.f32.gmra.mxu0 %v2481
    %v2628 = vpop.f32.mrf.mxu0
    %v2629 = vadd.f32 0.0, %v2628
    %v2630 = vpop.f32.mrf.mxu0
    %v2631 = vadd.f32 0.0, %v2630
    %2632 = vdwg.mxu0
    %2633 = vmatprep.subr.mxu0 0.0
    %2634 = vmatpush1.msra.mxu0 %v2561
    %2635 = vmatprep.subr.mxu0 0.0
    %2636 = vmatpush1.msra.mxu0 %v2558
    %2637 = vmatprep.subr.mxu0 0.0
    %2638 = vmatpush1.msra.mxu0 %v2555
    %2639 = vmatprep.subr.mxu0 0.0
    %2640 = vmatpush1.msra.mxu0 %v2552
    %2641 = vmatprep.subr.mxu0 0.0
    %2642 = vmatpush1.msra.mxu0 %v2549
    %2643 = vmatprep.subr.mxu0 0.0
    %2644 = vmatpush1.msra.mxu0 %v2546
    %2645 = vmatprep.subr.mxu0 0.0
    %2646 = vmatpush1.msra.mxu0 %v2543
    %2647 = vmatprep.subr.mxu0 0.0
    %2648 = vmatpush1.msra.mxu0 %v2540
    %2649 = vmatprep.subr.mxu0 0.0
    %2650 = vmatpush1.msra.mxu0 %v2537
    %2651 = vmatprep.subr.mxu0 0.0
    %2652 = vmatpush1.msra.mxu0 %v2534
    %2653 = vmatprep.subr.mxu0 0.0
    %2654 = vmatpush1.msra.mxu0 %v2531
    %2655 = vmatprep.subr.mxu0 0.0
    %2656 = vmatpush1.msra.mxu0 %v2528
    %2657 = vmatprep.subr.mxu0 0.0
    %2658 = vmatpush1.msra.mxu0 %v2525
    %2659 = vmatprep.subr.mxu0 0.0
    %2660 = vmatpush1.msra.mxu0 %v2522
    %2661 = vmatprep.subr.mxu0 0.0
    %2662 = vmatpush1.msra.mxu0 %v2519
    %2663 = vmatprep.subr.mxu0 0.0
    %2664 = vmatpush1.msra.mxu0 %v2516
    %2665 = vmatprep.subr.mxu0 0.0
    %2666 = vmatpush2.msra.mxu0 0.0
    %2667 = vmatprep.subr.mxu0 0.0
    %2668 = vmatpush2.msra.mxu0 0.0
    %2669 = vmatprep.subr.mxu0 0.0
    %2670 = vmatpush2.msra.mxu0 0.0
    %2671 = vmatprep.subr.mxu0 0.0
    %2672 = vmatpush2.msra.mxu0 0.0
    %2673 = vmatprep.subr.mxu0 0.0
    %2674 = vmatpush2.msra.mxu0 0.0
    %2675 = vmatprep.subr.mxu0 0.0
    %2676 = vmatpush2.msra.mxu0 0.0
    %2677 = vmatprep.subr.mxu0 0.0
    %2678 = vmatpush2.msra.mxu0 0.0
    %2679 = vmatprep.subr.mxu0 0.0
    %2680 = vmatpush2.msra.mxu0 0.0
    %2681 = vmatprep.subr.mxu0 0.0
    %2682 = vmatpush2.msra.mxu0 0.0
    %2683 = vmatprep.subr.mxu0 0.0
    %2684 = vmatpush2.msra.mxu0 0.0
    %2685 = vmatprep.subr.mxu0 0.0
    %2686 = vmatpush2.msra.mxu0 0.0
    %2687 = vmatprep.subr.mxu0 0.0
    %2688 = vmatpush2.msra.mxu0 0.0
    %2689 = vmatprep.subr.mxu0 0.0
    %2690 = vmatpush2.msra.mxu0 0.0
    %2691 = vmatprep.subr.mxu0 0.0
    %2692 = vmatpush2.msra.mxu0 0.0
    %2693 = vmatprep.subr.mxu0 0.0
    %2694 = vmatpush2.msra.mxu0 0.0
    %2695 = vmatprep.subr.mxu0 0.0
    %2696 = vmatpush2.msra.mxu0 0.0
    %2697 = vmatprep.mubr.f32.mxu0 0.0
    %2698 = vmatmul.mubr.f32.gmra.mxu0 %v2481
    %v2699 = vpop.f32.mrf.mxu0
    %v2700 = vadd.f32 0.0, %v2699
    %v2701 = vpop.f32.mrf.mxu0
    %2702 = vdwg.mxu0
    %v2703 = vld [vmem:[#allocation8 + $0x18] sm:$0xff]
    %v2704 = vld [vmem:[#allocation8 + $0x20] sm:$0xff]
    %v2705 = vld [vmem:[#allocation8 + $0x28] sm:$0xff]
    %v2706 = vld [vmem:[#allocation8 + $0x48] sm:$0xff]
    %v2707 = vld [vmem:[#allocation8 + $0x50] sm:$0xff]
    %v2708 = vld [vmem:[#allocation8 + $0x58] sm:$0xff]
    %v2709 = vld [vmem:[#allocation8 + $0x78] sm:$0xff]
    %v2710 = vld [vmem:[#allocation8 + $0x80] sm:$0xff]
    %v2711 = vld [vmem:[#allocation8 + $0x88] sm:$0xff]
    %v2712 = vld [vmem:[#allocation8 + $0xa8] sm:$0xff]
    %v2713 = vld [vmem:[#allocation8 + $0xb0] sm:$0xff]
    %v2714 = vld [vmem:[#allocation8 + $0xb8] sm:$0xff]
    %v2715 = vld [vmem:[#allocation8 + $0xd8] sm:$0xff]
    %v2716 = vld [vmem:[#allocation8 + $0xe0] sm:$0xff]
    %v2717 = vld [vmem:[#allocation8 + $0xe8] sm:$0xff]
    %v2718 = vld [vmem:[#allocation8 + $0x108] sm:$0xff]
    %v2719 = vld [vmem:[#allocation8 + $0x110] sm:$0xff]
    %v2720 = vld [vmem:[#allocation8 + $0x118] sm:$0xff]
    %v2721 = vld [vmem:[#allocation8 + $0x138] sm:$0xff]
    %v2722 = vld [vmem:[#allocation8 + $0x140] sm:$0xff]
    %v2723 = vld [vmem:[#allocation8 + $0x148] sm:$0xff]
    %v2724 = vld [vmem:[#allocation8 + $0x168] sm:$0xff]
    %v2725 = vld [vmem:[#allocation8 + $0x170] sm:$0xff]
    %v2726 = vld [vmem:[#allocation8 + $0x178] sm:$0xff]
    %v2727 = vld [vmem:[#allocation8 + $0x198] sm:$0xff]
    %v2728 = vld [vmem:[#allocation8 + $0x1a0] sm:$0xff]
    %v2729 = vld [vmem:[#allocation8 + $0x1a8] sm:$0xff]
    %v2730 = vld [vmem:[#allocation8 + $0x1c8] sm:$0xff]
    %v2731 = vld [vmem:[#allocation8 + $0x1d0] sm:$0xff]
    %v2732 = vld [vmem:[#allocation8 + $0x1d8] sm:$0xff]
    %v2733 = vld [vmem:[#allocation8 + $0x1f8] sm:$0xff]
    %v2734 = vld [vmem:[#allocation8 + $0x200] sm:$0xff]
    %v2735 = vld [vmem:[#allocation8 + $0x208] sm:$0xff]
    %v2736 = vld [vmem:[#allocation8 + $0x228] sm:$0xff]
    %v2737 = vld [vmem:[#allocation8 + $0x230] sm:$0xff]
    %v2738 = vld [vmem:[#allocation8 + $0x238] sm:$0xff]
    %v2739 = vld [vmem:[#allocation8 + $0x258] sm:$0xff]
    %v2740 = vld [vmem:[#allocation8 + $0x260] sm:$0xff]
    %v2741 = vld [vmem:[#allocation8 + $0x268] sm:$0xff]
    %v2742 = vld [vmem:[#allocation8 + $0x288] sm:$0xff]
    %v2743 = vld [vmem:[#allocation8 + $0x290] sm:$0xff]
    %v2744 = vld [vmem:[#allocation8 + $0x298] sm:$0xff]
    %v2745 = vld [vmem:[#allocation8 + $0x2b8] sm:$0xff]
    %v2746 = vld [vmem:[#allocation8 + $0x2c0] sm:$0xff]
    %v2747 = vld [vmem:[#allocation8 + $0x2c8] sm:$0xff]
    %v2748 = vld [vmem:[#allocation8 + $0x2e8] sm:$0xff]
    %v2749 = vld [vmem:[#allocation8 + $0x2f0] sm:$0xff]
    %v2750 = vld [vmem:[#allocation8 + $0x2f8] sm:$0xff]
    %2751 = vmatprep.subr.mxu0 %v2749
    %2752 = vmatpush1.msra.mxu0 %v2748
    %2753 = vmatprep.subr.mxu0 %v2746
    %2754 = vmatpush1.msra.mxu0 %v2745
    %2755 = vmatprep.subr.mxu0 %v2743
    %2756 = vmatpush1.msra.mxu0 %v2742
    %2757 = vmatprep.subr.mxu0 %v2740
    %2758 = vmatpush1.msra.mxu0 %v2739
    %2759 = vmatprep.subr.mxu0 %v2737
    %2760 = vmatpush1.msra.mxu0 %v2736
    %2761 = vmatprep.subr.mxu0 %v2734
    %2762 = vmatpush1.msra.mxu0 %v2733
    %2763 = vmatprep.subr.mxu0 %v2731
    %2764 = vmatpush1.msra.mxu0 %v2730
    %2765 = vmatprep.subr.mxu0 %v2728
    %2766 = vmatpush1.msra.mxu0 %v2727
    %2767 = vmatprep.subr.mxu0 %v2725
    %2768 = vmatpush1.msra.mxu0 %v2724
    %2769 = vmatprep.subr.mxu0 %v2722
    %2770 = vmatpush1.msra.mxu0 %v2721
    %2771 = vmatprep.subr.mxu0 %v2719
    %2772 = vmatpush1.msra.mxu0 %v2718
    %2773 = vmatprep.subr.mxu0 %v2716
    %2774 = vmatpush1.msra.mxu0 %v2715
    %2775 = vmatprep.subr.mxu0 %v2713
    %2776 = vmatpush1.msra.mxu0 %v2712
    %2777 = vmatprep.subr.mxu0 %v2710
    %2778 = vmatpush1.msra.mxu0 %v2709
    %2779 = vmatprep.subr.mxu0 %v2707
    %2780 = vmatpush1.msra.mxu0 %v2706
    %2781 = vmatprep.subr.mxu0 %v2704
    %2782 = vmatpush1.msra.mxu0 %v2703
    %2783 = vmatprep.subr.mxu0 0.0
    %2784 = vmatpush2.msra.mxu0 0.0
    %2785 = vmatprep.subr.mxu0 0.0
    %2786 = vmatpush2.msra.mxu0 0.0
    %2787 = vmatprep.subr.mxu0 0.0
    %2788 = vmatpush2.msra.mxu0 0.0
    %2789 = vmatprep.subr.mxu0 0.0
    %2790 = vmatpush2.msra.mxu0 0.0
    %2791 = vmatprep.subr.mxu0 0.0
    %2792 = vmatpush2.msra.mxu0 0.0
    %2793 = vmatprep.subr.mxu0 0.0
    %2794 = vmatpush2.msra.mxu0 0.0
    %2795 = vmatprep.subr.mxu0 0.0
    %2796 = vmatpush2.msra.mxu0 0.0
    %2797 = vmatprep.subr.mxu0 0.0
    %2798 = vmatpush2.msra.mxu0 0.0
    %2799 = vmatprep.subr.mxu0 0.0
    %2800 = vmatpush2.msra.mxu0 0.0
    %2801 = vmatprep.subr.mxu0 0.0
    %2802 = vmatpush2.msra.mxu0 0.0
    %2803 = vmatprep.subr.mxu0 0.0
    %2804 = vmatpush2.msra.mxu0 0.0
    %2805 = vmatprep.subr.mxu0 0.0
    %2806 = vmatpush2.msra.mxu0 0.0
    %2807 = vmatprep.subr.mxu0 0.0
    %2808 = vmatpush2.msra.mxu0 0.0
    %2809 = vmatprep.subr.mxu0 0.0
    %2810 = vmatpush2.msra.mxu0 0.0
    %2811 = vmatprep.subr.mxu0 0.0
    %2812 = vmatpush2.msra.mxu0 0.0
    %2813 = vmatprep.subr.mxu0 0.0
    %2814 = vmatpush2.msra.mxu0 0.0
    %2815 = vmatprep.mubr.f32.mxu0 0.0
    %2816 = vmatmul.mubr.f32.gmra.mxu0 %v2503
    %v2817 = vpop.f32.mrf.mxu0
    %v2818 = vadd.f32 0.0, %v2817
    %v2819 = vpop.f32.mrf.mxu0
    %v2820 = vadd.f32 0.0, %v2819
    %2821 = vdwg.mxu0
    %2822 = vmatprep.subr.mxu0 0.0
    %2823 = vmatpush1.msra.mxu0 %v2750
    %2824 = vmatprep.subr.mxu0 0.0
    %2825 = vmatpush1.msra.mxu0 %v2747
    %2826 = vmatprep.subr.mxu0 0.0
    %2827 = vmatpush1.msra.mxu0 %v2744
    %2828 = vmatprep.subr.mxu0 0.0
    %2829 = vmatpush1.msra.mxu0 %v2741
    %2830 = vmatprep.subr.mxu0 0.0
    %2831 = vmatpush1.msra.mxu0 %v2738
    %2832 = vmatprep.subr.mxu0 0.0
    %2833 = vmatpush1.msra.mxu0 %v2735
    %2834 = vmatprep.subr.mxu0 0.0
    %2835 = vmatpush1.msra.mxu0 %v2732
    %2836 = vmatprep.subr.mxu0 0.0
    %2837 = vmatpush1.msra.mxu0 %v2729
    %2838 = vmatprep.subr.mxu0 0.0
    %2839 = vmatpush1.msra.mxu0 %v2726
    %2840 = vmatprep.subr.mxu0 0.0
    %2841 = vmatpush1.msra.mxu0 %v2723
    %2842 = vmatprep.subr.mxu0 0.0
    %2843 = vmatpush1.msra.mxu0 %v2720
    %2844 = vmatprep.subr.mxu0 0.0
    %2845 = vmatpush1.msra.mxu0 %v2717
    %2846 = vmatprep.subr.mxu0 0.0
    %2847 = vmatpush1.msra.mxu0 %v2714
    %2848 = vmatprep.subr.mxu0 0.0
    %2849 = vmatpush1.msra.mxu0 %v2711
    %2850 = vmatprep.subr.mxu0 0.0
    %2851 = vmatpush1.msra.mxu0 %v2708
    %2852 = vmatprep.subr.mxu0 0.0
    %2853 = vmatpush1.msra.mxu0 %v2705
    %2854 = vmatprep.subr.mxu0 0.0
    %2855 = vmatpush2.msra.mxu0 0.0
    %2856 = vmatprep.subr.mxu0 0.0
    %2857 = vmatpush2.msra.mxu0 0.0
    %2858 = vmatprep.subr.mxu0 0.0
    %2859 = vmatpush2.msra.mxu0 0.0
    %2860 = vmatprep.subr.mxu0 0.0
    %2861 = vmatpush2.msra.mxu0 0.0
    %2862 = vmatprep.subr.mxu0 0.0
    %2863 = vmatpush2.msra.mxu0 0.0
    %2864 = vmatprep.subr.mxu0 0.0
    %2865 = vmatpush2.msra.mxu0 0.0
    %2866 = vmatprep.subr.mxu0 0.0
    %2867 = vmatpush2.msra.mxu0 0.0
    %2868 = vmatprep.subr.mxu0 0.0
    %2869 = vmatpush2.msra.mxu0 0.0
    %2870 = vmatprep.subr.mxu0 0.0
    %2871 = vmatpush2.msra.mxu0 0.0
    %2872 = vmatprep.subr.mxu0 0.0
    %2873 = vmatpush2.msra.mxu0 0.0
    %2874 = vmatprep.subr.mxu0 0.0
    %2875 = vmatpush2.msra.mxu0 0.0
    %2876 = vmatprep.subr.mxu0 0.0
    %2877 = vmatpush2.msra.mxu0 0.0
    %2878 = vmatprep.subr.mxu0 0.0
    %2879 = vmatpush2.msra.mxu0 0.0
    %2880 = vmatprep.subr.mxu0 0.0
    %2881 = vmatpush2.msra.mxu0 0.0
    %2882 = vmatprep.subr.mxu0 0.0
    %2883 = vmatpush2.msra.mxu0 0.0
    %2884 = vmatprep.subr.mxu0 0.0
    %2885 = vmatpush2.msra.mxu0 0.0
    %2886 = vmatprep.mubr.f32.mxu0 0.0
    %2887 = vmatmul.mubr.f32.gmra.mxu0 %v2503
    %v2888 = vpop.f32.mrf.mxu0
    %v2889 = vadd.f32 0.0, %v2888
    %v2890 = vpop.f32.mrf.mxu0
    %2891 = vdwg.mxu0
    %v2892 = vadd.f32 %v2508, %v2629
    %v2893 = vxor.u32 %v2892, 2147483648
    %v2894 = vmul.f32 %v2893, 1.442695
    %v2895 = vpow.pop %v2894
    %v2896 = vadd.f32 %v2895, 1.0
    %v2897 = vrcp.pop %v2896
    %v2898 = vmul.f32 1.0, %v2897
    %v2899 = vadd.f32 %v2509, %v2631
    %v2900 = vxor.u32 %v2899, 2147483648
    %v2901 = vmul.f32 %v2900, 1.442695
    %v2902 = vpow.pop %v2901
    %v2903 = vadd.f32 %v2902, 1.0
    %v2904 = vrcp.pop %v2903
    %v2905 = vmul.f32 1.0, %v2904
    %v2906 = vadd.f32 %v2700, %v1171
    %v2907 = vmul.f32 %v2898, %v2906
    %v2908 = vadd.f32 %v2510, %v2907
    %v2909 = vtanh.pop %v2908
    %v2910 = vsub.f32 1.0, %v2905
    %v2911 = vmul.f32 %v2910, %v2909
    %v2912 = vmul.f32 %v2905, %v2481
    %v2913 = vadd.f32 %v2911, %v2912
    %v2914 = vadd.f32 %v2511, %v2818
    %v2915 = vxor.u32 %v2914, 2147483648
    %v2916 = vmul.f32 %v2915, 1.442695
    %v2917 = vpow.pop %v2916
    %v2918 = vadd.f32 %v2917, 1.0
    %v2919 = vrcp.pop %v2918
    %v2920 = vmul.f32 1.0, %v2919
    %v2921 = vadd.f32 %v2512, %v2820
    %v2922 = vxor.u32 %v2921, 2147483648
    %v2923 = vmul.f32 %v2922, 1.442695
    %v2924 = vpow.pop %v2923
    %v2925 = vadd.f32 %v2924, 1.0
    %v2926 = vrcp.pop %v2925
    %v2927 = vmul.f32 1.0, %v2926
    %v2928 = vadd.f32 %v2889, %v1199
    %v2929 = vmul.f32 %v2920, %v2928
    %v2930 = vadd.f32 %v2513, %v2929
    %v2931 = vtanh.pop %v2930
    %v2932 = vsub.f32 1.0, %v2927
    %v2933 = vmul.f32 %v2932, %v2931
    %v2934 = vmul.f32 %v2927, %v2503
    %v2935 = vadd.f32 %v2933, %v2934
    %2936 = vst [vmem:[%s2506] sm:$0xff] %v2913
    %2937 = vst [vmem:[%s2504 + $0x8] sm:$0xff] %v2935
    %v2938 = vld [vmem:[#allocation2 + $0xf0] sm:$0xff]
    %v2939 = vld [vmem:[#allocation2 + $0xf8] sm:$0xff]
    %v2940 = vld [vmem:[#allocation2 + $0x100] sm:$0xff]
    %v2941 = vld [vmem:[#allocation2 + $0x78] sm:$0xff]
    %v2942 = vld [vmem:[#allocation2 + $0x80] sm:$0xff]
    %v2943 = vld [vmem:[#allocation2 + $0x88] sm:$0xff]
    %v2944 = vld [vmem:[#allocation8] sm:$0xff]
    %v2945 = vld [vmem:[#allocation8 + $0x8] sm:$0xff]
    %v2946 = vld [vmem:[#allocation8 + $0x10] sm:$0xff]
    %v2947 = vld [vmem:[#allocation8 + $0x30] sm:$0xff]
    %v2948 = vld [vmem:[#allocation8 + $0x38] sm:$0xff]
    %v2949 = vld [vmem:[#allocation8 + $0x40] sm:$0xff]
    %v2950 = vld [vmem:[#allocation8 + $0x60] sm:$0xff]
    %v2951 = vld [vmem:[#allocation8 + $0x68] sm:$0xff]
    %v2952 = vld [vmem:[#allocation8 + $0x70] sm:$0xff]
    %v2953 = vld [vmem:[#allocation8 + $0x90] sm:$0xff]
    %v2954 = vld [vmem:[#allocation8 + $0x98] sm:$0xff]
    %v2955 = vld [vmem:[#allocation8 + $0xa0] sm:$0xff]
    %v2956 = vld [vmem:[#allocation8 + $0xc0] sm:$0xff]
    %v2957 = vld [vmem:[#allocation8 + $0xc8] sm:$0xff]
    %v2958 = vld [vmem:[#allocation8 + $0xd0] sm:$0xff]
    %v2959 = vld [vmem:[#allocation8 + $0xf0] sm:$0xff]
    %v2960 = vld [vmem:[#allocation8 + $0xf8] sm:$0xff]
    %v2961 = vld [vmem:[#allocation8 + $0x100] sm:$0xff]
    %v2962 = vld [vmem:[#allocation8 + $0x120] sm:$0xff]
    %v2963 = vld [vmem:[#allocation8 + $0x128] sm:$0xff]
    %v2964 = vld [vmem:[#allocation8 + $0x130] sm:$0xff]
    %v2965 = vld [vmem:[#allocation8 + $0x150] sm:$0xff]
    %v2966 = vld [vmem:[#allocation8 + $0x158] sm:$0xff]
    %v2967 = vld [vmem:[#allocation8 + $0x160] sm:$0xff]
    %v2968 = vld [vmem:[#allocation8 + $0x180] sm:$0xff]
    %v2969 = vld [vmem:[#allocation8 + $0x188] sm:$0xff]
    %v2970 = vld [vmem:[#allocation8 + $0x190] sm:$0xff]
    %v2971 = vld [vmem:[#allocation8 + $0x1b0] sm:$0xff]
    %v2972 = vld [vmem:[#allocation8 + $0x1b8] sm:$0xff]
    %v2973 = vld [vmem:[#allocation8 + $0x1c0] sm:$0xff]
    %v2974 = vld [vmem:[#allocation8 + $0x1e0] sm:$0xff]
    %v2975 = vld [vmem:[#allocation8 + $0x1e8] sm:$0xff]
    %v2976 = vld [vmem:[#allocation8 + $0x1f0] sm:$0xff]
    %v2977 = vld [vmem:[#allocation8 + $0x210] sm:$0xff]
    %v2978 = vld [vmem:[#allocation8 + $0x218] sm:$0xff]
    %v2979 = vld [vmem:[#allocation8 + $0x220] sm:$0xff]
    %v2980 = vld [vmem:[#allocation8 + $0x240] sm:$0xff]
    %v2981 = vld [vmem:[#allocation8 + $0x248] sm:$0xff]
    %v2982 = vld [vmem:[#allocation8 + $0x250] sm:$0xff]
    %v2983 = vld [vmem:[#allocation8 + $0x270] sm:$0xff]
    %v2984 = vld [vmem:[#allocation8 + $0x278] sm:$0xff]
    %v2985 = vld [vmem:[#allocation8 + $0x280] sm:$0xff]
    %v2986 = vld [vmem:[#allocation8 + $0x2a0] sm:$0xff]
    %v2987 = vld [vmem:[#allocation8 + $0x2a8] sm:$0xff]
    %v2988 = vld [vmem:[#allocation8 + $0x2b0] sm:$0xff]
    %v2989 = vld [vmem:[#allocation8 + $0x2d0] sm:$0xff]
    %v2990 = vld [vmem:[#allocation8 + $0x2d8] sm:$0xff]
    %v2991 = vld [vmem:[#allocation8 + $0x2e0] sm:$0xff]
    %2992 = vmatprep.subr.mxu0 %v2990
    %2993 = vmatpush1.msra.mxu0 %v2989
    %2994 = vmatprep.subr.mxu0 %v2987
    %2995 = vmatpush1.msra.mxu0 %v2986
    %2996 = vmatprep.subr.mxu0 %v2984
    %2997 = vmatpush1.msra.mxu0 %v2983
    %2998 = vmatprep.subr.mxu0 %v2981
    %2999 = vmatpush1.msra.mxu0 %v2980
    %3000 = vmatprep.subr.mxu0 %v2978
    %3001 = vmatpush1.msra.mxu0 %v2977
    %3002 = vmatprep.subr.mxu0 %v2975
    %3003 = vmatpush1.msra.mxu0 %v2974
    %3004 = vmatprep.subr.mxu0 %v2972
    %3005 = vmatpush1.msra.mxu0 %v2971
    %3006 = vmatprep.subr.mxu0 %v2969
    %3007 = vmatpush1.msra.mxu0 %v2968
    %3008 = vmatprep.subr.mxu0 %v2966
    %3009 = vmatpush1.msra.mxu0 %v2965
    %3010 = vmatprep.subr.mxu0 %v2963
    %3011 = vmatpush1.msra.mxu0 %v2962
    %3012 = vmatprep.subr.mxu0 %v2960
    %3013 = vmatpush1.msra.mxu0 %v2959
    %3014 = vmatprep.subr.mxu0 %v2957
    %3015 = vmatpush1.msra.mxu0 %v2956
    %3016 = vmatprep.subr.mxu0 %v2954
    %3017 = vmatpush1.msra.mxu0 %v2953
    %3018 = vmatprep.subr.mxu0 %v2951
    %3019 = vmatpush1.msra.mxu0 %v2950
    %3020 = vmatprep.subr.mxu0 %v2948
    %3021 = vmatpush1.msra.mxu0 %v2947
    %3022 = vmatprep.subr.mxu0 %v2945
    %3023 = vmatpush1.msra.mxu0 %v2944
    %3024 = vmatprep.subr.mxu0 0.0
    %3025 = vmatpush2.msra.mxu0 0.0
    %3026 = vmatprep.subr.mxu0 0.0
    %3027 = vmatpush2.msra.mxu0 0.0
    %3028 = vmatprep.subr.mxu0 0.0
    %3029 = vmatpush2.msra.mxu0 0.0
    %3030 = vmatprep.subr.mxu0 0.0
    %3031 = vmatpush2.msra.mxu0 0.0
    %3032 = vmatprep.subr.mxu0 0.0
    %3033 = vmatpush2.msra.mxu0 0.0
    %3034 = vmatprep.subr.mxu0 0.0
    %3035 = vmatpush2.msra.mxu0 0.0
    %3036 = vmatprep.subr.mxu0 0.0
    %3037 = vmatpush2.msra.mxu0 0.0
    %3038 = vmatprep.subr.mxu0 0.0
    %3039 = vmatpush2.msra.mxu0 0.0
    %3040 = vmatprep.subr.mxu0 0.0
    %3041 = vmatpush2.msra.mxu0 0.0
    %3042 = vmatprep.subr.mxu0 0.0
    %3043 = vmatpush2.msra.mxu0 0.0
    %3044 = vmatprep.subr.mxu0 0.0
    %3045 = vmatpush2.msra.mxu0 0.0
    %3046 = vmatprep.subr.mxu0 0.0
    %3047 = vmatpush2.msra.mxu0 0.0
    %3048 = vmatprep.subr.mxu0 0.0
    %3049 = vmatpush2.msra.mxu0 0.0
    %3050 = vmatprep.subr.mxu0 0.0
    %3051 = vmatpush2.msra.mxu0 0.0
    %3052 = vmatprep.subr.mxu0 0.0
    %3053 = vmatpush2.msra.mxu0 0.0
    %3054 = vmatprep.subr.mxu0 0.0
    %3055 = vmatpush2.msra.mxu0 0.0
    %3056 = vmatprep.mubr.f32.mxu0 0.0
    %3057 = vmatmul.mubr.f32.gmra.mxu0 %v2913
    %v3058 = vpop.f32.mrf.mxu0
    %v3059 = vadd.f32 0.0, %v3058
    %v3060 = vpop.f32.mrf.mxu0
    %v3061 = vadd.f32 0.0, %v3060
    %3062 = vdwg.mxu0
    %3063 = vmatprep.subr.mxu0 0.0
    %3064 = vmatpush1.msra.mxu0 %v2991
    %3065 = vmatprep.subr.mxu0 0.0
    %3066 = vmatpush1.msra.mxu0 %v2988
    %3067 = vmatprep.subr.mxu0 0.0
    %3068 = vmatpush1.msra.mxu0 %v2985
    %3069 = vmatprep.subr.mxu0 0.0
    %3070 = vmatpush1.msra.mxu0 %v2982
    %3071 = vmatprep.subr.mxu0 0.0
    %3072 = vmatpush1.msra.mxu0 %v2979
    %3073 = vmatprep.subr.mxu0 0.0
    %3074 = vmatpush1.msra.mxu0 %v2976
    %3075 = vmatprep.subr.mxu0 0.0
    %3076 = vmatpush1.msra.mxu0 %v2973
    %3077 = vmatprep.subr.mxu0 0.0
    %3078 = vmatpush1.msra.mxu0 %v2970
    %3079 = vmatprep.subr.mxu0 0.0
    %3080 = vmatpush1.msra.mxu0 %v2967
    %3081 = vmatprep.subr.mxu0 0.0
    %3082 = vmatpush1.msra.mxu0 %v2964
    %3083 = vmatprep.subr.mxu0 0.0
    %3084 = vmatpush1.msra.mxu0 %v2961
    %3085 = vmatprep.subr.mxu0 0.0
    %3086 = vmatpush1.msra.mxu0 %v2958
    %3087 = vmatprep.subr.mxu0 0.0
    %3088 = vmatpush1.msra.mxu0 %v2955
    %3089 = vmatprep.subr.mxu0 0.0
    %3090 = vmatpush1.msra.mxu0 %v2952
    %3091 = vmatprep.subr.mxu0 0.0
    %3092 = vmatpush1.msra.mxu0 %v2949
    %3093 = vmatprep.subr.mxu0 0.0
    %3094 = vmatpush1.msra.mxu0 %v2946
    %3095 = vmatprep.subr.mxu0 0.0
    %3096 = vmatpush2.msra.mxu0 0.0
    %3097 = vmatprep.subr.mxu0 0.0
    %3098 = vmatpush2.msra.mxu0 0.0
    %3099 = vmatprep.subr.mxu0 0.0
    %3100 = vmatpush2.msra.mxu0 0.0
    %3101 = vmatprep.subr.mxu0 0.0
    %3102 = vmatpush2.msra.mxu0 0.0
    %3103 = vmatprep.subr.mxu0 0.0
    %3104 = vmatpush2.msra.mxu0 0.0
    %3105 = vmatprep.subr.mxu0 0.0
    %3106 = vmatpush2.msra.mxu0 0.0
    %3107 = vmatprep.subr.mxu0 0.0
    %3108 = vmatpush2.msra.mxu0 0.0
    %3109 = vmatprep.subr.mxu0 0.0
    %3110 = vmatpush2.msra.mxu0 0.0
    %3111 = vmatprep.subr.mxu0 0.0
    %3112 = vmatpush2.msra.mxu0 0.0
    %3113 = vmatprep.subr.mxu0 0.0
    %3114 = vmatpush2.msra.mxu0 0.0
    %3115 = vmatprep.subr.mxu0 0.0
    %3116 = vmatpush2.msra.mxu0 0.0
    %3117 = vmatprep.subr.mxu0 0.0
    %3118 = vmatpush2.msra.mxu0 0.0
    %3119 = vmatprep.subr.mxu0 0.0
    %3120 = vmatpush2.msra.mxu0 0.0
    %3121 = vmatprep.subr.mxu0 0.0
    %3122 = vmatpush2.msra.mxu0 0.0
    %3123 = vmatprep.subr.mxu0 0.0
    %3124 = vmatpush2.msra.mxu0 0.0
    %3125 = vmatprep.subr.mxu0 0.0
    %3126 = vmatpush2.msra.mxu0 0.0
    %3127 = vmatprep.mubr.f32.mxu0 0.0
    %3128 = vmatmul.mubr.f32.gmra.mxu0 %v2913
    %v3129 = vpop.f32.mrf.mxu0
    %v3130 = vadd.f32 0.0, %v3129
    %v3131 = vpop.f32.mrf.mxu0
    %3132 = vdwg.mxu0
    %v3133 = vld [vmem:[#allocation8 + $0x18] sm:$0xff]
    %v3134 = vld [vmem:[#allocation8 + $0x20] sm:$0xff]
    %v3135 = vld [vmem:[#allocation8 + $0x28] sm:$0xff]
    %v3136 = vld [vmem:[#allocation8 + $0x48] sm:$0xff]
    %v3137 = vld [vmem:[#allocation8 + $0x50] sm:$0xff]
    %v3138 = vld [vmem:[#allocation8 + $0x58] sm:$0xff]
    %v3139 = vld [vmem:[#allocation8 + $0x78] sm:$0xff]
    %v3140 = vld [vmem:[#allocation8 + $0x80] sm:$0xff]
    %v3141 = vld [vmem:[#allocation8 + $0x88] sm:$0xff]
    %v3142 = vld [vmem:[#allocation8 + $0xa8] sm:$0xff]
    %v3143 = vld [vmem:[#allocation8 + $0xb0] sm:$0xff]
    %v3144 = vld [vmem:[#allocation8 + $0xb8] sm:$0xff]
    %v3145 = vld [vmem:[#allocation8 + $0xd8] sm:$0xff]
    %v3146 = vld [vmem:[#allocation8 + $0xe0] sm:$0xff]
    %v3147 = vld [vmem:[#allocation8 + $0xe8] sm:$0xff]
    %v3148 = vld [vmem:[#allocation8 + $0x108] sm:$0xff]
    %v3149 = vld [vmem:[#allocation8 + $0x110] sm:$0xff]
    %v3150 = vld [vmem:[#allocation8 + $0x118] sm:$0xff]
    %v3151 = vld [vmem:[#allocation8 + $0x138] sm:$0xff]
    %v3152 = vld [vmem:[#allocation8 + $0x140] sm:$0xff]
    %v3153 = vld [vmem:[#allocation8 + $0x148] sm:$0xff]
    %v3154 = vld [vmem:[#allocation8 + $0x168] sm:$0xff]
    %v3155 = vld [vmem:[#allocation8 + $0x170] sm:$0xff]
    %v3156 = vld [vmem:[#allocation8 + $0x178] sm:$0xff]
    %v3157 = vld [vmem:[#allocation8 + $0x198] sm:$0xff]
    %v3158 = vld [vmem:[#allocation8 + $0x1a0] sm:$0xff]
    %v3159 = vld [vmem:[#allocation8 + $0x1a8] sm:$0xff]
    %v3160 = vld [vmem:[#allocation8 + $0x1c8] sm:$0xff]
    %v3161 = vld [vmem:[#allocation8 + $0x1d0] sm:$0xff]
    %v3162 = vld [vmem:[#allocation8 + $0x1d8] sm:$0xff]
    %v3163 = vld [vmem:[#allocation8 + $0x1f8] sm:$0xff]
    %v3164 = vld [vmem:[#allocation8 + $0x200] sm:$0xff]
    %v3165 = vld [vmem:[#allocation8 + $0x208] sm:$0xff]
    %v3166 = vld [vmem:[#allocation8 + $0x228] sm:$0xff]
    %v3167 = vld [vmem:[#allocation8 + $0x230] sm:$0xff]
    %v3168 = vld [vmem:[#allocation8 + $0x238] sm:$0xff]
    %v3169 = vld [vmem:[#allocation8 + $0x258] sm:$0xff]
    %v3170 = vld [vmem:[#allocation8 + $0x260] sm:$0xff]
    %v3171 = vld [vmem:[#allocation8 + $0x268] sm:$0xff]
    %v3172 = vld [vmem:[#allocation8 + $0x288] sm:$0xff]
    %v3173 = vld [vmem:[#allocation8 + $0x290] sm:$0xff]
    %v3174 = vld [vmem:[#allocation8 + $0x298] sm:$0xff]
    %v3175 = vld [vmem:[#allocation8 + $0x2b8] sm:$0xff]
    %v3176 = vld [vmem:[#allocation8 + $0x2c0] sm:$0xff]
    %v3177 = vld [vmem:[#allocation8 + $0x2c8] sm:$0xff]
    %v3178 = vld [vmem:[#allocation8 + $0x2e8] sm:$0xff]
    %v3179 = vld [vmem:[#allocation8 + $0x2f0] sm:$0xff]
    %v3180 = vld [vmem:[#allocation8 + $0x2f8] sm:$0xff]
    %3181 = vmatprep.subr.mxu0 %v3179
    %3182 = vmatpush1.msra.mxu0 %v3178
    %3183 = vmatprep.subr.mxu0 %v3176
    %3184 = vmatpush1.msra.mxu0 %v3175
    %3185 = vmatprep.subr.mxu0 %v3173
    %3186 = vmatpush1.msra.mxu0 %v3172
    %3187 = vmatprep.subr.mxu0 %v3170
    %3188 = vmatpush1.msra.mxu0 %v3169
    %3189 = vmatprep.subr.mxu0 %v3167
    %3190 = vmatpush1.msra.mxu0 %v3166
    %3191 = vmatprep.subr.mxu0 %v3164
    %3192 = vmatpush1.msra.mxu0 %v3163
    %3193 = vmatprep.subr.mxu0 %v3161
    %3194 = vmatpush1.msra.mxu0 %v3160
    %3195 = vmatprep.subr.mxu0 %v3158
    %3196 = vmatpush1.msra.mxu0 %v3157
    %3197 = vmatprep.subr.mxu0 %v3155
    %3198 = vmatpush1.msra.mxu0 %v3154
    %3199 = vmatprep.subr.mxu0 %v3152
    %3200 = vmatpush1.msra.mxu0 %v3151
    %3201 = vmatprep.subr.mxu0 %v3149
    %3202 = vmatpush1.msra.mxu0 %v3148
    %3203 = vmatprep.subr.mxu0 %v3146
    %3204 = vmatpush1.msra.mxu0 %v3145
    %3205 = vmatprep.subr.mxu0 %v3143
    %3206 = vmatpush1.msra.mxu0 %v3142
    %3207 = vmatprep.subr.mxu0 %v3140
    %3208 = vmatpush1.msra.mxu0 %v3139
    %3209 = vmatprep.subr.mxu0 %v3137
    %3210 = vmatpush1.msra.mxu0 %v3136
    %3211 = vmatprep.subr.mxu0 %v3134
    %3212 = vmatpush1.msra.mxu0 %v3133
    %3213 = vmatprep.subr.mxu0 0.0
    %3214 = vmatpush2.msra.mxu0 0.0
    %3215 = vmatprep.subr.mxu0 0.0
    %3216 = vmatpush2.msra.mxu0 0.0
    %3217 = vmatprep.subr.mxu0 0.0
    %3218 = vmatpush2.msra.mxu0 0.0
    %3219 = vmatprep.subr.mxu0 0.0
    %3220 = vmatpush2.msra.mxu0 0.0
    %3221 = vmatprep.subr.mxu0 0.0
    %3222 = vmatpush2.msra.mxu0 0.0
    %3223 = vmatprep.subr.mxu0 0.0
    %3224 = vmatpush2.msra.mxu0 0.0
    %3225 = vmatprep.subr.mxu0 0.0
    %3226 = vmatpush2.msra.mxu0 0.0
    %3227 = vmatprep.subr.mxu0 0.0
    %3228 = vmatpush2.msra.mxu0 0.0
    %3229 = vmatprep.subr.mxu0 0.0
    %3230 = vmatpush2.msra.mxu0 0.0
    %3231 = vmatprep.subr.mxu0 0.0
    %3232 = vmatpush2.msra.mxu0 0.0
    %3233 = vmatprep.subr.mxu0 0.0
    %3234 = vmatpush2.msra.mxu0 0.0
    %3235 = vmatprep.subr.mxu0 0.0
    %3236 = vmatpush2.msra.mxu0 0.0
    %3237 = vmatprep.subr.mxu0 0.0
    %3238 = vmatpush2.msra.mxu0 0.0
    %3239 = vmatprep.subr.mxu0 0.0
    %3240 = vmatpush2.msra.mxu0 0.0
    %3241 = vmatprep.subr.mxu0 0.0
    %3242 = vmatpush2.msra.mxu0 0.0
    %3243 = vmatprep.subr.mxu0 0.0
    %3244 = vmatpush2.msra.mxu0 0.0
    %3245 = vmatprep.mubr.f32.mxu0 0.0
    %3246 = vmatmul.mubr.f32.gmra.mxu0 %v2935
    %v3247 = vpop.f32.mrf.mxu0
    %v3248 = vadd.f32 0.0, %v3247
    %v3249 = vpop.f32.mrf.mxu0
    %v3250 = vadd.f32 0.0, %v3249
    %3251 = vdwg.mxu0
    %3252 = vmatprep.subr.mxu0 0.0
    %3253 = vmatpush1.msra.mxu0 %v3180
    %3254 = vmatprep.subr.mxu0 0.0
    %3255 = vmatpush1.msra.mxu0 %v3177
    %3256 = vmatprep.subr.mxu0 0.0
    %3257 = vmatpush1.msra.mxu0 %v3174
    %3258 = vmatprep.subr.mxu0 0.0
    %3259 = vmatpush1.msra.mxu0 %v3171
    %3260 = vmatprep.subr.mxu0 0.0
    %3261 = vmatpush1.msra.mxu0 %v3168
    %3262 = vmatprep.subr.mxu0 0.0
    %3263 = vmatpush1.msra.mxu0 %v3165
    %3264 = vmatprep.subr.mxu0 0.0
    %3265 = vmatpush1.msra.mxu0 %v3162
    %3266 = vmatprep.subr.mxu0 0.0
    %3267 = vmatpush1.msra.mxu0 %v3159
    %3268 = vmatprep.subr.mxu0 0.0
    %3269 = vmatpush1.msra.mxu0 %v3156
    %3270 = vmatprep.subr.mxu0 0.0
    %3271 = vmatpush1.msra.mxu0 %v3153
    %3272 = vmatprep.subr.mxu0 0.0
    %3273 = vmatpush1.msra.mxu0 %v3150
    %3274 = vmatprep.subr.mxu0 0.0
    %3275 = vmatpush1.msra.mxu0 %v3147
    %3276 = vmatprep.subr.mxu0 0.0
    %3277 = vmatpush1.msra.mxu0 %v3144
    %3278 = vmatprep.subr.mxu0 0.0
    %3279 = vmatpush1.msra.mxu0 %v3141
    %3280 = vmatprep.subr.mxu0 0.0
    %3281 = vmatpush1.msra.mxu0 %v3138
    %3282 = vmatprep.subr.mxu0 0.0
    %3283 = vmatpush1.msra.mxu0 %v3135
    %3284 = vmatprep.subr.mxu0 0.0
    %3285 = vmatpush2.msra.mxu0 0.0
    %3286 = vmatprep.subr.mxu0 0.0
    %3287 = vmatpush2.msra.mxu0 0.0
    %3288 = vmatprep.subr.mxu0 0.0
    %3289 = vmatpush2.msra.mxu0 0.0
    %3290 = vmatprep.subr.mxu0 0.0
    %3291 = vmatpush2.msra.mxu0 0.0
    %3292 = vmatprep.subr.mxu0 0.0
    %3293 = vmatpush2.msra.mxu0 0.0
    %3294 = vmatprep.subr.mxu0 0.0
    %3295 = vmatpush2.msra.mxu0 0.0
    %3296 = vmatprep.subr.mxu0 0.0
    %3297 = vmatpush2.msra.mxu0 0.0
    %3298 = vmatprep.subr.mxu0 0.0
    %3299 = vmatpush2.msra.mxu0 0.0
    %3300 = vmatprep.subr.mxu0 0.0
    %3301 = vmatpush2.msra.mxu0 0.0
    %3302 = vmatprep.subr.mxu0 0.0
    %3303 = vmatpush2.msra.mxu0 0.0
    %3304 = vmatprep.subr.mxu0 0.0
    %3305 = vmatpush2.msra.mxu0 0.0
    %3306 = vmatprep.subr.mxu0 0.0
    %3307 = vmatpush2.msra.mxu0 0.0
    %3308 = vmatprep.subr.mxu0 0.0
    %3309 = vmatpush2.msra.mxu0 0.0
    %3310 = vmatprep.subr.mxu0 0.0
    %3311 = vmatpush2.msra.mxu0 0.0
    %3312 = vmatprep.subr.mxu0 0.0
    %3313 = vmatpush2.msra.mxu0 0.0
    %3314 = vmatprep.subr.mxu0 0.0
    %3315 = vmatpush2.msra.mxu0 0.0
    %3316 = vmatprep.mubr.f32.mxu0 0.0
    %3317 = vmatmul.mubr.f32.gmra.mxu0 %v2935
    %v3318 = vpop.f32.mrf.mxu0
    %v3319 = vadd.f32 0.0, %v3318
    %v3320 = vpop.f32.mrf.mxu0
    %3321 = vdwg.mxu0
    %v3322 = vadd.f32 %v2938, %v3059
    %v3323 = vxor.u32 %v3322, 2147483648
    %v3324 = vmul.f32 %v3323, 1.442695
    %v3325 = vpow.pop %v3324
    %v3326 = vadd.f32 %v3325, 1.0
    %v3327 = vrcp.pop %v3326
    %v3328 = vmul.f32 1.0, %v3327
    %v3329 = vadd.f32 %v2939, %v3061
    %v3330 = vxor.u32 %v3329, 2147483648
    %v3331 = vmul.f32 %v3330, 1.442695
    %v3332 = vpow.pop %v3331
    %v3333 = vadd.f32 %v3332, 1.0
    %v3334 = vrcp.pop %v3333
    %v3335 = vmul.f32 1.0, %v3334
    %v3336 = vadd.f32 %v3130, %v1171
    %v3337 = vmul.f32 %v3328, %v3336
    %v3338 = vadd.f32 %v2940, %v3337
    %v3339 = vtanh.pop %v3338
    %v3340 = vsub.f32 1.0, %v3335
    %v3341 = vmul.f32 %v3340, %v3339
    %v3342 = vmul.f32 %v3335, %v2913
    %v3343 = vadd.f32 %v3341, %v3342
    %v3344 = vadd.f32 %v2941, %v3248
    %v3345 = vxor.u32 %v3344, 2147483648
    %v3346 = vmul.f32 %v3345, 1.442695
    %v3347 = vpow.pop %v3346
    %v3348 = vadd.f32 %v3347, 1.0
    %v3349 = vrcp.pop %v3348
    %v3350 = vmul.f32 1.0, %v3349
    %v3351 = vadd.f32 %v2942, %v3250
    %v3352 = vxor.u32 %v3351, 2147483648
    %v3353 = vmul.f32 %v3352, 1.442695
    %v3354 = vpow.pop %v3353
    %v3355 = vadd.f32 %v3354, 1.0
    %v3356 = vrcp.pop %v3355
    %v3357 = vmul.f32 1.0, %v3356
    %v3358 = vadd.f32 %v3319, %v1199
    %v3359 = vmul.f32 %v3350, %v3358
    %v3360 = vadd.f32 %v2943, %v3359
    %v3361 = vtanh.pop %v3360
    %v3362 = vsub.f32 1.0, %v3357
    %v3363 = vmul.f32 %v3362, %v3361
    %v3364 = vmul.f32 %v3357, %v2935
    %v3365 = vadd.f32 %v3363, %v3364
    %3366 = vst [vmem:[%s2074] sm:$0xff] %v3343
    %3367 = vst [vmem:[%s2072 + $0x8] sm:$0xff] %v3365
    %v3368 = vld [vmem:[#allocation2 + $0x120] sm:$0xff]
    %v3369 = vld [vmem:[#allocation2 + $0x128] sm:$0xff]
    %v3370 = vld [vmem:[#allocation2 + $0x130] sm:$0xff]
    %v3371 = vld [vmem:[#allocation2 + $0x48] sm:$0xff]
    %v3372 = vld [vmem:[#allocation2 + $0x50] sm:$0xff]
    %v3373 = vld [vmem:[#allocation2 + $0x58] sm:$0xff]
    %v3374 = vld [vmem:[#allocation8] sm:$0xff]
    %v3375 = vld [vmem:[#allocation8 + $0x8] sm:$0xff]
    %v3376 = vld [vmem:[#allocation8 + $0x10] sm:$0xff]
    %v3377 = vld [vmem:[#allocation8 + $0x30] sm:$0xff]
    %v3378 = vld [vmem:[#allocation8 + $0x38] sm:$0xff]
    %v3379 = vld [vmem:[#allocation8 + $0x40] sm:$0xff]
    %v3380 = vld [vmem:[#allocation8 + $0x60] sm:$0xff]
    %v3381 = vld [vmem:[#allocation8 + $0x68] sm:$0xff]
    %v3382 = vld [vmem:[#allocation8 + $0x70] sm:$0xff]
    %v3383 = vld [vmem:[#allocation8 + $0x90] sm:$0xff]
    %v3384 = vld [vmem:[#allocation8 + $0x98] sm:$0xff]
    %v3385 = vld [vmem:[#allocation8 + $0xa0] sm:$0xff]
    %v3386 = vld [vmem:[#allocation8 + $0xc0] sm:$0xff]
    %v3387 = vld [vmem:[#allocation8 + $0xc8] sm:$0xff]
    %v3388 = vld [vmem:[#allocation8 + $0xd0] sm:$0xff]
    %v3389 = vld [vmem:[#allocation8 + $0xf0] sm:$0xff]
    %v3390 = vld [vmem:[#allocation8 + $0xf8] sm:$0xff]
    %v3391 = vld [vmem:[#allocation8 + $0x100] sm:$0xff]
    %v3392 = vld [vmem:[#allocation8 + $0x120] sm:$0xff]
    %v3393 = vld [vmem:[#allocation8 + $0x128] sm:$0xff]
    %v3394 = vld [vmem:[#allocation8 + $0x130] sm:$0xff]
    %v3395 = vld [vmem:[#allocation8 + $0x150] sm:$0xff]
    %v3396 = vld [vmem:[#allocation8 + $0x158] sm:$0xff]
    %v3397 = vld [vmem:[#allocation8 + $0x160] sm:$0xff]
    %v3398 = vld [vmem:[#allocation8 + $0x180] sm:$0xff]
    %v3399 = vld [vmem:[#allocation8 + $0x188] sm:$0xff]
    %v3400 = vld [vmem:[#allocation8 + $0x190] sm:$0xff]
    %v3401 = vld [vmem:[#allocation8 + $0x1b0] sm:$0xff]
    %v3402 = vld [vmem:[#allocation8 + $0x1b8] sm:$0xff]
    %v3403 = vld [vmem:[#allocation8 + $0x1c0] sm:$0xff]
    %v3404 = vld [vmem:[#allocation8 + $0x1e0] sm:$0xff]
    %v3405 = vld [vmem:[#allocation8 + $0x1e8] sm:$0xff]
    %v3406 = vld [vmem:[#allocation8 + $0x1f0] sm:$0xff]
    %v3407 = vld [vmem:[#allocation8 + $0x210] sm:$0xff]
    %v3408 = vld [vmem:[#allocation8 + $0x218] sm:$0xff]
    %v3409 = vld [vmem:[#allocation8 + $0x220] sm:$0xff]
    %v3410 = vld [vmem:[#allocation8 + $0x240] sm:$0xff]
    %v3411 = vld [vmem:[#allocation8 + $0x248] sm:$0xff]
    %v3412 = vld [vmem:[#allocation8 + $0x250] sm:$0xff]
    %v3413 = vld [vmem:[#allocation8 + $0x270] sm:$0xff]
    %v3414 = vld [vmem:[#allocation8 + $0x278] sm:$0xff]
    %v3415 = vld [vmem:[#allocation8 + $0x280] sm:$0xff]
    %v3416 = vld [vmem:[#allocation8 + $0x2a0] sm:$0xff]
    %v3417 = vld [vmem:[#allocation8 + $0x2a8] sm:$0xff]
    %v3418 = vld [vmem:[#allocation8 + $0x2b0] sm:$0xff]
    %v3419 = vld [vmem:[#allocation8 + $0x2d0] sm:$0xff]
    %v3420 = vld [vmem:[#allocation8 + $0x2d8] sm:$0xff]
    %v3421 = vld [vmem:[#allocation8 + $0x2e0] sm:$0xff]
    %3422 = vmatprep.subr.mxu0 %v3420
    %3423 = vmatpush1.msra.mxu0 %v3419
    %3424 = vmatprep.subr.mxu0 %v3417
    %3425 = vmatpush1.msra.mxu0 %v3416
    %3426 = vmatprep.subr.mxu0 %v3414
    %3427 = vmatpush1.msra.mxu0 %v3413
    %3428 = vmatprep.subr.mxu0 %v3411
    %3429 = vmatpush1.msra.mxu0 %v3410
    %3430 = vmatprep.subr.mxu0 %v3408
    %3431 = vmatpush1.msra.mxu0 %v3407
    %3432 = vmatprep.subr.mxu0 %v3405
    %3433 = vmatpush1.msra.mxu0 %v3404
    %3434 = vmatprep.subr.mxu0 %v3402
    %3435 = vmatpush1.msra.mxu0 %v3401
    %3436 = vmatprep.subr.mxu0 %v3399
    %3437 = vmatpush1.msra.mxu0 %v3398
    %3438 = vmatprep.subr.mxu0 %v3396
    %3439 = vmatpush1.msra.mxu0 %v3395
    %3440 = vmatprep.subr.mxu0 %v3393
    %3441 = vmatpush1.msra.mxu0 %v3392
    %3442 = vmatprep.subr.mxu0 %v3390
    %3443 = vmatpush1.msra.mxu0 %v3389
    %3444 = vmatprep.subr.mxu0 %v3387
    %3445 = vmatpush1.msra.mxu0 %v3386
    %3446 = vmatprep.subr.mxu0 %v3384
    %3447 = vmatpush1.msra.mxu0 %v3383
    %3448 = vmatprep.subr.mxu0 %v3381
    %3449 = vmatpush1.msra.mxu0 %v3380
    %3450 = vmatprep.subr.mxu0 %v3378
    %3451 = vmatpush1.msra.mxu0 %v3377
    %3452 = vmatprep.subr.mxu0 %v3375
    %3453 = vmatpush1.msra.mxu0 %v3374
    %3454 = vmatprep.subr.mxu0 0.0
    %3455 = vmatpush2.msra.mxu0 0.0
    %3456 = vmatprep.subr.mxu0 0.0
    %3457 = vmatpush2.msra.mxu0 0.0
    %3458 = vmatprep.subr.mxu0 0.0
    %3459 = vmatpush2.msra.mxu0 0.0
    %3460 = vmatprep.subr.mxu0 0.0
    %3461 = vmatpush2.msra.mxu0 0.0
    %3462 = vmatprep.subr.mxu0 0.0
    %3463 = vmatpush2.msra.mxu0 0.0
    %3464 = vmatprep.subr.mxu0 0.0
    %3465 = vmatpush2.msra.mxu0 0.0
    %3466 = vmatprep.subr.mxu0 0.0
    %3467 = vmatpush2.msra.mxu0 0.0
    %3468 = vmatprep.subr.mxu0 0.0
    %3469 = vmatpush2.msra.mxu0 0.0
    %3470 = vmatprep.subr.mxu0 0.0
    %3471 = vmatpush2.msra.mxu0 0.0
    %3472 = vmatprep.subr.mxu0 0.0
    %3473 = vmatpush2.msra.mxu0 0.0
    %3474 = vmatprep.subr.mxu0 0.0
    %3475 = vmatpush2.msra.mxu0 0.0
    %3476 = vmatprep.subr.mxu0 0.0
    %3477 = vmatpush2.msra.mxu0 0.0
    %3478 = vmatprep.subr.mxu0 0.0
    %3479 = vmatpush2.msra.mxu0 0.0
    %3480 = vmatprep.subr.mxu0 0.0
    %3481 = vmatpush2.msra.mxu0 0.0
    %3482 = vmatprep.subr.mxu0 0.0
    %3483 = vmatpush2.msra.mxu0 0.0
    %3484 = vmatprep.subr.mxu0 0.0
    %3485 = vmatpush2.msra.mxu0 0.0
    %3486 = vmatprep.mubr.f32.mxu0 0.0
    %3487 = vmatmul.mubr.f32.gmra.mxu0 %v3343
    %v3488 = vpop.f32.mrf.mxu0
    %v3489 = vadd.f32 0.0, %v3488
    %v3490 = vpop.f32.mrf.mxu0
    %v3491 = vadd.f32 0.0, %v3490
    %3492 = vdwg.mxu0
    %3493 = vmatprep.subr.mxu0 0.0
    %3494 = vmatpush1.msra.mxu0 %v3421
    %3495 = vmatprep.subr.mxu0 0.0
    %3496 = vmatpush1.msra.mxu0 %v3418
    %3497 = vmatprep.subr.mxu0 0.0
    %3498 = vmatpush1.msra.mxu0 %v3415
    %3499 = vmatprep.subr.mxu0 0.0
    %3500 = vmatpush1.msra.mxu0 %v3412
    %3501 = vmatprep.subr.mxu0 0.0
    %3502 = vmatpush1.msra.mxu0 %v3409
    %3503 = vmatprep.subr.mxu0 0.0
    %3504 = vmatpush1.msra.mxu0 %v3406
    %3505 = vmatprep.subr.mxu0 0.0
    %3506 = vmatpush1.msra.mxu0 %v3403
    %3507 = vmatprep.subr.mxu0 0.0
    %3508 = vmatpush1.msra.mxu0 %v3400
    %3509 = vmatprep.subr.mxu0 0.0
    %3510 = vmatpush1.msra.mxu0 %v3397
    %3511 = vmatprep.subr.mxu0 0.0
    %3512 = vmatpush1.msra.mxu0 %v3394
    %3513 = vmatprep.subr.mxu0 0.0
    %3514 = vmatpush1.msra.mxu0 %v3391
    %3515 = vmatprep.subr.mxu0 0.0
    %3516 = vmatpush1.msra.mxu0 %v3388
    %3517 = vmatprep.subr.mxu0 0.0
    %3518 = vmatpush1.msra.mxu0 %v3385
    %3519 = vmatprep.subr.mxu0 0.0
    %3520 = vmatpush1.msra.mxu0 %v3382
    %3521 = vmatprep.subr.mxu0 0.0
    %3522 = vmatpush1.msra.mxu0 %v3379
    %3523 = vmatprep.subr.mxu0 0.0
    %3524 = vmatpush1.msra.mxu0 %v3376
    %3525 = vmatprep.subr.mxu0 0.0
    %3526 = vmatpush2.msra.mxu0 0.0
    %3527 = vmatprep.subr.mxu0 0.0
    %3528 = vmatpush2.msra.mxu0 0.0
    %3529 = vmatprep.subr.mxu0 0.0
    %3530 = vmatpush2.msra.mxu0 0.0
    %3531 = vmatprep.subr.mxu0 0.0
    %3532 = vmatpush2.msra.mxu0 0.0
    %3533 = vmatprep.subr.mxu0 0.0
    %3534 = vmatpush2.msra.mxu0 0.0
    %3535 = vmatprep.subr.mxu0 0.0
    %3536 = vmatpush2.msra.mxu0 0.0
    %3537 = vmatprep.subr.mxu0 0.0
    %3538 = vmatpush2.msra.mxu0 0.0
    %3539 = vmatprep.subr.mxu0 0.0
    %3540 = vmatpush2.msra.mxu0 0.0
    %3541 = vmatprep.subr.mxu0 0.0
    %3542 = vmatpush2.msra.mxu0 0.0
    %3543 = vmatprep.subr.mxu0 0.0
    %3544 = vmatpush2.msra.mxu0 0.0
    %3545 = vmatprep.subr.mxu0 0.0
    %3546 = vmatpush2.msra.mxu0 0.0
    %3547 = vmatprep.subr.mxu0 0.0
    %3548 = vmatpush2.msra.mxu0 0.0
    %3549 = vmatprep.subr.mxu0 0.0
    %3550 = vmatpush2.msra.mxu0 0.0
    %3551 = vmatprep.subr.mxu0 0.0
    %3552 = vmatpush2.msra.mxu0 0.0
    %3553 = vmatprep.subr.mxu0 0.0
    %3554 = vmatpush2.msra.mxu0 0.0
    %3555 = vmatprep.subr.mxu0 0.0
    %3556 = vmatpush2.msra.mxu0 0.0
    %3557 = vmatprep.mubr.f32.mxu0 0.0
    %3558 = vmatmul.mubr.f32.gmra.mxu0 %v3343
    %v3559 = vpop.f32.mrf.mxu0
    %v3560 = vadd.f32 0.0, %v3559
    %v3561 = vpop.f32.mrf.mxu0
    %3562 = vdwg.mxu0
    %v3563 = vld [vmem:[#allocation8 + $0x18] sm:$0xff]
    %v3564 = vld [vmem:[#allocation8 + $0x20] sm:$0xff]
    %v3565 = vld [vmem:[#allocation8 + $0x28] sm:$0xff]
    %v3566 = vld [vmem:[#allocation8 + $0x48] sm:$0xff]
    %v3567 = vld [vmem:[#allocation8 + $0x50] sm:$0xff]
    %v3568 = vld [vmem:[#allocation8 + $0x58] sm:$0xff]
    %v3569 = vld [vmem:[#allocation8 + $0x78] sm:$0xff]
    %v3570 = vld [vmem:[#allocation8 + $0x80] sm:$0xff]
    %v3571 = vld [vmem:[#allocation8 + $0x88] sm:$0xff]
    %v3572 = vld [vmem:[#allocation8 + $0xa8] sm:$0xff]
    %v3573 = vld [vmem:[#allocation8 + $0xb0] sm:$0xff]
    %v3574 = vld [vmem:[#allocation8 + $0xb8] sm:$0xff]
    %v3575 = vld [vmem:[#allocation8 + $0xd8] sm:$0xff]
    %v3576 = vld [vmem:[#allocation8 + $0xe0] sm:$0xff]
    %v3577 = vld [vmem:[#allocation8 + $0xe8] sm:$0xff]
    %v3578 = vld [vmem:[#allocation8 + $0x108] sm:$0xff]
    %v3579 = vld [vmem:[#allocation8 + $0x110] sm:$0xff]
    %v3580 = vld [vmem:[#allocation8 + $0x118] sm:$0xff]
    %v3581 = vld [vmem:[#allocation8 + $0x138] sm:$0xff]
    %v3582 = vld [vmem:[#allocation8 + $0x140] sm:$0xff]
    %v3583 = vld [vmem:[#allocation8 + $0x148] sm:$0xff]
    %v3584 = vld [vmem:[#allocation8 + $0x168] sm:$0xff]
    %v3585 = vld [vmem:[#allocation8 + $0x170] sm:$0xff]
    %v3586 = vld [vmem:[#allocation8 + $0x178] sm:$0xff]
    %v3587 = vld [vmem:[#allocation8 + $0x198] sm:$0xff]
    %v3588 = vld [vmem:[#allocation8 + $0x1a0] sm:$0xff]
    %v3589 = vld [vmem:[#allocation8 + $0x1a8] sm:$0xff]
    %v3590 = vld [vmem:[#allocation8 + $0x1c8] sm:$0xff]
    %v3591 = vld [vmem:[#allocation8 + $0x1d0] sm:$0xff]
    %v3592 = vld [vmem:[#allocation8 + $0x1d8] sm:$0xff]
    %v3593 = vld [vmem:[#allocation8 + $0x1f8] sm:$0xff]
    %v3594 = vld [vmem:[#allocation8 + $0x200] sm:$0xff]
    %v3595 = vld [vmem:[#allocation8 + $0x208] sm:$0xff]
    %v3596 = vld [vmem:[#allocation8 + $0x228] sm:$0xff]
    %v3597 = vld [vmem:[#allocation8 + $0x230] sm:$0xff]
    %v3598 = vld [vmem:[#allocation8 + $0x238] sm:$0xff]
    %v3599 = vld [vmem:[#allocation8 + $0x258] sm:$0xff]
    %v3600 = vld [vmem:[#allocation8 + $0x260] sm:$0xff]
    %v3601 = vld [vmem:[#allocation8 + $0x268] sm:$0xff]
    %v3602 = vld [vmem:[#allocation8 + $0x288] sm:$0xff]
    %v3603 = vld [vmem:[#allocation8 + $0x290] sm:$0xff]
    %v3604 = vld [vmem:[#allocation8 + $0x298] sm:$0xff]
    %v3605 = vld [vmem:[#allocation8 + $0x2b8] sm:$0xff]
    %v3606 = vld [vmem:[#allocation8 + $0x2c0] sm:$0xff]
    %v3607 = vld [vmem:[#allocation8 + $0x2c8] sm:$0xff]
    %v3608 = vld [vmem:[#allocation8 + $0x2e8] sm:$0xff]
    %v3609 = vld [vmem:[#allocation8 + $0x2f0] sm:$0xff]
    %v3610 = vld [vmem:[#allocation8 + $0x2f8] sm:$0xff]
    %3611 = vmatprep.subr.mxu0 %v3609
    %3612 = vmatpush1.msra.mxu0 %v3608
    %3613 = vmatprep.subr.mxu0 %v3606
    %3614 = vmatpush1.msra.mxu0 %v3605
    %3615 = vmatprep.subr.mxu0 %v3603
    %3616 = vmatpush1.msra.mxu0 %v3602
    %3617 = vmatprep.subr.mxu0 %v3600
    %3618 = vmatpush1.msra.mxu0 %v3599
    %3619 = vmatprep.subr.mxu0 %v3597
    %3620 = vmatpush1.msra.mxu0 %v3596
    %3621 = vmatprep.subr.mxu0 %v3594
    %3622 = vmatpush1.msra.mxu0 %v3593
    %3623 = vmatprep.subr.mxu0 %v3591
    %3624 = vmatpush1.msra.mxu0 %v3590
    %3625 = vmatprep.subr.mxu0 %v3588
    %3626 = vmatpush1.msra.mxu0 %v3587
    %3627 = vmatprep.subr.mxu0 %v3585
    %3628 = vmatpush1.msra.mxu0 %v3584
    %3629 = vmatprep.subr.mxu0 %v3582
    %3630 = vmatpush1.msra.mxu0 %v3581
    %3631 = vmatprep.subr.mxu0 %v3579
    %3632 = vmatpush1.msra.mxu0 %v3578
    %3633 = vmatprep.subr.mxu0 %v3576
    %3634 = vmatpush1.msra.mxu0 %v3575
    %3635 = vmatprep.subr.mxu0 %v3573
    %3636 = vmatpush1.msra.mxu0 %v3572
    %3637 = vmatprep.subr.mxu0 %v3570
    %3638 = vmatpush1.msra.mxu0 %v3569
    %3639 = vmatprep.subr.mxu0 %v3567
    %3640 = vmatpush1.msra.mxu0 %v3566
    %3641 = vmatprep.subr.mxu0 %v3564
    %3642 = vmatpush1.msra.mxu0 %v3563
    %3643 = vmatprep.subr.mxu0 0.0
    %3644 = vmatpush2.msra.mxu0 0.0
    %3645 = vmatprep.subr.mxu0 0.0
    %3646 = vmatpush2.msra.mxu0 0.0
    %3647 = vmatprep.subr.mxu0 0.0
    %3648 = vmatpush2.msra.mxu0 0.0
    %3649 = vmatprep.subr.mxu0 0.0
    %3650 = vmatpush2.msra.mxu0 0.0
    %3651 = vmatprep.subr.mxu0 0.0
    %3652 = vmatpush2.msra.mxu0 0.0
    %3653 = vmatprep.subr.mxu0 0.0
    %3654 = vmatpush2.msra.mxu0 0.0
    %3655 = vmatprep.subr.mxu0 0.0
    %3656 = vmatpush2.msra.mxu0 0.0
    %3657 = vmatprep.subr.mxu0 0.0
    %3658 = vmatpush2.msra.mxu0 0.0
    %3659 = vmatprep.subr.mxu0 0.0
    %3660 = vmatpush2.msra.mxu0 0.0
    %3661 = vmatprep.subr.mxu0 0.0
    %3662 = vmatpush2.msra.mxu0 0.0
    %3663 = vmatprep.subr.mxu0 0.0
    %3664 = vmatpush2.msra.mxu0 0.0
    %3665 = vmatprep.subr.mxu0 0.0
    %3666 = vmatpush2.msra.mxu0 0.0
    %3667 = vmatprep.subr.mxu0 0.0
    %3668 = vmatpush2.msra.mxu0 0.0
    %3669 = vmatprep.subr.mxu0 0.0
    %3670 = vmatpush2.msra.mxu0 0.0
    %3671 = vmatprep.subr.mxu0 0.0
    %3672 = vmatpush2.msra.mxu0 0.0
    %3673 = vmatprep.subr.mxu0 0.0
    %3674 = vmatpush2.msra.mxu0 0.0
    %3675 = vmatprep.mubr.f32.mxu0 0.0
    %3676 = vmatmul.mubr.f32.gmra.mxu0 %v3365
    %v3677 = vpop.f32.mrf.mxu0
    %v3678 = vadd.f32 0.0, %v3677
    %v3679 = vpop.f32.mrf.mxu0
    %v3680 = vadd.f32 0.0, %v3679
    %3681 = vdwg.mxu0
    %3682 = vmatprep.subr.mxu0 0.0
    %3683 = vmatpush1.msra.mxu0 %v3610
    %3684 = vmatprep.subr.mxu0 0.0
    %3685 = vmatpush1.msra.mxu0 %v3607
    %3686 = vmatprep.subr.mxu0 0.0
    %3687 = vmatpush1.msra.mxu0 %v3604
    %3688 = vmatprep.subr.mxu0 0.0
    %3689 = vmatpush1.msra.mxu0 %v3601
    %3690 = vmatprep.subr.mxu0 0.0
    %3691 = vmatpush1.msra.mxu0 %v3598
    %3692 = vmatprep.subr.mxu0 0.0
    %3693 = vmatpush1.msra.mxu0 %v3595
    %3694 = vmatprep.subr.mxu0 0.0
    %3695 = vmatpush1.msra.mxu0 %v3592
    %3696 = vmatprep.subr.mxu0 0.0
    %3697 = vmatpush1.msra.mxu0 %v3589
    %3698 = vmatprep.subr.mxu0 0.0
    %3699 = vmatpush1.msra.mxu0 %v3586
    %3700 = vmatprep.subr.mxu0 0.0
    %3701 = vmatpush1.msra.mxu0 %v3583
    %3702 = vmatprep.subr.mxu0 0.0
    %3703 = vmatpush1.msra.mxu0 %v3580
    %3704 = vmatprep.subr.mxu0 0.0
    %3705 = vmatpush1.msra.mxu0 %v3577
    %3706 = vmatprep.subr.mxu0 0.0
    %3707 = vmatpush1.msra.mxu0 %v3574
    %3708 = vmatprep.subr.mxu0 0.0
    %3709 = vmatpush1.msra.mxu0 %v3571
    %3710 = vmatprep.subr.mxu0 0.0
    %3711 = vmatpush1.msra.mxu0 %v3568
    %3712 = vmatprep.subr.mxu0 0.0
    %3713 = vmatpush1.msra.mxu0 %v3565
    %3714 = vmatprep.subr.mxu0 0.0
    %3715 = vmatpush2.msra.mxu0 0.0
    %3716 = vmatprep.subr.mxu0 0.0
    %3717 = vmatpush2.msra.mxu0 0.0
    %3718 = vmatprep.subr.mxu0 0.0
    %3719 = vmatpush2.msra.mxu0 0.0
    %3720 = vmatprep.subr.mxu0 0.0
    %3721 = vmatpush2.msra.mxu0 0.0
    %3722 = vmatprep.subr.mxu0 0.0
    %3723 = vmatpush2.msra.mxu0 0.0
    %3724 = vmatprep.subr.mxu0 0.0
    %3725 = vmatpush2.msra.mxu0 0.0
    %3726 = vmatprep.subr.mxu0 0.0
    %3727 = vmatpush2.msra.mxu0 0.0
    %3728 = vmatprep.subr.mxu0 0.0
    %3729 = vmatpush2.msra.mxu0 0.0
    %3730 = vmatprep.subr.mxu0 0.0
    %3731 = vmatpush2.msra.mxu0 0.0
    %3732 = vmatprep.subr.mxu0 0.0
    %3733 = vmatpush2.msra.mxu0 0.0
    %3734 = vmatprep.subr.mxu0 0.0
    %3735 = vmatpush2.msra.mxu0 0.0
    %3736 = vmatprep.subr.mxu0 0.0
    %3737 = vmatpush2.msra.mxu0 0.0
    %3738 = vmatprep.subr.mxu0 0.0
    %3739 = vmatpush2.msra.mxu0 0.0
    %3740 = vmatprep.subr.mxu0 0.0
    %3741 = vmatpush2.msra.mxu0 0.0
    %3742 = vmatprep.subr.mxu0 0.0
    %3743 = vmatpush2.msra.mxu0 0.0
    %3744 = vmatprep.subr.mxu0 0.0
    %3745 = vmatpush2.msra.mxu0 0.0
    %3746 = vmatprep.mubr.f32.mxu0 0.0
    %3747 = vmatmul.mubr.f32.gmra.mxu0 %v3365
    %v3748 = vpop.f32.mrf.mxu0
    %v3749 = vadd.f32 0.0, %v3748
    %v3750 = vpop.f32.mrf.mxu0
    %3751 = vdwg.mxu0
    %v3752 = vadd.f32 %v3368, %v3489
    %v3753 = vxor.u32 %v3752, 2147483648
    %v3754 = vmul.f32 %v3753, 1.442695
    %v3755 = vpow.pop %v3754
    %v3756 = vadd.f32 %v3755, 1.0
    %v3757 = vrcp.pop %v3756
    %v3758 = vmul.f32 1.0, %v3757
    %v3759 = vadd.f32 %v3369, %v3491
    %v3760 = vxor.u32 %v3759, 2147483648
    %v3761 = vmul.f32 %v3760, 1.442695
    %v3762 = vpow.pop %v3761
    %v3763 = vadd.f32 %v3762, 1.0
    %v3764 = vrcp.pop %v3763
    %v3765 = vmul.f32 1.0, %v3764
    %v3766 = vadd.f32 %v3560, %v1171
    %v3767 = vmul.f32 %v3758, %v3766
    %v3768 = vadd.f32 %v3370, %v3767
    %v3769 = vtanh.pop %v3768
    %v3770 = vsub.f32 1.0, %v3765
    %v3771 = vmul.f32 %v3770, %v3769
    %v3772 = vmul.f32 %v3765, %v3343
    %v3773 = vadd.f32 %v3771, %v3772
    %v3774 = vadd.f32 %v3371, %v3678
    %v3775 = vxor.u32 %v3774, 2147483648
    %v3776 = vmul.f32 %v3775, 1.442695
    %v3777 = vpow.pop %v3776
    %v3778 = vadd.f32 %v3777, 1.0
    %v3779 = vrcp.pop %v3778
    %v3780 = vmul.f32 1.0, %v3779
    %v3781 = vadd.f32 %v3372, %v3680
    %v3782 = vxor.u32 %v3781, 2147483648
    %v3783 = vmul.f32 %v3782, 1.442695
    %v3784 = vpow.pop %v3783
    %v3785 = vadd.f32 %v3784, 1.0
    %v3786 = vrcp.pop %v3785
    %v3787 = vmul.f32 1.0, %v3786
    %v3788 = vadd.f32 %v3749, %v1199
    %v3789 = vmul.f32 %v3780, %v3788
    %v3790 = vadd.f32 %v3373, %v3789
    %v3791 = vtanh.pop %v3790
    %v3792 = vsub.f32 1.0, %v3787
    %v3793 = vmul.f32 %v3792, %v3791
    %v3794 = vmul.f32 %v3787, %v3365
    %v3795 = vadd.f32 %v3793, %v3794
    %3796 = vst [vmem:[%s1642] sm:$0xff] %v3773
    %3797 = vst [vmem:[%s1640 + $0x8] sm:$0xff] %v3795
    %v3798 = vld [vmem:[#allocation2 + $0x150] sm:$0xff]
    %v3799 = vld [vmem:[#allocation2 + $0x158] sm:$0xff]
    %v3800 = vld [vmem:[#allocation2 + $0x160] sm:$0xff]
    %v3801 = vld [vmem:[#allocation2 + $0x18] sm:$0xff]
    %v3802 = vld [vmem:[#allocation2 + $0x20] sm:$0xff]
    %v3803 = vld [vmem:[#allocation2 + $0x28] sm:$0xff]
    %v3804 = vld [vmem:[#allocation8] sm:$0xff]
    %v3805 = vld [vmem:[#allocation8 + $0x8] sm:$0xff]
    %v3806 = vld [vmem:[#allocation8 + $0x10] sm:$0xff]
    %v3807 = vld [vmem:[#allocation8 + $0x30] sm:$0xff]
    %v3808 = vld [vmem:[#allocation8 + $0x38] sm:$0xff]
    %v3809 = vld [vmem:[#allocation8 + $0x40] sm:$0xff]
    %v3810 = vld [vmem:[#allocation8 + $0x60] sm:$0xff]
    %v3811 = vld [vmem:[#allocation8 + $0x68] sm:$0xff]
    %v3812 = vld [vmem:[#allocation8 + $0x70] sm:$0xff]
    %v3813 = vld [vmem:[#allocation8 + $0x90] sm:$0xff]
    %v3814 = vld [vmem:[#allocation8 + $0x98] sm:$0xff]
    %v3815 = vld [vmem:[#allocation8 + $0xa0] sm:$0xff]
    %v3816 = vld [vmem:[#allocation8 + $0xc0] sm:$0xff]
    %v3817 = vld [vmem:[#allocation8 + $0xc8] sm:$0xff]
    %v3818 = vld [vmem:[#allocation8 + $0xd0] sm:$0xff]
    %v3819 = vld [vmem:[#allocation8 + $0xf0] sm:$0xff]
    %v3820 = vld [vmem:[#allocation8 + $0xf8] sm:$0xff]
    %v3821 = vld [vmem:[#allocation8 + $0x100] sm:$0xff]
    %v3822 = vld [vmem:[#allocation8 + $0x120] sm:$0xff]
    %v3823 = vld [vmem:[#allocation8 + $0x128] sm:$0xff]
    %v3824 = vld [vmem:[#allocation8 + $0x130] sm:$0xff]
    %v3825 = vld [vmem:[#allocation8 + $0x150] sm:$0xff]
    %v3826 = vld [vmem:[#allocation8 + $0x158] sm:$0xff]
    %v3827 = vld [vmem:[#allocation8 + $0x160] sm:$0xff]
    %v3828 = vld [vmem:[#allocation8 + $0x180] sm:$0xff]
    %v3829 = vld [vmem:[#allocation8 + $0x188] sm:$0xff]
    %v3830 = vld [vmem:[#allocation8 + $0x190] sm:$0xff]
    %v3831 = vld [vmem:[#allocation8 + $0x1b0] sm:$0xff]
    %v3832 = vld [vmem:[#allocation8 + $0x1b8] sm:$0xff]
    %v3833 = vld [vmem:[#allocation8 + $0x1c0] sm:$0xff]
    %v3834 = vld [vmem:[#allocation8 + $0x1e0] sm:$0xff]
    %v3835 = vld [vmem:[#allocation8 + $0x1e8] sm:$0xff]
    %v3836 = vld [vmem:[#allocation8 + $0x1f0] sm:$0xff]
    %v3837 = vld [vmem:[#allocation8 + $0x210] sm:$0xff]
    %v3838 = vld [vmem:[#allocation8 + $0x218] sm:$0xff]
    %v3839 = vld [vmem:[#allocation8 + $0x220] sm:$0xff]
    %v3840 = vld [vmem:[#allocation8 + $0x240] sm:$0xff]
    %v3841 = vld [vmem:[#allocation8 + $0x248] sm:$0xff]
    %v3842 = vld [vmem:[#allocation8 + $0x250] sm:$0xff]
    %v3843 = vld [vmem:[#allocation8 + $0x270] sm:$0xff]
    %v3844 = vld [vmem:[#allocation8 + $0x278] sm:$0xff]
    %v3845 = vld [vmem:[#allocation8 + $0x280] sm:$0xff]
    %v3846 = vld [vmem:[#allocation8 + $0x2a0] sm:$0xff]
    %v3847 = vld [vmem:[#allocation8 + $0x2a8] sm:$0xff]
    %v3848 = vld [vmem:[#allocation8 + $0x2b0] sm:$0xff]
    %v3849 = vld [vmem:[#allocation8 + $0x2d0] sm:$0xff]
    %v3850 = vld [vmem:[#allocation8 + $0x2d8] sm:$0xff]
    %v3851 = vld [vmem:[#allocation8 + $0x2e0] sm:$0xff]
    %3852 = vmatprep.subr.mxu0 %v3850
    %3853 = vmatpush1.msra.mxu0 %v3849
    %3854 = vmatprep.subr.mxu0 %v3847
    %3855 = vmatpush1.msra.mxu0 %v3846
    %3856 = vmatprep.subr.mxu0 %v3844
    %3857 = vmatpush1.msra.mxu0 %v3843
    %3858 = vmatprep.subr.mxu0 %v3841
    %3859 = vmatpush1.msra.mxu0 %v3840
    %3860 = vmatprep.subr.mxu0 %v3838
    %3861 = vmatpush1.msra.mxu0 %v3837
    %3862 = vmatprep.subr.mxu0 %v3835
    %3863 = vmatpush1.msra.mxu0 %v3834
    %3864 = vmatprep.subr.mxu0 %v3832
    %3865 = vmatpush1.msra.mxu0 %v3831
    %3866 = vmatprep.subr.mxu0 %v3829
    %3867 = vmatpush1.msra.mxu0 %v3828
    %3868 = vmatprep.subr.mxu0 %v3826
    %3869 = vmatpush1.msra.mxu0 %v3825
    %3870 = vmatprep.subr.mxu0 %v3823
    %3871 = vmatpush1.msra.mxu0 %v3822
    %3872 = vmatprep.subr.mxu0 %v3820
    %3873 = vmatpush1.msra.mxu0 %v3819
    %3874 = vmatprep.subr.mxu0 %v3817
    %3875 = vmatpush1.msra.mxu0 %v3816
    %3876 = vmatprep.subr.mxu0 %v3814
    %3877 = vmatpush1.msra.mxu0 %v3813
    %3878 = vmatprep.subr.mxu0 %v3811
    %3879 = vmatpush1.msra.mxu0 %v3810
    %3880 = vmatprep.subr.mxu0 %v3808
    %3881 = vmatpush1.msra.mxu0 %v3807
    %3882 = vmatprep.subr.mxu0 %v3805
    %3883 = vmatpush1.msra.mxu0 %v3804
    %3884 = vmatprep.subr.mxu0 0.0
    %3885 = vmatpush2.msra.mxu0 0.0
    %3886 = vmatprep.subr.mxu0 0.0
    %3887 = vmatpush2.msra.mxu0 0.0
    %3888 = vmatprep.subr.mxu0 0.0
    %3889 = vmatpush2.msra.mxu0 0.0
    %3890 = vmatprep.subr.mxu0 0.0
    %3891 = vmatpush2.msra.mxu0 0.0
    %3892 = vmatprep.subr.mxu0 0.0
    %3893 = vmatpush2.msra.mxu0 0.0
    %3894 = vmatprep.subr.mxu0 0.0
    %3895 = vmatpush2.msra.mxu0 0.0
    %3896 = vmatprep.subr.mxu0 0.0
    %3897 = vmatpush2.msra.mxu0 0.0
    %3898 = vmatprep.subr.mxu0 0.0
    %3899 = vmatpush2.msra.mxu0 0.0
    %3900 = vmatprep.subr.mxu0 0.0
    %3901 = vmatpush2.msra.mxu0 0.0
    %3902 = vmatprep.subr.mxu0 0.0
    %3903 = vmatpush2.msra.mxu0 0.0
    %3904 = vmatprep.subr.mxu0 0.0
    %3905 = vmatpush2.msra.mxu0 0.0
    %3906 = vmatprep.subr.mxu0 0.0
    %3907 = vmatpush2.msra.mxu0 0.0
    %3908 = vmatprep.subr.mxu0 0.0
    %3909 = vmatpush2.msra.mxu0 0.0
    %3910 = vmatprep.subr.mxu0 0.0
    %3911 = vmatpush2.msra.mxu0 0.0
    %3912 = vmatprep.subr.mxu0 0.0
    %3913 = vmatpush2.msra.mxu0 0.0
    %3914 = vmatprep.subr.mxu0 0.0
    %3915 = vmatpush2.msra.mxu0 0.0
    %3916 = vmatprep.mubr.f32.mxu0 0.0
    %3917 = vmatmul.mubr.f32.gmra.mxu0 %v3773
    %v3918 = vpop.f32.mrf.mxu0
    %v3919 = vadd.f32 0.0, %v3918
    %v3920 = vpop.f32.mrf.mxu0
    %v3921 = vadd.f32 0.0, %v3920
    %3922 = vdwg.mxu0
    %3923 = vmatprep.subr.mxu0 0.0
    %3924 = vmatpush1.msra.mxu0 %v3851
    %3925 = vmatprep.subr.mxu0 0.0
    %3926 = vmatpush1.msra.mxu0 %v3848
    %3927 = vmatprep.subr.mxu0 0.0
    %3928 = vmatpush1.msra.mxu0 %v3845
    %3929 = vmatprep.subr.mxu0 0.0
    %3930 = vmatpush1.msra.mxu0 %v3842
    %3931 = vmatprep.subr.mxu0 0.0
    %3932 = vmatpush1.msra.mxu0 %v3839
    %3933 = vmatprep.subr.mxu0 0.0
    %3934 = vmatpush1.msra.mxu0 %v3836
    %3935 = vmatprep.subr.mxu0 0.0
    %3936 = vmatpush1.msra.mxu0 %v3833
    %3937 = vmatprep.subr.mxu0 0.0
    %3938 = vmatpush1.msra.mxu0 %v3830
    %3939 = vmatprep.subr.mxu0 0.0
    %3940 = vmatpush1.msra.mxu0 %v3827
    %3941 = vmatprep.subr.mxu0 0.0
    %3942 = vmatpush1.msra.mxu0 %v3824
    %3943 = vmatprep.subr.mxu0 0.0
    %3944 = vmatpush1.msra.mxu0 %v3821
    %3945 = vmatprep.subr.mxu0 0.0
    %3946 = vmatpush1.msra.mxu0 %v3818
    %3947 = vmatprep.subr.mxu0 0.0
    %3948 = vmatpush1.msra.mxu0 %v3815
    %3949 = vmatprep.subr.mxu0 0.0
    %3950 = vmatpush1.msra.mxu0 %v3812
    %3951 = vmatprep.subr.mxu0 0.0
    %3952 = vmatpush1.msra.mxu0 %v3809
    %3953 = vmatprep.subr.mxu0 0.0
    %3954 = vmatpush1.msra.mxu0 %v3806
    %3955 = vmatprep.subr.mxu0 0.0
    %3956 = vmatpush2.msra.mxu0 0.0
    %3957 = vmatprep.subr.mxu0 0.0
    %3958 = vmatpush2.msra.mxu0 0.0
    %3959 = vmatprep.subr.mxu0 0.0
    %3960 = vmatpush2.msra.mxu0 0.0
    %3961 = vmatprep.subr.mxu0 0.0
    %3962 = vmatpush2.msra.mxu0 0.0
    %3963 = vmatprep.subr.mxu0 0.0
    %3964 = vmatpush2.msra.mxu0 0.0
    %3965 = vmatprep.subr.mxu0 0.0
    %3966 = vmatpush2.msra.mxu0 0.0
    %3967 = vmatprep.subr.mxu0 0.0
    %3968 = vmatpush2.msra.mxu0 0.0
    %3969 = vmatprep.subr.mxu0 0.0
    %3970 = vmatpush2.msra.mxu0 0.0
    %3971 = vmatprep.subr.mxu0 0.0
    %3972 = vmatpush2.msra.mxu0 0.0
    %3973 = vmatprep.subr.mxu0 0.0
    %3974 = vmatpush2.msra.mxu0 0.0
    %3975 = vmatprep.subr.mxu0 0.0
    %3976 = vmatpush2.msra.mxu0 0.0
    %3977 = vmatprep.subr.mxu0 0.0
    %3978 = vmatpush2.msra.mxu0 0.0
    %3979 = vmatprep.subr.mxu0 0.0
    %3980 = vmatpush2.msra.mxu0 0.0
    %3981 = vmatprep.subr.mxu0 0.0
    %3982 = vmatpush2.msra.mxu0 0.0
    %3983 = vmatprep.subr.mxu0 0.0
    %3984 = vmatpush2.msra.mxu0 0.0
    %3985 = vmatprep.subr.mxu0 0.0
    %3986 = vmatpush2.msra.mxu0 0.0
    %3987 = vmatprep.mubr.f32.mxu0 0.0
    %3988 = vmatmul.mubr.f32.gmra.mxu0 %v3773
    %v3989 = vpop.f32.mrf.mxu0
    %v3990 = vadd.f32 0.0, %v3989
    %v3991 = vpop.f32.mrf.mxu0
    %3992 = vdwg.mxu0
    %v3993 = vld [vmem:[#allocation8 + $0x18] sm:$0xff]
    %v3994 = vld [vmem:[#allocation8 + $0x20] sm:$0xff]
    %v3995 = vld [vmem:[#allocation8 + $0x28] sm:$0xff]
    %v3996 = vld [vmem:[#allocation8 + $0x48] sm:$0xff]
    %v3997 = vld [vmem:[#allocation8 + $0x50] sm:$0xff]
    %v3998 = vld [vmem:[#allocation8 + $0x58] sm:$0xff]
    %v3999 = vld [vmem:[#allocation8 + $0x78] sm:$0xff]
    %v4000 = vld [vmem:[#allocation8 + $0x80] sm:$0xff]
    %v4001 = vld [vmem:[#allocation8 + $0x88] sm:$0xff]
    %v4002 = vld [vmem:[#allocation8 + $0xa8] sm:$0xff]
    %v4003 = vld [vmem:[#allocation8 + $0xb0] sm:$0xff]
    %v4004 = vld [vmem:[#allocation8 + $0xb8] sm:$0xff]
    %v4005 = vld [vmem:[#allocation8 + $0xd8] sm:$0xff]
    %v4006 = vld [vmem:[#allocation8 + $0xe0] sm:$0xff]
    %v4007 = vld [vmem:[#allocation8 + $0xe8] sm:$0xff]
    %v4008 = vld [vmem:[#allocation8 + $0x108] sm:$0xff]
    %v4009 = vld [vmem:[#allocation8 + $0x110] sm:$0xff]
    %v4010 = vld [vmem:[#allocation8 + $0x118] sm:$0xff]
    %v4011 = vld [vmem:[#allocation8 + $0x138] sm:$0xff]
    %v4012 = vld [vmem:[#allocation8 + $0x140] sm:$0xff]
    %v4013 = vld [vmem:[#allocation8 + $0x148] sm:$0xff]
    %v4014 = vld [vmem:[#allocation8 + $0x168] sm:$0xff]
    %v4015 = vld [vmem:[#allocation8 + $0x170] sm:$0xff]
    %v4016 = vld [vmem:[#allocation8 + $0x178] sm:$0xff]
    %v4017 = vld [vmem:[#allocation8 + $0x198] sm:$0xff]
    %v4018 = vld [vmem:[#allocation8 + $0x1a0] sm:$0xff]
    %v4019 = vld [vmem:[#allocation8 + $0x1a8] sm:$0xff]
    %v4020 = vld [vmem:[#allocation8 + $0x1c8] sm:$0xff]
    %v4021 = vld [vmem:[#allocation8 + $0x1d0] sm:$0xff]
    %v4022 = vld [vmem:[#allocation8 + $0x1d8] sm:$0xff]
    %v4023 = vld [vmem:[#allocation8 + $0x1f8] sm:$0xff]
    %v4024 = vld [vmem:[#allocation8 + $0x200] sm:$0xff]
    %v4025 = vld [vmem:[#allocation8 + $0x208] sm:$0xff]
    %v4026 = vld [vmem:[#allocation8 + $0x228] sm:$0xff]
    %v4027 = vld [vmem:[#allocation8 + $0x230] sm:$0xff]
    %v4028 = vld [vmem:[#allocation8 + $0x238] sm:$0xff]
    %v4029 = vld [vmem:[#allocation8 + $0x258] sm:$0xff]
    %v4030 = vld [vmem:[#allocation8 + $0x260] sm:$0xff]
    %v4031 = vld [vmem:[#allocation8 + $0x268] sm:$0xff]
    %v4032 = vld [vmem:[#allocation8 + $0x288] sm:$0xff]
    %v4033 = vld [vmem:[#allocation8 + $0x290] sm:$0xff]
    %v4034 = vld [vmem:[#allocation8 + $0x298] sm:$0xff]
    %v4035 = vld [vmem:[#allocation8 + $0x2b8] sm:$0xff]
    %v4036 = vld [vmem:[#allocation8 + $0x2c0] sm:$0xff]
    %v4037 = vld [vmem:[#allocation8 + $0x2c8] sm:$0xff]
    %v4038 = vld [vmem:[#allocation8 + $0x2e8] sm:$0xff]
    %v4039 = vld [vmem:[#allocation8 + $0x2f0] sm:$0xff]
    %v4040 = vld [vmem:[#allocation8 + $0x2f8] sm:$0xff]
    %4041 = vmatprep.subr.mxu0 %v4039
    %4042 = vmatpush1.msra.mxu0 %v4038
    %4043 = vmatprep.subr.mxu0 %v4036
    %4044 = vmatpush1.msra.mxu0 %v4035
    %4045 = vmatprep.subr.mxu0 %v4033
    %4046 = vmatpush1.msra.mxu0 %v4032
    %4047 = vmatprep.subr.mxu0 %v4030
    %4048 = vmatpush1.msra.mxu0 %v4029
    %4049 = vmatprep.subr.mxu0 %v4027
    %4050 = vmatpush1.msra.mxu0 %v4026
    %4051 = vmatprep.subr.mxu0 %v4024
    %4052 = vmatpush1.msra.mxu0 %v4023
    %4053 = vmatprep.subr.mxu0 %v4021
    %4054 = vmatpush1.msra.mxu0 %v4020
    %4055 = vmatprep.subr.mxu0 %v4018
    %4056 = vmatpush1.msra.mxu0 %v4017
    %4057 = vmatprep.subr.mxu0 %v4015
    %4058 = vmatpush1.msra.mxu0 %v4014
    %4059 = vmatprep.subr.mxu0 %v4012
    %4060 = vmatpush1.msra.mxu0 %v4011
    %4061 = vmatprep.subr.mxu0 %v4009
    %4062 = vmatpush1.msra.mxu0 %v4008
    %4063 = vmatprep.subr.mxu0 %v4006
    %4064 = vmatpush1.msra.mxu0 %v4005
    %4065 = vmatprep.subr.mxu0 %v4003
    %4066 = vmatpush1.msra.mxu0 %v4002
    %4067 = vmatprep.subr.mxu0 %v4000
    %4068 = vmatpush1.msra.mxu0 %v3999
    %4069 = vmatprep.subr.mxu0 %v3997
    %4070 = vmatpush1.msra.mxu0 %v3996
    %4071 = vmatprep.subr.mxu0 %v3994
    %4072 = vmatpush1.msra.mxu0 %v3993
    %4073 = vmatprep.subr.mxu0 0.0
    %4074 = vmatpush2.msra.mxu0 0.0
    %4075 = vmatprep.subr.mxu0 0.0
    %4076 = vmatpush2.msra.mxu0 0.0
    %4077 = vmatprep.subr.mxu0 0.0
    %4078 = vmatpush2.msra.mxu0 0.0
    %4079 = vmatprep.subr.mxu0 0.0
    %4080 = vmatpush2.msra.mxu0 0.0
    %4081 = vmatprep.subr.mxu0 0.0
    %4082 = vmatpush2.msra.mxu0 0.0
    %4083 = vmatprep.subr.mxu0 0.0
    %4084 = vmatpush2.msra.mxu0 0.0
    %4085 = vmatprep.subr.mxu0 0.0
    %4086 = vmatpush2.msra.mxu0 0.0
    %4087 = vmatprep.subr.mxu0 0.0
    %4088 = vmatpush2.msra.mxu0 0.0
    %4089 = vmatprep.subr.mxu0 0.0
    %4090 = vmatpush2.msra.mxu0 0.0
    %4091 = vmatprep.subr.mxu0 0.0
    %4092 = vmatpush2.msra.mxu0 0.0
    %4093 = vmatprep.subr.mxu0 0.0
    %4094 = vmatpush2.msra.mxu0 0.0
    %4095 = vmatprep.subr.mxu0 0.0
    %4096 = vmatpush2.msra.mxu0 0.0
    %4097 = vmatprep.subr.mxu0 0.0
    %4098 = vmatpush2.msra.mxu0 0.0
    %4099 = vmatprep.subr.mxu0 0.0
    %4100 = vmatpush2.msra.mxu0 0.0
    %4101 = vmatprep.subr.mxu0 0.0
    %4102 = vmatpush2.msra.mxu0 0.0
    %4103 = vmatprep.subr.mxu0 0.0
    %4104 = vmatpush2.msra.mxu0 0.0
    %4105 = vmatprep.mubr.f32.mxu0 0.0
    %4106 = vmatmul.mubr.f32.gmra.mxu0 %v3795
    %v4107 = vpop.f32.mrf.mxu0
    %v4108 = vadd.f32 0.0, %v4107
    %v4109 = vpop.f32.mrf.mxu0
    %v4110 = vadd.f32 0.0, %v4109
    %4111 = vdwg.mxu0
    %4112 = vmatprep.subr.mxu0 0.0
    %4113 = vmatpush1.msra.mxu0 %v4040
    %4114 = vmatprep.subr.mxu0 0.0
    %4115 = vmatpush1.msra.mxu0 %v4037
    %4116 = vmatprep.subr.mxu0 0.0
    %4117 = vmatpush1.msra.mxu0 %v4034
    %4118 = vmatprep.subr.mxu0 0.0
    %4119 = vmatpush1.msra.mxu0 %v4031
    %4120 = vmatprep.subr.mxu0 0.0
    %4121 = vmatpush1.msra.mxu0 %v4028
    %4122 = vmatprep.subr.mxu0 0.0
    %4123 = vmatpush1.msra.mxu0 %v4025
    %4124 = vmatprep.subr.mxu0 0.0
    %4125 = vmatpush1.msra.mxu0 %v4022
    %4126 = vmatprep.subr.mxu0 0.0
    %4127 = vmatpush1.msra.mxu0 %v4019
    %4128 = vmatprep.subr.mxu0 0.0
    %4129 = vmatpush1.msra.mxu0 %v4016
    %4130 = vmatprep.subr.mxu0 0.0
    %4131 = vmatpush1.msra.mxu0 %v4013
    %4132 = vmatprep.subr.mxu0 0.0
    %4133 = vmatpush1.msra.mxu0 %v4010
    %4134 = vmatprep.subr.mxu0 0.0
    %4135 = vmatpush1.msra.mxu0 %v4007
    %4136 = vmatprep.subr.mxu0 0.0
    %4137 = vmatpush1.msra.mxu0 %v4004
    %4138 = vmatprep.subr.mxu0 0.0
    %4139 = vmatpush1.msra.mxu0 %v4001
    %4140 = vmatprep.subr.mxu0 0.0
    %4141 = vmatpush1.msra.mxu0 %v3998
    %4142 = vmatprep.subr.mxu0 0.0
    %4143 = vmatpush1.msra.mxu0 %v3995
    %4144 = vmatprep.subr.mxu0 0.0
    %4145 = vmatpush2.msra.mxu0 0.0
    %4146 = vmatprep.subr.mxu0 0.0
    %4147 = vmatpush2.msra.mxu0 0.0
    %4148 = vmatprep.subr.mxu0 0.0
    %4149 = vmatpush2.msra.mxu0 0.0
    %4150 = vmatprep.subr.mxu0 0.0
    %4151 = vmatpush2.msra.mxu0 0.0
    %4152 = vmatprep.subr.mxu0 0.0
    %4153 = vmatpush2.msra.mxu0 0.0
    %4154 = vmatprep.subr.mxu0 0.0
    %4155 = vmatpush2.msra.mxu0 0.0
    %4156 = vmatprep.subr.mxu0 0.0
    %4157 = vmatpush2.msra.mxu0 0.0
    %4158 = vmatprep.subr.mxu0 0.0
    %4159 = vmatpush2.msra.mxu0 0.0
    %4160 = vmatprep.subr.mxu0 0.0
    %4161 = vmatpush2.msra.mxu0 0.0
    %4162 = vmatprep.subr.mxu0 0.0
    %4163 = vmatpush2.msra.mxu0 0.0
    %4164 = vmatprep.subr.mxu0 0.0
    %4165 = vmatpush2.msra.mxu0 0.0
    %4166 = vmatprep.subr.mxu0 0.0
    %4167 = vmatpush2.msra.mxu0 0.0
    %4168 = vmatprep.subr.mxu0 0.0
    %4169 = vmatpush2.msra.mxu0 0.0
    %4170 = vmatprep.subr.mxu0 0.0
    %4171 = vmatpush2.msra.mxu0 0.0
    %4172 = vmatprep.subr.mxu0 0.0
    %4173 = vmatpush2.msra.mxu0 0.0
    %4174 = vmatprep.subr.mxu0 0.0
    %4175 = vmatpush2.msra.mxu0 0.0
    %4176 = vmatprep.mubr.f32.mxu0 0.0
    %4177 = vmatmul.mubr.f32.gmra.mxu0 %v3795
    %v4178 = vpop.f32.mrf.mxu0
    %v4179 = vadd.f32 0.0, %v4178
    %v4180 = vpop.f32.mrf.mxu0
    %4181 = vdwg.mxu0
    %v4182 = vadd.f32 %v3798, %v3919
    %v4183 = vxor.u32 %v4182, 2147483648
    %v4184 = vmul.f32 %v4183, 1.442695
    %v4185 = vpow.pop %v4184
    %v4186 = vadd.f32 %v4185, 1.0
    %v4187 = vrcp.pop %v4186
    %v4188 = vmul.f32 1.0, %v4187
    %v4189 = vadd.f32 %v3799, %v3921
    %v4190 = vxor.u32 %v4189, 2147483648
    %v4191 = vmul.f32 %v4190, 1.442695
    %v4192 = vpow.pop %v4191
    %v4193 = vadd.f32 %v4192, 1.0
    %v4194 = vrcp.pop %v4193
    %v4195 = vmul.f32 1.0, %v4194
    %v4196 = vadd.f32 %v3990, %v1171
    %v4197 = vmul.f32 %v4188, %v4196
    %v4198 = vadd.f32 %v3800, %v4197
    %v4199 = vtanh.pop %v4198
    %v4200 = vsub.f32 1.0, %v4195
    %v4201 = vmul.f32 %v4200, %v4199
    %v4202 = vmul.f32 %v4195, %v3773
    %v4203 = vadd.f32 %v4201, %v4202
    %v4204 = vadd.f32 %v3801, %v4108
    %v4205 = vxor.u32 %v4204, 2147483648
    %v4206 = vmul.f32 %v4205, 1.442695
    %v4207 = vpow.pop %v4206
    %v4208 = vadd.f32 %v4207, 1.0
    %v4209 = vrcp.pop %v4208
    %v4210 = vmul.f32 1.0, %v4209
    %v4211 = vadd.f32 %v3802, %v4110
    %v4212 = vxor.u32 %v4211, 2147483648
    %v4213 = vmul.f32 %v4212, 1.442695
    %v4214 = vpow.pop %v4213
    %v4215 = vadd.f32 %v4214, 1.0
    %v4216 = vrcp.pop %v4215
    %v4217 = vmul.f32 1.0, %v4216
    %v4218 = vadd.f32 %v4179, %v1199
    %v4219 = vmul.f32 %v4210, %v4218
    %v4220 = vadd.f32 %v3803, %v4219
    %v4221 = vtanh.pop %v4220
    %v4222 = vsub.f32 1.0, %v4217
    %v4223 = vmul.f32 %v4222, %v4221
    %v4224 = vmul.f32 %v4217, %v3795
    %v4225 = vadd.f32 %v4223, %v4224
    %4226 = vst [vmem:[%s1210] sm:$0xff] %v4203
    %4227 = vst [vmem:[#allocation9 + $0x8] sm:$0xff] %v4225
    %4228 = vst [vmem:[#allocation10] sm:$0xff] %v4203
    // Predicated region
    $region42: #{tpu_custom_call.1} parent=1 // pred_check
      _
    $region43: #{tpu_custom_call.1} parent=1 // pred_check_branch
      %4230 = sbr.rel (0) target = $region45
    $region44: #{tpu_custom_call.1} parent=1 // pred_region
      %s4232 = ssub.s32 2048, 2048
      %4233 = vsyncadd [#allocation5], %s4232
      %s4234 = sshll.u32 [#allocation9], 4
      %s4235 = int_to_ptr.vmem [resolvable:$true] %s4234
      %4240 = dma.vmem_to_hbm [thread:$0]  %s4235, 2048, %s7, [#allocation5], 256, 256, 16
    $region45: #{tpu_custom_call.1} parent=1 // pred_fallthru
      _
    // Predicated region
    $region46: #{tpu_custom_call.1} parent=1 // pred_check
      _
    $region47: #{tpu_custom_call.1} parent=1 // pred_check_branch
      %4242 = sbr.rel (0) target = $region49
    $region48: #{tpu_custom_call.1} parent=1 // pred_region
      %s4244 = ssub.s32 128, 128
      %4245 = vsyncadd [#allocation11], %s4244
      %s4247 = sshll.u32 [#allocation10], 4
      %s4248 = int_to_ptr.vmem [resolvable:$true] %s4247
      %4250 = dma.vmem_to_hbm [thread:$0]  %s4248, 128, %s8, [#allocation11]
    $region49: #{tpu_custom_call.1} parent=1 // pred_fallthru
      _
    // Predicated region
    $region50: #{tpu_custom_call.1} parent=1 // pred_check
      _
    $region51: #{tpu_custom_call.1} parent=1 // pred_check_branch
      %4252 = sbr.rel (0) target = $region53
    $region52: #{tpu_custom_call.1} parent=1 // pred_region
      %4253 = dma.done [#allocation5], 2048
    $region53: #{tpu_custom_call.1} parent=1 // pred_fallthru
      _
    // Predicated region
    $region54: #{tpu_custom_call.1} parent=1 // pred_check
      _
    $region55: #{tpu_custom_call.1} parent=1 // pred_check_branch
      %4255 = sbr.rel (0) target = $region57
    $region56: #{tpu_custom_call.1} parent=1 // pred_region
      %4256 = dma.done [#allocation11], 128
    $region57: #{tpu_custom_call.1} parent=1 // pred_fallthru
      _
    %4257 = vsyncpa [#allocation4], 1
    %4258 = vsyncpa [#allocation7], 1
    %4259 = vsyncpa [#allocation5], 1
    %4260 = vsyncpa [#allocation11], 1

</llo_original>
